<compile_context>
chip_gen: v7x
topology: tpu7x:2x2x1
jax: 0.10.0
libtpu: 0.0.40
codegen_flags: <defaults>
</compile_context>

<pallas_src>
import functools
import math

import jax
import jax.numpy as jnp
from jax.experimental import pallas as pl
from jax.experimental.pallas import tpu as pltpu


# ---------------------------------------------------------------------------
# In-kernel / reference helper (matches torch: std with ddof=1, eps added to std)
# ---------------------------------------------------------------------------
def _layer_norm(x, gamma, beta, eps=1e-5):
    mean = jnp.mean(x, axis=-1, keepdims=True)
    var = jnp.sum((x - mean) ** 2, axis=-1, keepdims=True) / (x.shape[-1] - 1)
    std = jnp.sqrt(var) + eps
    return gamma * ((x - mean) / std) + beta


# ---------------------------------------------------------------------------
# Fused decoder-stack kernel (one grid step per layer)
# ---------------------------------------------------------------------------
def decoder_kernel(x_ref, mask_ref,
                   wqkv_ref, bqkv_ref, wo_ref, bo_ref,
                   g1_ref, be1_ref,
                   w1_ref, bf1_ref, w2_ref, bf2_ref,
                   g2_ref, be2_ref,
                   fg_ref, fb_ref,
                   out_ref,
                   x_vmem,
                   *, num_heads, head_dim, batch, seq):
    layer = pl.program_id(0)
    d_model = num_heads * head_dim
    rows = batch * seq

    @pl.when(layer == 0)
    def _():
        x_vmem[...] = x_ref[...]          # load activations into resident VMEM once

    x = x_vmem[...]                       # (B*S, D)
    mask = mask_ref[...]                  # (S, S), broadcasts over batch

    # --- multi-head self attention ------------------------------------------
    # wqkv columns are permuted wrapper-side to [Q | K | V], head-major per block.
    qkv = jnp.dot(x, wqkv_ref[0], preferred_element_type=jnp.float32) + bqkv_ref[0]

    inv_scale = 1.0 / math.sqrt(head_dim)
    attn_out = jnp.zeros((rows, d_model), jnp.float32)
    for h in range(num_heads):            # H is small; static unroll
        qo = h * head_dim
        # fold 1/sqrt(hd) into q (cheaper than scaling the SxS score matrix)
        q = (qkv[:, qo:qo + head_dim] * inv_scale).reshape(batch, seq, head_dim)
        k = qkv[:, d_model + qo:d_model + qo + head_dim].reshape(batch, seq, head_dim)
        v = qkv[:, 2 * d_model + qo:2 * d_model + qo + head_dim].reshape(batch, seq, head_dim)

        s = jnp.einsum('bqd,bkd->bqk', q, k,
                       preferred_element_type=jnp.float32) + mask
        s = s - jnp.max(s, axis=-1, keepdims=True)
        p = jnp.exp(s)
        p = p * pl.reciprocal(jnp.sum(p, axis=-1, keepdims=True), approx=True)
        vals = jnp.einsum('bqk,bkd->bqd', p, v,
                          preferred_element_type=jnp.float32)     # (B, S, hd)

        # concat(heads) @ Wo  ==  sum_h  vals_h @ Wo[h*hd:(h+1)*hd, :]
        attn_out = attn_out + jnp.dot(
            vals.reshape(rows, head_dim),
            wo_ref[0][qo:qo + head_dim, :],
            preferred_element_type=jnp.float32)
    attn_out = attn_out + bo_ref[0]

    # --- residual + norm1 -----------------------------------------------------
    x1 = _layer_norm(x + attn_out, g1_ref[0], be1_ref[0])

    # --- position-wise FFN ----------------------------------------------------
    hidden = jnp.maximum(
        jnp.dot(x1, w1_ref[0], preferred_element_type=jnp.float32) + bf1_ref[0], 0.0)
    ffn_out = jnp.dot(hidden, w2_ref[0],
                      preferred_element_type=jnp.float32) + bf2_ref[0]

    # --- residual + norm2 -----------------------------------------------------
    x_new = _layer_norm(x1 + ffn_out, g2_ref[0], be2_ref[0])
    x_vmem[...] = x_new

    # --- final LayerNorm of the stack, written only at the last layer ---------
    @pl.when(layer == pl.num_programs(0) - 1)
    def _():
        out_ref[...] = _layer_norm(x_new, fg_ref[...], fb_ref[...])


# ---------------------------------------------------------------------------
# Wrapper: stacks weights, permutes qkv columns, runs one fused pallas_call
# ---------------------------------------------------------------------------
def _qkv_permutation(num_heads, head_dim):
    # original column c = h*3*hd + part*hd + j  ->  new layout [Q|K|V], head-major
    perm = []
    for part in range(3):              # 0 = q, 1 = k, 2 = v
        for h in range(num_heads):
            base = h * 3 * head_dim + part * head_dim
            perm.extend(range(base, base + head_dim))
    return jnp.array(perm, dtype=jnp.int32)


def decoder_forward(x, mask, layer_params, final_gamma, final_beta, *, num_heads):
    B, S, D = x.shape
    H = num_heads
    hd = D // H
    L = len(layer_params)
    F = layer_params[0]["w1"].shape[1]

    perm = _qkv_permutation(H, hd)
    stack = lambda name: jnp.stack([p[name] for p in layer_params])
    wqkv = jnp.stack([p["wqkv"][:, perm] for p in layer_params])   # (L, D, 3D)
    bqkv = jnp.stack([p["bqkv"][:, perm] for p in layer_params])   # (L, 1, 3D)
    wo, bo = stack("wo"), stack("bo")
    g1, be1 = stack("g1"), stack("be1")
    w1, bf1 = stack("w1"), stack("bf1")
    w2, bf2 = stack("w2"), stack("bf2")
    g2, be2 = stack("g2"), stack("be2")

    x2d = x.reshape(B * S, D)

    def per_layer(shape):
        return pl.BlockSpec((1,) + shape, lambda l: (l,) + (0,) * len(shape))

    def shared(shape):
        return pl.BlockSpec(shape, lambda l: (0,) * len(shape))

    kernel = functools.partial(decoder_kernel, num_heads=H, head_dim=hd,
                               batch=B, seq=S)

    out2d = pl.pallas_call(
        kernel,
        out_shape=jax.ShapeDtypeStruct((B * S, D), jnp.float32),
        grid_spec=pltpu.PrefetchScalarGridSpec(
            num_scalar_prefetch=0,
            grid=(L,),
            in_specs=[
                shared((B * S, D)),                               # x (loaded once)
                shared((S, S)),                                   # additive mask
                per_layer((D, 3 * D)), per_layer((1, 3 * D)),     # qkv linear
                per_layer((D, D)), per_layer((1, D)),             # output linear
                per_layer((1, D)), per_layer((1, D)),             # norm1 gamma/beta
                per_layer((D, F)), per_layer((1, F)),             # ffn linear1
                per_layer((F, D)), per_layer((1, D)),             # ffn linear2
                per_layer((1, D)), per_layer((1, D)),             # norm2 gamma/beta
                shared((1, D)), shared((1, D)),                   # final norm gamma/beta
            ],
            out_specs=shared((B * S, D)),
            scratch_shapes=[pltpu.VMEM((B * S, D), jnp.float32)],
        ),
        compiler_params=pltpu.CompilerParams(
            dimension_semantics=("arbitrary",)),
    )(x2d, mask, wqkv, bqkv, wo, bo, g1, be1, w1, bf1, w2, bf2, g2, be2,
      final_gamma, final_beta)
    return out2d.reshape(B, S, D)


# ---------------------------------------------------------------------------
# Pure-JAX reference (mirrors the PyTorch forward exactly) for verification
# ---------------------------------------------------------------------------
def _ref_decoder(x, mask, layer_params, fg, fb, *, num_heads):
    B, S, D = x.shape
    hd = D // num_heads
    for p in layer_params:
        qkv = x @ p["wqkv"] + p["bqkv"]
        qkv = qkv.reshape(B, S, num_heads, 3 * hd).transpose(0, 2, 1, 3)
        q, k, v = qkv[..., :hd], qkv[..., hd:2 * hd], qkv[..., 2 * hd:]
        scores = jnp.einsum("bhqd,bhkd->bhqk", q, k) / math.sqrt(hd) + mask
        attn = jax.nn.softmax(scores, axis=-1)
        vals = jnp.einsum("bhqk,bhkd->bhqd", attn, v)
        vals = vals.transpose(0, 2, 1, 3).reshape(B, S, D)
        attn_out = vals @ p["wo"] + p["bo"]
        x1 = _layer_norm(x + attn_out, p["g1"], p["be1"])
        h = jnp.maximum(x1 @ p["w1"] + p["bf1"], 0.0)
        ffn = h @ p["w2"] + p["bf2"]
        x = _layer_norm(x1 + ffn, p["g2"], p["be2"])
    return _layer_norm(x, fg, fb)


# ---------------------------------------------------------------------------
# Deterministic parameter construction
# ---------------------------------------------------------------------------
def make_params(key, d_model, ffn_hidden, num_layers):
    layer_params = []
    for _ in range(num_layers):
        keys = jax.random.split(key, 9)
        key = keys[0]
        p = {
            "wqkv": jax.random.normal(keys[1], (d_model, 3 * d_model), jnp.float32) / math.sqrt(d_model),
            "bqkv": jax.random.normal(keys[2], (1, 3 * d_model), jnp.float32) * 0.02,
            "wo":   jax.random.normal(keys[3], (d_model, d_model), jnp.float32) / math.sqrt(d_model),
            "bo":   jax.random.normal(keys[4], (1, d_model), jnp.float32) * 0.02,
            "g1":   jnp.ones((1, d_model), jnp.float32),
            "be1":  jnp.zeros((1, d_model), jnp.float32),
            "w1":   jax.random.normal(keys[5], (d_model, ffn_hidden), jnp.float32) / math.sqrt(d_model),
            "bf1":  jax.random.normal(keys[6], (1, ffn_hidden), jnp.float32) * 0.02,
            "w2":   jax.random.normal(keys[7], (ffn_hidden, d_model), jnp.float32) / math.sqrt(ffn_hidden),
            "bf2":  jax.random.normal(keys[8], (1, d_model), jnp.float32) * 0.02,
            "g2":   jnp.ones((1, d_model), jnp.float32),
            "be2":  jnp.zeros((1, d_model), jnp.float32),
        }
        layer_params.append(p)
    fg = jnp.ones((1, d_model), jnp.float32)
    fb = jnp.zeros((1, d_model), jnp.float32)
    return layer_params, fg, fb, key


if __name__ == "__main__":
    batch, seq, d_model = 2, 8, 32
    num_heads, ffn_hidden, num_layers = 4, 64, 2

    key = jax.random.PRNGKey(0)
    key, kx = jax.random.split(key)
    x = jax.random.normal(kx, (batch, seq, d_model), jnp.float32)

    # Causal additive mask (broadcast over batch and heads, same as PyTorch usage).
    causal = jnp.tril(jnp.ones((seq, seq), jnp.float32))
    mask = jnp.where(causal == 1.0, 0.0, -1e9).astype(jnp.float32)

    layer_params, fg, fb, key = make_params(key, d_model, ffn_hidden, num_layers)

    out = decoder_forward(x, mask, layer_params, fg, fb, num_heads=num_heads)
    out = jax.block_until_ready(out)

    ref = _ref_decoder(x, mask, layer_params, fg, fb, num_heads=num_heads)
    assert out.shape == (batch, seq, d_model)
    # Tolerance loosened slightly vs 1e-4 because the softmax denominator uses the
    # EUP approximate reciprocal (pl.reciprocal(..., approx=True)).
    assert jnp.allclose(out, ref, atol=5e-3, rtol=5e-3), "mismatch vs reference"

    print("KERNEL_OK")
</pallas_src>

<mosaic_0001>
module attributes {stable_mosaic.version = 11 : i64} {
  func.func @decoder_kernel(%arg0: i32, %arg1: memref<16x32xf32, #tpu.memory_space<vmem>>, %arg2: memref<8x8xf32, #tpu.memory_space<vmem>>, %arg3: memref<1x32x96xf32, #tpu.memory_space<vmem>>, %arg4: memref<1x1x96xf32, #tpu.memory_space<vmem>>, %arg5: memref<1x32x32xf32, #tpu.memory_space<vmem>>, %arg6: memref<1x1x32xf32, #tpu.memory_space<vmem>>, %arg7: memref<1x1x32xf32, #tpu.memory_space<vmem>>, %arg8: memref<1x1x32xf32, #tpu.memory_space<vmem>>, %arg9: memref<1x32x64xf32, #tpu.memory_space<vmem>>, %arg10: memref<1x1x64xf32, #tpu.memory_space<vmem>>, %arg11: memref<1x64x32xf32, #tpu.memory_space<vmem>>, %arg12: memref<1x1x32xf32, #tpu.memory_space<vmem>>, %arg13: memref<1x1x32xf32, #tpu.memory_space<vmem>>, %arg14: memref<1x1x32xf32, #tpu.memory_space<vmem>>, %arg15: memref<1x32xf32, #tpu.memory_space<vmem>>, %arg16: memref<1x32xf32, #tpu.memory_space<vmem>>, %arg17: memref<16x32xf32, #tpu.memory_space<vmem>>, %arg18: memref<16x32xf32, #tpu.memory_space<vmem>>) attributes {dimension_semantics = [#tpu.dimension_semantics<arbitrary>], iteration_bounds = array<i64: 2>, scalar_prefetch = 0 : i64, scratch_operands = 1 : i64, tpu.core_type = #tpu.core_type<tc>, window_params = [{pipeline_mode = #tpu.pipeline_mode<synchronous>, transform_indices = @transform_0, window_bounds = array<i64: 16, 32>}, {pipeline_mode = #tpu.pipeline_mode<synchronous>, transform_indices = @transform_1, window_bounds = array<i64: 8, 8>}, {transform_indices = @transform_2, window_bounds = array<i64: 1, 32, 96>}, {transform_indices = @transform_3, window_bounds = array<i64: 1, 1, 96>}, {transform_indices = @transform_4, window_bounds = array<i64: 1, 32, 32>}, {transform_indices = @transform_5, window_bounds = array<i64: 1, 1, 32>}, {transform_indices = @transform_6, window_bounds = array<i64: 1, 1, 32>}, {transform_indices = @transform_7, window_bounds = array<i64: 1, 1, 32>}, {transform_indices = @transform_8, window_bounds = array<i64: 1, 32, 64>}, {transform_indices = @transform_9, window_bounds = array<i64: 1, 1, 64>}, {transform_indices = @transform_10, window_bounds = array<i64: 1, 64, 32>}, {transform_indices = @transform_11, window_bounds = array<i64: 1, 1, 32>}, {transform_indices = @transform_12, window_bounds = array<i64: 1, 1, 32>}, {transform_indices = @transform_13, window_bounds = array<i64: 1, 1, 32>}, {pipeline_mode = #tpu.pipeline_mode<synchronous>, transform_indices = @transform_14, window_bounds = array<i64: 1, 32>}, {pipeline_mode = #tpu.pipeline_mode<synchronous>, transform_indices = @transform_15, window_bounds = array<i64: 1, 32>}, {pipeline_mode = #tpu.pipeline_mode<synchronous>, transform_indices = @transform_16, window_bounds = array<i64: 16, 32>}]} {
    %c0_i32 = arith.constant 0 : i32
    %0 = arith.cmpi eq, %arg0, %c0_i32 : i32
    %1 = arith.extui %0 : i1 to i32
    %c0_i32_0 = arith.constant 0 : i32
    %2 = arith.cmpi ne, %1, %c0_i32_0 : i32
    scf.if %2 {
      %c0_90 = arith.constant 0 : index
      %c0_91 = arith.constant 0 : index
      %207 = vector.load %arg1[%c0_90, %c0_91] : memref<16x32xf32, #tpu.memory_space<vmem>>, vector<16x32xf32>
      %c0_92 = arith.constant 0 : index
      %c0_93 = arith.constant 0 : index
      %208 = vector.load %arg18[%c0_92, %c0_93] : memref<16x32xf32, #tpu.memory_space<vmem>>, vector<16x32xf32>
      tpu.vector_store %arg18[%c0_92, %c0_93], %207 {strides = array<i32>} : memref<16x32xf32, #tpu.memory_space<vmem>>, vector<16x32xf32>,
    } else {
    }
    %c0 = arith.constant 0 : index
    %c0_1 = arith.constant 0 : index
    %3 = vector.load %arg18[%c0, %c0_1] : memref<16x32xf32, #tpu.memory_space<vmem>>, vector<16x32xf32>
    %c0_2 = arith.constant 0 : index
    %c0_3 = arith.constant 0 : index
    %4 = vector.load %arg2[%c0_2, %c0_3] : memref<8x8xf32, #tpu.memory_space<vmem>>, vector<8x8xf32>
    %c0_4 = arith.constant 0 : index
    %c0_5 = arith.constant 0 : index
    %c0_6 = arith.constant 0 : index
    %5 = vector.load %arg3[%c0_4, %c0_5, %c0_6] : memref<1x32x96xf32, #tpu.memory_space<vmem>>, vector<1x32x96xf32>
    %6 = vector.shape_cast %5 : vector<1x32x96xf32> to vector<32x96xf32>
    %cst = arith.constant dense<0.000000e+00> : vector<16x96xf32>
    %7 = tpu.matmul %3, %6, %cst {dimension_numbers = #tpu.dot_dimension_numbers<[1], [0], [0], [1], [0, 0, 1, 1], [], []>} : vector<16x32xf32>, vector<32x96xf32>, vector<16x96xf32> -> vector<16x96xf32>
    %c0_7 = arith.constant 0 : index
    %c0_8 = arith.constant 0 : index
    %c0_9 = arith.constant 0 : index
    %8 = vector.load %arg4[%c0_7, %c0_8, %c0_9] : memref<1x1x96xf32, #tpu.memory_space<vmem>>, vector<1x1x96xf32>
    %9 = vector.shape_cast %8 : vector<1x1x96xf32> to vector<1x96xf32>
    %10 = vector.broadcast %9 : vector<1x96xf32> to vector<16x96xf32>
    %11 = arith.addf %7, %10 : vector<16x96xf32>
    %cst_10 = arith.constant 0.000000e+00 : f32
    %12 = vector.broadcast %cst_10 : f32 to vector<16x32xf32>
    %13 = vector.extract_strided_slice %11 {offsets = [0, 0], sizes = [16, 8], strides = [1, 1]} : vector<16x96xf32> to vector<16x8xf32>
    %cst_11 = arith.constant 0.353553385 : f32
    %14 = vector.broadcast %cst_11 : f32 to vector<16x8xf32>
    %15 = arith.mulf %13, %14 : vector<16x8xf32>
    %16 = vector.shape_cast %15 : vector<16x8xf32> to vector<2x8x8xf32>
    %17 = vector.extract_strided_slice %11 {offsets = [0, 32], sizes = [16, 8], strides = [1, 1]} : vector<16x96xf32> to vector<16x8xf32>
    %18 = vector.shape_cast %17 : vector<16x8xf32> to vector<2x8x8xf32>
    %19 = vector.extract_strided_slice %11 {offsets = [0, 64], sizes = [16, 8], strides = [1, 1]} : vector<16x96xf32> to vector<16x8xf32>
    %20 = vector.shape_cast %19 : vector<16x8xf32> to vector<2x8x8xf32>
    "tpu.trace_start"() <{level = 10 : i32, message = "bqd,bkd->bqk"}> : () -> ()
    %cst_12 = arith.constant dense<0.000000e+00> : vector<2x8x8xf32>
    %21 = tpu.matmul %16, %18, %cst_12 {dimension_numbers = #tpu.dot_dimension_numbers<[2], [2], [1], [1], [0, 0, 0, 1, 1, 1], [0], [0]>} : vector<2x8x8xf32>, vector<2x8x8xf32>, vector<2x8x8xf32> -> vector<2x8x8xf32>
    "tpu.trace_stop"() : () -> ()
    %22 = vector.shape_cast %4 : vector<8x8xf32> to vector<1x8x8xf32>
    %23 = vector.broadcast %22 : vector<1x8x8xf32> to vector<2x8x8xf32>
    %24 = arith.addf %21, %23 : vector<2x8x8xf32>
    %cst_13 = arith.constant dense<0xFF800000> : vector<2x8xf32>
    %25 = vector.multi_reduction <maximumf>, %24, %cst_13 [2] : vector<2x8x8xf32> to vector<2x8xf32>
    %26 = vector.shape_cast %25 : vector<2x8xf32> to vector<2x8x1xf32>
    %27 = vector.broadcast %26 : vector<2x8x1xf32> to vector<2x8x8xf32>
    %28 = arith.subf %24, %27 : vector<2x8x8xf32>
    %29 = math.exp %28 : vector<2x8x8xf32>
    %cst_14 = arith.constant dense<0.000000e+00> : vector<2x8xf32>
    %30 = vector.multi_reduction <add>, %29, %cst_14 [2] : vector<2x8x8xf32> to vector<2x8xf32>
    %31 = vector.shape_cast %30 : vector<2x8xf32> to vector<2x8x1xf32>
    %32 = tpu.reciprocal %31 {approx = true} : vector<2x8x1xf32> -> vector<2x8x1xf32>
    %33 = vector.broadcast %32 : vector<2x8x1xf32> to vector<2x8x8xf32>
    %34 = arith.mulf %29, %33 : vector<2x8x8xf32>
    "tpu.trace_start"() <{level = 10 : i32, message = "bqk,bkd->bqd"}> : () -> ()
    %cst_15 = arith.constant dense<0.000000e+00> : vector<2x8x8xf32>
    %35 = tpu.matmul %34, %20, %cst_15 {dimension_numbers = #tpu.dot_dimension_numbers<[2], [1], [1], [2], [0, 0, 0, 1, 1, 2], [0], [0]>} : vector<2x8x8xf32>, vector<2x8x8xf32>, vector<2x8x8xf32> -> vector<2x8x8xf32>
    "tpu.trace_stop"() : () -> ()
    %36 = vector.shape_cast %35 : vector<2x8x8xf32> to vector<16x8xf32>
    %c0_16 = arith.constant 0 : index
    %c0_17 = arith.constant 0 : index
    %c0_18 = arith.constant 0 : index
    %37 = vector.load %arg5[%c0_16, %c0_17, %c0_18] : memref<1x32x32xf32, #tpu.memory_space<vmem>>, vector<1x32x32xf32>
    %38 = vector.shape_cast %37 : vector<1x32x32xf32> to vector<32x32xf32>
    %39 = vector.extract_strided_slice %38 {offsets = [0, 0], sizes = [8, 32], strides = [1, 1]} : vector<32x32xf32> to vector<8x32xf32>
    %cst_19 = arith.constant dense<0.000000e+00> : vector<16x32xf32>
    %40 = tpu.matmul %36, %39, %cst_19 {dimension_numbers = #tpu.dot_dimension_numbers<[1], [0], [0], [1], [0, 0, 1, 1], [], []>} : vector<16x8xf32>, vector<8x32xf32>, vector<16x32xf32> -> vector<16x32xf32>
    %41 = arith.addf %12, %40 : vector<16x32xf32>
    %42 = vector.extract_strided_slice %11 {offsets = [0, 8], sizes = [16, 8], strides = [1, 1]} : vector<16x96xf32> to vector<16x8xf32>
    %cst_20 = arith.constant 0.353553385 : f32
    %43 = vector.broadcast %cst_20 : f32 to vector<16x8xf32>
    %44 = arith.mulf %42, %43 : vector<16x8xf32>
    %45 = vector.shape_cast %44 : vector<16x8xf32> to vector<2x8x8xf32>
    %46 = vector.extract_strided_slice %11 {offsets = [0, 40], sizes = [16, 8], strides = [1, 1]} : vector<16x96xf32> to vector<16x8xf32>
    %47 = vector.shape_cast %46 : vector<16x8xf32> to vector<2x8x8xf32>
    %48 = vector.extract_strided_slice %11 {offsets = [0, 72], sizes = [16, 8], strides = [1, 1]} : vector<16x96xf32> to vector<16x8xf32>
    %49 = vector.shape_cast %48 : vector<16x8xf32> to vector<2x8x8xf32>
    "tpu.trace_start"() <{level = 10 : i32, message = "bqd,bkd->bqk"}> : () -> ()
    %cst_21 = arith.constant dense<0.000000e+00> : vector<2x8x8xf32>
    %50 = tpu.matmul %45, %47, %cst_21 {dimension_numbers = #tpu.dot_dimension_numbers<[2], [2], [1], [1], [0, 0, 0, 1, 1, 1], [0], [0]>} : vector<2x8x8xf32>, vector<2x8x8xf32>, vector<2x8x8xf32> -> vector<2x8x8xf32>
    "tpu.trace_stop"() : () -> ()
    %51 = vector.shape_cast %4 : vector<8x8xf32> to vector<1x8x8xf32>
    %52 = vector.broadcast %51 : vector<1x8x8xf32> to vector<2x8x8xf32>
    %53 = arith.addf %50, %52 : vector<2x8x8xf32>
    %cst_22 = arith.constant dense<0xFF800000> : vector<2x8xf32>
    %54 = vector.multi_reduction <maximumf>, %53, %cst_22 [2] : vector<2x8x8xf32> to vector<2x8xf32>
    %55 = vector.shape_cast %54 : vector<2x8xf32> to vector<2x8x1xf32>
    %56 = vector.broadcast %55 : vector<2x8x1xf32> to vector<2x8x8xf32>
    %57 = arith.subf %53, %56 : vector<2x8x8xf32>
    %58 = math.exp %57 : vector<2x8x8xf32>
    %cst_23 = arith.constant dense<0.000000e+00> : vector<2x8xf32>
    %59 = vector.multi_reduction <add>, %58, %cst_23 [2] : vector<2x8x8xf32> to vector<2x8xf32>
    %60 = vector.shape_cast %59 : vector<2x8xf32> to vector<2x8x1xf32>
    %61 = tpu.reciprocal %60 {approx = true} : vector<2x8x1xf32> -> vector<2x8x1xf32>
    %62 = vector.broadcast %61 : vector<2x8x1xf32> to vector<2x8x8xf32>
    %63 = arith.mulf %58, %62 : vector<2x8x8xf32>
    "tpu.trace_start"() <{level = 10 : i32, message = "bqk,bkd->bqd"}> : () -> ()
    %cst_24 = arith.constant dense<0.000000e+00> : vector<2x8x8xf32>
    %64 = tpu.matmul %63, %49, %cst_24 {dimension_numbers = #tpu.dot_dimension_numbers<[2], [1], [1], [2], [0, 0, 0, 1, 1, 2], [0], [0]>} : vector<2x8x8xf32>, vector<2x8x8xf32>, vector<2x8x8xf32> -> vector<2x8x8xf32>
    "tpu.trace_stop"() : () -> ()
    %65 = vector.shape_cast %64 : vector<2x8x8xf32> to vector<16x8xf32>
    %c0_25 = arith.constant 0 : index
    %c0_26 = arith.constant 0 : index
    %c0_27 = arith.constant 0 : index
    %66 = vector.load %arg5[%c0_25, %c0_26, %c0_27] : memref<1x32x32xf32, #tpu.memory_space<vmem>>, vector<1x32x32xf32>
    %67 = vector.shape_cast %66 : vector<1x32x32xf32> to vector<32x32xf32>
    %68 = vector.extract_strided_slice %67 {offsets = [8, 0], sizes = [8, 32], strides = [1, 1]} : vector<32x32xf32> to vector<8x32xf32>
    %cst_28 = arith.constant dense<0.000000e+00> : vector<16x32xf32>
    %69 = tpu.matmul %65, %68, %cst_28 {dimension_numbers = #tpu.dot_dimension_numbers<[1], [0], [0], [1], [0, 0, 1, 1], [], []>} : vector<16x8xf32>, vector<8x32xf32>, vector<16x32xf32> -> vector<16x32xf32>
    %70 = arith.addf %41, %69 : vector<16x32xf32>
    %71 = vector.extract_strided_slice %11 {offsets = [0, 16], sizes = [16, 8], strides = [1, 1]} : vector<16x96xf32> to vector<16x8xf32>
    %cst_29 = arith.constant 0.353553385 : f32
    %72 = vector.broadcast %cst_29 : f32 to vector<16x8xf32>
    %73 = arith.mulf %71, %72 : vector<16x8xf32>
    %74 = vector.shape_cast %73 : vector<16x8xf32> to vector<2x8x8xf32>
    %75 = vector.extract_strided_slice %11 {offsets = [0, 48], sizes = [16, 8], strides = [1, 1]} : vector<16x96xf32> to vector<16x8xf32>
    %76 = vector.shape_cast %75 : vector<16x8xf32> to vector<2x8x8xf32>
    %77 = vector.extract_strided_slice %11 {offsets = [0, 80], sizes = [16, 8], strides = [1, 1]} : vector<16x96xf32> to vector<16x8xf32>
    %78 = vector.shape_cast %77 : vector<16x8xf32> to vector<2x8x8xf32>
    "tpu.trace_start"() <{level = 10 : i32, message = "bqd,bkd->bqk"}> : () -> ()
    %cst_30 = arith.constant dense<0.000000e+00> : vector<2x8x8xf32>
    %79 = tpu.matmul %74, %76, %cst_30 {dimension_numbers = #tpu.dot_dimension_numbers<[2], [2], [1], [1], [0, 0, 0, 1, 1, 1], [0], [0]>} : vector<2x8x8xf32>, vector<2x8x8xf32>, vector<2x8x8xf32> -> vector<2x8x8xf32>
    "tpu.trace_stop"() : () -> ()
    %80 = vector.shape_cast %4 : vector<8x8xf32> to vector<1x8x8xf32>
    %81 = vector.broadcast %80 : vector<1x8x8xf32> to vector<2x8x8xf32>
    %82 = arith.addf %79, %81 : vector<2x8x8xf32>
    %cst_31 = arith.constant dense<0xFF800000> : vector<2x8xf32>
    %83 = vector.multi_reduction <maximumf>, %82, %cst_31 [2] : vector<2x8x8xf32> to vector<2x8xf32>
    %84 = vector.shape_cast %83 : vector<2x8xf32> to vector<2x8x1xf32>
    %85 = vector.broadcast %84 : vector<2x8x1xf32> to vector<2x8x8xf32>
    %86 = arith.subf %82, %85 : vector<2x8x8xf32>
    %87 = math.exp %86 : vector<2x8x8xf32>
    %cst_32 = arith.constant dense<0.000000e+00> : vector<2x8xf32>
    %88 = vector.multi_reduction <add>, %87, %cst_32 [2] : vector<2x8x8xf32> to vector<2x8xf32>
    %89 = vector.shape_cast %88 : vector<2x8xf32> to vector<2x8x1xf32>
    %90 = tpu.reciprocal %89 {approx = true} : vector<2x8x1xf32> -> vector<2x8x1xf32>
    %91 = vector.broadcast %90 : vector<2x8x1xf32> to vector<2x8x8xf32>
    %92 = arith.mulf %87, %91 : vector<2x8x8xf32>
    "tpu.trace_start"() <{level = 10 : i32, message = "bqk,bkd->bqd"}> : () -> ()
    %cst_33 = arith.constant dense<0.000000e+00> : vector<2x8x8xf32>
    %93 = tpu.matmul %92, %78, %cst_33 {dimension_numbers = #tpu.dot_dimension_numbers<[2], [1], [1], [2], [0, 0, 0, 1, 1, 2], [0], [0]>} : vector<2x8x8xf32>, vector<2x8x8xf32>, vector<2x8x8xf32> -> vector<2x8x8xf32>
    "tpu.trace_stop"() : () -> ()
    %94 = vector.shape_cast %93 : vector<2x8x8xf32> to vector<16x8xf32>
    %c0_34 = arith.constant 0 : index
    %c0_35 = arith.constant 0 : index
    %c0_36 = arith.constant 0 : index
    %95 = vector.load %arg5[%c0_34, %c0_35, %c0_36] : memref<1x32x32xf32, #tpu.memory_space<vmem>>, vector<1x32x32xf32>
    %96 = vector.shape_cast %95 : vector<1x32x32xf32> to vector<32x32xf32>
    %97 = vector.extract_strided_slice %96 {offsets = [16, 0], sizes = [8, 32], strides = [1, 1]} : vector<32x32xf32> to vector<8x32xf32>
    %cst_37 = arith.constant dense<0.000000e+00> : vector<16x32xf32>
    %98 = tpu.matmul %94, %97, %cst_37 {dimension_numbers = #tpu.dot_dimension_numbers<[1], [0], [0], [1], [0, 0, 1, 1], [], []>} : vector<16x8xf32>, vector<8x32xf32>, vector<16x32xf32> -> vector<16x32xf32>
    %99 = arith.addf %70, %98 : vector<16x32xf32>
    %100 = vector.extract_strided_slice %11 {offsets = [0, 24], sizes = [16, 8], strides = [1, 1]} : vector<16x96xf32> to vector<16x8xf32>
    %cst_38 = arith.constant 0.353553385 : f32
    %101 = vector.broadcast %cst_38 : f32 to vector<16x8xf32>
    %102 = arith.mulf %100, %101 : vector<16x8xf32>
    %103 = vector.shape_cast %102 : vector<16x8xf32> to vector<2x8x8xf32>
    %104 = vector.extract_strided_slice %11 {offsets = [0, 56], sizes = [16, 8], strides = [1, 1]} : vector<16x96xf32> to vector<16x8xf32>
    %105 = vector.shape_cast %104 : vector<16x8xf32> to vector<2x8x8xf32>
    %106 = vector.extract_strided_slice %11 {offsets = [0, 88], sizes = [16, 8], strides = [1, 1]} : vector<16x96xf32> to vector<16x8xf32>
    %107 = vector.shape_cast %106 : vector<16x8xf32> to vector<2x8x8xf32>
    "tpu.trace_start"() <{level = 10 : i32, message = "bqd,bkd->bqk"}> : () -> ()
    %cst_39 = arith.constant dense<0.000000e+00> : vector<2x8x8xf32>
    %108 = tpu.matmul %103, %105, %cst_39 {dimension_numbers = #tpu.dot_dimension_numbers<[2], [2], [1], [1], [0, 0, 0, 1, 1, 1], [0], [0]>} : vector<2x8x8xf32>, vector<2x8x8xf32>, vector<2x8x8xf32> -> vector<2x8x8xf32>
    "tpu.trace_stop"() : () -> ()
    %109 = vector.shape_cast %4 : vector<8x8xf32> to vector<1x8x8xf32>
    %110 = vector.broadcast %109 : vector<1x8x8xf32> to vector<2x8x8xf32>
    %111 = arith.addf %108, %110 : vector<2x8x8xf32>
    %cst_40 = arith.constant dense<0xFF800000> : vector<2x8xf32>
    %112 = vector.multi_reduction <maximumf>, %111, %cst_40 [2] : vector<2x8x8xf32> to vector<2x8xf32>
    %113 = vector.shape_cast %112 : vector<2x8xf32> to vector<2x8x1xf32>
    %114 = vector.broadcast %113 : vector<2x8x1xf32> to vector<2x8x8xf32>
    %115 = arith.subf %111, %114 : vector<2x8x8xf32>
    %116 = math.exp %115 : vector<2x8x8xf32>
    %cst_41 = arith.constant dense<0.000000e+00> : vector<2x8xf32>
    %117 = vector.multi_reduction <add>, %116, %cst_41 [2] : vector<2x8x8xf32> to vector<2x8xf32>
    %118 = vector.shape_cast %117 : vector<2x8xf32> to vector<2x8x1xf32>
    %119 = tpu.reciprocal %118 {approx = true} : vector<2x8x1xf32> -> vector<2x8x1xf32>
    %120 = vector.broadcast %119 : vector<2x8x1xf32> to vector<2x8x8xf32>
    %121 = arith.mulf %116, %120 : vector<2x8x8xf32>
    "tpu.trace_start"() <{level = 10 : i32, message = "bqk,bkd->bqd"}> : () -> ()
    %cst_42 = arith.constant dense<0.000000e+00> : vector<2x8x8xf32>
    %122 = tpu.matmul %121, %107, %cst_42 {dimension_numbers = #tpu.dot_dimension_numbers<[2], [1], [1], [2], [0, 0, 0, 1, 1, 2], [0], [0]>} : vector<2x8x8xf32>, vector<2x8x8xf32>, vector<2x8x8xf32> -> vector<2x8x8xf32>
    "tpu.trace_stop"() : () -> ()
    %123 = vector.shape_cast %122 : vector<2x8x8xf32> to vector<16x8xf32>
    %c0_43 = arith.constant 0 : index
    %c0_44 = arith.constant 0 : index
    %c0_45 = arith.constant 0 : index
    %124 = vector.load %arg5[%c0_43, %c0_44, %c0_45] : memref<1x32x32xf32, #tpu.memory_space<vmem>>, vector<1x32x32xf32>
    %125 = vector.shape_cast %124 : vector<1x32x32xf32> to vector<32x32xf32>
    %126 = vector.extract_strided_slice %125 {offsets = [24, 0], sizes = [8, 32], strides = [1, 1]} : vector<32x32xf32> to vector<8x32xf32>
    %cst_46 = arith.constant dense<0.000000e+00> : vector<16x32xf32>
    %127 = tpu.matmul %123, %126, %cst_46 {dimension_numbers = #tpu.dot_dimension_numbers<[1], [0], [0], [1], [0, 0, 1, 1], [], []>} : vector<16x8xf32>, vector<8x32xf32>, vector<16x32xf32> -> vector<16x32xf32>
    %128 = arith.addf %99, %127 : vector<16x32xf32>
    %c0_47 = arith.constant 0 : index
    %c0_48 = arith.constant 0 : index
    %c0_49 = arith.constant 0 : index
    %129 = vector.load %arg6[%c0_47, %c0_48, %c0_49] : memref<1x1x32xf32, #tpu.memory_space<vmem>>, vector<1x1x32xf32>
    %130 = vector.shape_cast %129 : vector<1x1x32xf32> to vector<1x32xf32>
    %131 = vector.broadcast %130 : vector<1x32xf32> to vector<16x32xf32>
    %132 = arith.addf %128, %131 : vector<16x32xf32>
    %133 = arith.addf %3, %132 : vector<16x32xf32>
    %c0_50 = arith.constant 0 : index
    %c0_51 = arith.constant 0 : index
    %c0_52 = arith.constant 0 : index
    %134 = vector.load %arg7[%c0_50, %c0_51, %c0_52] : memref<1x1x32xf32, #tpu.memory_space<vmem>>, vector<1x1x32xf32>
    %135 = vector.shape_cast %134 : vector<1x1x32xf32> to vector<1x32xf32>
    %c0_53 = arith.constant 0 : index
    %c0_54 = arith.constant 0 : index
    %c0_55 = arith.constant 0 : index
    %136 = vector.load %arg8[%c0_53, %c0_54, %c0_55] : memref<1x1x32xf32, #tpu.memory_space<vmem>>, vector<1x1x32xf32>
    %137 = vector.shape_cast %136 : vector<1x1x32xf32> to vector<1x32xf32>
    %cst_56 = arith.constant dense<0.000000e+00> : vector<16xf32>
    %138 = vector.multi_reduction <add>, %133, %cst_56 [1] : vector<16x32xf32> to vector<16xf32>
    %139 = vector.shape_cast %138 : vector<16xf32> to vector<16x1xf32>
    %cst_57 = arith.constant 3.200000e+01 : f32
    %140 = vector.broadcast %cst_57 : f32 to vector<16x1xf32>
    %141 = arith.divf %139, %140 : vector<16x1xf32>
    %142 = vector.broadcast %141 : vector<16x1xf32> to vector<16x32xf32>
    %143 = arith.subf %133, %142 : vector<16x32xf32>
    %144 = arith.mulf %143, %143 : vector<16x32xf32>
    %cst_58 = arith.constant dense<0.000000e+00> : vector<16xf32>
    %145 = vector.multi_reduction <add>, %144, %cst_58 [1] : vector<16x32xf32> to vector<16xf32>
    %146 = vector.shape_cast %145 : vector<16xf32> to vector<16x1xf32>
    %cst_59 = arith.constant 3.100000e+01 : f32
    %147 = vector.broadcast %cst_59 : f32 to vector<16x1xf32>
    %148 = arith.divf %146, %147 : vector<16x1xf32>
    %149 = math.sqrt %148 : vector<16x1xf32>
    %cst_60 = arith.constant 9.99999974E-6 : f32
    %150 = vector.broadcast %cst_60 : f32 to vector<16x1xf32>
    %151 = arith.addf %149, %150 : vector<16x1xf32>
    %152 = vector.broadcast %141 : vector<16x1xf32> to vector<16x32xf32>
    %153 = arith.subf %133, %152 : vector<16x32xf32>
    %154 = vector.broadcast %151 : vector<16x1xf32> to vector<16x32xf32>
    %155 = arith.divf %153, %154 : vector<16x32xf32>
    %156 = vector.broadcast %135 : vector<1x32xf32> to vector<16x32xf32>
    %157 = arith.mulf %156, %155 : vector<16x32xf32>
    %158 = vector.broadcast %137 : vector<1x32xf32> to vector<16x32xf32>
    %159 = arith.addf %157, %158 : vector<16x32xf32>
    %c0_61 = arith.constant 0 : index
    %c0_62 = arith.constant 0 : index
    %c0_63 = arith.constant 0 : index
    %160 = vector.load %arg9[%c0_61, %c0_62, %c0_63] : memref<1x32x64xf32, #tpu.memory_space<vmem>>, vector<1x32x64xf32>
    %161 = vector.shape_cast %160 : vector<1x32x64xf32> to vector<32x64xf32>
    %cst_64 = arith.constant dense<0.000000e+00> : vector<16x64xf32>
    %162 = tpu.matmul %159, %161, %cst_64 {dimension_numbers = #tpu.dot_dimension_numbers<[1], [0], [0], [1], [0, 0, 1, 1], [], []>} : vector<16x32xf32>, vector<32x64xf32>, vector<16x64xf32> -> vector<16x64xf32>
    %c0_65 = arith.constant 0 : index
    %c0_66 = arith.constant 0 : index
    %c0_67 = arith.constant 0 : index
    %163 = vector.load %arg10[%c0_65, %c0_66, %c0_67] : memref<1x1x64xf32, #tpu.memory_space<vmem>>, vector<1x1x64xf32>
    %164 = vector.shape_cast %163 : vector<1x1x64xf32> to vector<1x64xf32>
    %165 = vector.broadcast %164 : vector<1x64xf32> to vector<16x64xf32>
    %166 = arith.addf %162, %165 : vector<16x64xf32>
    %cst_68 = arith.constant 0.000000e+00 : f32
    %167 = vector.broadcast %cst_68 : f32 to vector<16x64xf32>
    %168 = arith.maximumf %166, %167 : vector<16x64xf32>
    %c0_69 = arith.constant 0 : index
    %c0_70 = arith.constant 0 : index
    %c0_71 = arith.constant 0 : index
    %169 = vector.load %arg11[%c0_69, %c0_70, %c0_71] : memref<1x64x32xf32, #tpu.memory_space<vmem>>, vector<1x64x32xf32>
    %170 = vector.shape_cast %169 : vector<1x64x32xf32> to vector<64x32xf32>
    %cst_72 = arith.constant dense<0.000000e+00> : vector<16x32xf32>
    %171 = tpu.matmul %168, %170, %cst_72 {dimension_numbers = #tpu.dot_dimension_numbers<[1], [0], [0], [1], [0, 0, 1, 1], [], []>} : vector<16x64xf32>, vector<64x32xf32>, vector<16x32xf32> -> vector<16x32xf32>
    %c0_73 = arith.constant 0 : index
    %c0_74 = arith.constant 0 : index
    %c0_75 = arith.constant 0 : index
    %172 = vector.load %arg12[%c0_73, %c0_74, %c0_75] : memref<1x1x32xf32, #tpu.memory_space<vmem>>, vector<1x1x32xf32>
    %173 = vector.shape_cast %172 : vector<1x1x32xf32> to vector<1x32xf32>
    %174 = vector.broadcast %173 : vector<1x32xf32> to vector<16x32xf32>
    %175 = arith.addf %171, %174 : vector<16x32xf32>
    %176 = arith.addf %159, %175 : vector<16x32xf32>
    %c0_76 = arith.constant 0 : index
    %c0_77 = arith.constant 0 : index
    %c0_78 = arith.constant 0 : index
    %177 = vector.load %arg13[%c0_76, %c0_77, %c0_78] : memref<1x1x32xf32, #tpu.memory_space<vmem>>, vector<1x1x32xf32>
    %178 = vector.shape_cast %177 : vector<1x1x32xf32> to vector<1x32xf32>
    %c0_79 = arith.constant 0 : index
    %c0_80 = arith.constant 0 : index
    %c0_81 = arith.constant 0 : index
    %179 = vector.load %arg14[%c0_79, %c0_80, %c0_81] : memref<1x1x32xf32, #tpu.memory_space<vmem>>, vector<1x1x32xf32>
    %180 = vector.shape_cast %179 : vector<1x1x32xf32> to vector<1x32xf32>
    %cst_82 = arith.constant dense<0.000000e+00> : vector<16xf32>
    %181 = vector.multi_reduction <add>, %176, %cst_82 [1] : vector<16x32xf32> to vector<16xf32>
    %182 = vector.shape_cast %181 : vector<16xf32> to vector<16x1xf32>
    %cst_83 = arith.constant 3.200000e+01 : f32
    %183 = vector.broadcast %cst_83 : f32 to vector<16x1xf32>
    %184 = arith.divf %182, %183 : vector<16x1xf32>
    %185 = vector.broadcast %184 : vector<16x1xf32> to vector<16x32xf32>
    %186 = arith.subf %176, %185 : vector<16x32xf32>
    %187 = arith.mulf %186, %186 : vector<16x32xf32>
    %cst_84 = arith.constant dense<0.000000e+00> : vector<16xf32>
    %188 = vector.multi_reduction <add>, %187, %cst_84 [1] : vector<16x32xf32> to vector<16xf32>
    %189 = vector.shape_cast %188 : vector<16xf32> to vector<16x1xf32>
    %cst_85 = arith.constant 3.100000e+01 : f32
    %190 = vector.broadcast %cst_85 : f32 to vector<16x1xf32>
    %191 = arith.divf %189, %190 : vector<16x1xf32>
    %192 = math.sqrt %191 : vector<16x1xf32>
    %cst_86 = arith.constant 9.99999974E-6 : f32
    %193 = vector.broadcast %cst_86 : f32 to vector<16x1xf32>
    %194 = arith.addf %192, %193 : vector<16x1xf32>
    %195 = vector.broadcast %184 : vector<16x1xf32> to vector<16x32xf32>
    %196 = arith.subf %176, %195 : vector<16x32xf32>
    %197 = vector.broadcast %194 : vector<16x1xf32> to vector<16x32xf32>
    %198 = arith.divf %196, %197 : vector<16x32xf32>
    %199 = vector.broadcast %178 : vector<1x32xf32> to vector<16x32xf32>
    %200 = arith.mulf %199, %198 : vector<16x32xf32>
    %201 = vector.broadcast %180 : vector<1x32xf32> to vector<16x32xf32>
    %202 = arith.addf %200, %201 : vector<16x32xf32>
    %c0_87 = arith.constant 0 : index
    %c0_88 = arith.constant 0 : index
    %203 = vector.load %arg18[%c0_87, %c0_88] : memref<16x32xf32, #tpu.memory_space<vmem>>, vector<16x32xf32>
    tpu.vector_store %arg18[%c0_87, %c0_88], %202 {strides = array<i32>} : memref<16x32xf32, #tpu.memory_space<vmem>>, vector<16x32xf32>,
    %c1_i32 = arith.constant 1 : i32
    %204 = arith.cmpi eq, %arg0, %c1_i32 : i32
    %205 = arith.extui %204 : i1 to i32
    %c0_i32_89 = arith.constant 0 : i32
    %206 = arith.cmpi ne, %205, %c0_i32_89 : i32
    scf.if %206 {
      %c0_90 = arith.constant 0 : index
      %c0_91 = arith.constant 0 : index
      %207 = vector.load %arg15[%c0_90, %c0_91] : memref<1x32xf32, #tpu.memory_space<vmem>>, vector<1x32xf32>
      %c0_92 = arith.constant 0 : index
      %c0_93 = arith.constant 0 : index
      %208 = vector.load %arg16[%c0_92, %c0_93] : memref<1x32xf32, #tpu.memory_space<vmem>>, vector<1x32xf32>
      %cst_94 = arith.constant dense<0.000000e+00> : vector<16xf32>
      %209 = vector.multi_reduction <add>, %202, %cst_94 [1] : vector<16x32xf32> to vector<16xf32>
      %210 = vector.shape_cast %209 : vector<16xf32> to vector<16x1xf32>
      %cst_95 = arith.constant 3.200000e+01 : f32
      %211 = vector.broadcast %cst_95 : f32 to vector<16x1xf32>
      %212 = arith.divf %210, %211 : vector<16x1xf32>
      %213 = vector.broadcast %212 : vector<16x1xf32> to vector<16x32xf32>
      %214 = arith.subf %202, %213 : vector<16x32xf32>
      %215 = arith.mulf %214, %214 : vector<16x32xf32>
      %cst_96 = arith.constant dense<0.000000e+00> : vector<16xf32>
      %216 = vector.multi_reduction <add>, %215, %cst_96 [1] : vector<16x32xf32> to vector<16xf32>
      %217 = vector.shape_cast %216 : vector<16xf32> to vector<16x1xf32>
      %cst_97 = arith.constant 3.100000e+01 : f32
      %218 = vector.broadcast %cst_97 : f32 to vector<16x1xf32>
      %219 = arith.divf %217, %218 : vector<16x1xf32>
      %220 = math.sqrt %219 : vector<16x1xf32>
      %cst_98 = arith.constant 9.99999974E-6 : f32
      %221 = vector.broadcast %cst_98 : f32 to vector<16x1xf32>
      %222 = arith.addf %220, %221 : vector<16x1xf32>
      %223 = vector.broadcast %212 : vector<16x1xf32> to vector<16x32xf32>
      %224 = arith.subf %202, %223 : vector<16x32xf32>
      %225 = vector.broadcast %222 : vector<16x1xf32> to vector<16x32xf32>
      %226 = arith.divf %224, %225 : vector<16x32xf32>
      %227 = vector.broadcast %207 : vector<1x32xf32> to vector<16x32xf32>
      %228 = arith.mulf %227, %226 : vector<16x32xf32>
      %229 = vector.broadcast %208 : vector<1x32xf32> to vector<16x32xf32>
      %230 = arith.addf %228, %229 : vector<16x32xf32>
      %c0_99 = arith.constant 0 : index
      %c0_100 = arith.constant 0 : index
      %231 = vector.load %arg17[%c0_99, %c0_100] : memref<16x32xf32, #tpu.memory_space<vmem>>, vector<16x32xf32>
      tpu.vector_store %arg17[%c0_99, %c0_100], %230 {strides = array<i32>} : memref<16x32xf32, #tpu.memory_space<vmem>>, vector<16x32xf32>,
    } else {
    }
    return
  }
  func.func @transform_0(%arg0: i32) -> (i32, i32) {
    %c0_i32 = arith.constant 0 : i32
    %c0_i32_0 = arith.constant 0 : i32
    %c0_i32_1 = arith.constant 0 : i32
    return %c0_i32, %c0_i32_0 : i32, i32
  }
  func.func @transform_1(%arg0: i32) -> (i32, i32) {
    %c0_i32 = arith.constant 0 : i32
    %c0_i32_0 = arith.constant 0 : i32
    %c0_i32_1 = arith.constant 0 : i32
    return %c0_i32, %c0_i32_0 : i32, i32
  }
  func.func @transform_2(%arg0: i32) -> (i32, i32, i32) {
    %c0_i32 = arith.constant 0 : i32
    %c0_i32_0 = arith.constant 0 : i32
    %c0_i32_1 = arith.constant 0 : i32
    return %arg0, %c0_i32, %c0_i32_0 : i32, i32, i32
  }
  func.func @transform_3(%arg0: i32) -> (i32, i32, i32) {
    %c0_i32 = arith.constant 0 : i32
    %c0_i32_0 = arith.constant 0 : i32
    %c0_i32_1 = arith.constant 0 : i32
    return %arg0, %c0_i32, %c0_i32_0 : i32, i32, i32
  }
  func.func @transform_4(%arg0: i32) -> (i32, i32, i32) {
    %c0_i32 = arith.constant 0 : i32
    %c0_i32_0 = arith.constant 0 : i32
    %c0_i32_1 = arith.constant 0 : i32
    return %arg0, %c0_i32, %c0_i32_0 : i32, i32, i32
  }
  func.func @transform_5(%arg0: i32) -> (i32, i32, i32) {
    %c0_i32 = arith.constant 0 : i32
    %c0_i32_0 = arith.constant 0 : i32
    %c0_i32_1 = arith.constant 0 : i32
    return %arg0, %c0_i32, %c0_i32_0 : i32, i32, i32
  }
  func.func @transform_6(%arg0: i32) -> (i32, i32, i32) {
    %c0_i32 = arith.constant 0 : i32
    %c0_i32_0 = arith.constant 0 : i32
    %c0_i32_1 = arith.constant 0 : i32
    return %arg0, %c0_i32, %c0_i32_0 : i32, i32, i32
  }
  func.func @transform_7(%arg0: i32) -> (i32, i32, i32) {
    %c0_i32 = arith.constant 0 : i32
    %c0_i32_0 = arith.constant 0 : i32
    %c0_i32_1 = arith.constant 0 : i32
    return %arg0, %c0_i32, %c0_i32_0 : i32, i32, i32
  }
  func.func @transform_8(%arg0: i32) -> (i32, i32, i32) {
    %c0_i32 = arith.constant 0 : i32
    %c0_i32_0 = arith.constant 0 : i32
    %c0_i32_1 = arith.constant 0 : i32
    return %arg0, %c0_i32, %c0_i32_0 : i32, i32, i32
  }
  func.func @transform_9(%arg0: i32) -> (i32, i32, i32) {
    %c0_i32 = arith.constant 0 : i32
    %c0_i32_0 = arith.constant 0 : i32
    %c0_i32_1 = arith.constant 0 : i32
    return %arg0, %c0_i32, %c0_i32_0 : i32, i32, i32
  }
  func.func @transform_10(%arg0: i32) -> (i32, i32, i32) {
    %c0_i32 = arith.constant 0 : i32
    %c0_i32_0 = arith.constant 0 : i32
    %c0_i32_1 = arith.constant 0 : i32
    return %arg0, %c0_i32, %c0_i32_0 : i32, i32, i32
  }
  func.func @transform_11(%arg0: i32) -> (i32, i32, i32) {
    %c0_i32 = arith.constant 0 : i32
    %c0_i32_0 = arith.constant 0 : i32
    %c0_i32_1 = arith.constant 0 : i32
    return %arg0, %c0_i32, %c0_i32_0 : i32, i32, i32
  }
  func.func @transform_12(%arg0: i32) -> (i32, i32, i32) {
    %c0_i32 = arith.constant 0 : i32
    %c0_i32_0 = arith.constant 0 : i32
    %c0_i32_1 = arith.constant 0 : i32
    return %arg0, %c0_i32, %c0_i32_0 : i32, i32, i32
  }
  func.func @transform_13(%arg0: i32) -> (i32, i32, i32) {
    %c0_i32 = arith.constant 0 : i32
    %c0_i32_0 = arith.constant 0 : i32
    %c0_i32_1 = arith.constant 0 : i32
    return %arg0, %c0_i32, %c0_i32_0 : i32, i32, i32
  }
  func.func @transform_14(%arg0: i32) -> (i32, i32) {
    %c0_i32 = arith.constant 0 : i32
    %c0_i32_0 = arith.constant 0 : i32
    %c0_i32_1 = arith.constant 0 : i32
    return %c0_i32, %c0_i32_0 : i32, i32
  }
  func.func @transform_15(%arg0: i32) -> (i32, i32) {
    %c0_i32 = arith.constant 0 : i32
    %c0_i32_0 = arith.constant 0 : i32
    %c0_i32_1 = arith.constant 0 : i32
    return %c0_i32, %c0_i32_0 : i32, i32
  }
  func.func @transform_16(%arg0: i32) -> (i32, i32) {
    %c0_i32 = arith.constant 0 : i32
    %c0_i32_0 = arith.constant 0 : i32
    %c0_i32_1 = arith.constant 0 : i32
    return %c0_i32, %c0_i32_0 : i32, i32
  }
}

</mosaic_0001>

<llo_original>
// kernel: tpu_custom_call.1
$region0: #{tpu_custom_call.1}
  #allocation0 [shape = 'u32[]', space=smem, size = 0x4, offset = 0x4, fixed_abs, tag = 'smem constant byte address 0x4 - core index']
  #allocation1 [shape = 'u32[144,128]{1,0:T(1,128)}', space=vmem, size = 0x12000, scoped, tag = 'internal scratch']
  #allocation2 [shape = 'f32[16,32]{1,0:T(8,128)}', space=vmem, size = 0x2000, scoped, tag = 'scratch operand']
  %s0 = inlined_call_operand.hbm [shape: f32[16,32], index: 0, kind: input, shape index: {}]
  %s1 = inlined_call_operand.hbm [shape: f32[8,8], index: 1, kind: input, shape index: {}]
  %s2 = inlined_call_operand.vmem [shape: f32[2,32,96], index: 2, kind: input, shape index: {}]
  %s3 = inlined_call_operand.vmem [shape: f32[2,1,96], index: 3, kind: input, shape index: {}]
  %s4 = inlined_call_operand.vmem [shape: f32[2,32,32], index: 4, kind: input, shape index: {}]
  %s5 = inlined_call_operand.vmem [shape: f32[2,1,32], index: 5, kind: input, shape index: {}]
  %s6 = inlined_call_operand.vmem [shape: f32[2,1,32], index: 6, kind: input, shape index: {}]
  %s7 = inlined_call_operand.vmem [shape: f32[2,1,32], index: 7, kind: input, shape index: {}]
  %s8 = inlined_call_operand.vmem [shape: f32[2,32,64], index: 8, kind: input, shape index: {}]
  %s9 = inlined_call_operand.vmem [shape: f32[2,1,64], index: 9, kind: input, shape index: {}]
  %s10 = inlined_call_operand.vmem [shape: f32[2,64,32], index: 10, kind: input, shape index: {}]
  %s11 = inlined_call_operand.vmem [shape: f32[2,1,32], index: 11, kind: input, shape index: {}]
  %s12 = inlined_call_operand.vmem [shape: f32[2,1,32], index: 12, kind: input, shape index: {}]
  %s13 = inlined_call_operand.vmem [shape: f32[2,1,32], index: 13, kind: input, shape index: {}]
  %s14 = inlined_call_operand.vmem [shape: f32[1,32], index: 14, kind: input, shape index: {}]
  %s15 = inlined_call_operand.vmem [shape: f32[1,32], index: 15, kind: input, shape index: {}]
  %s16 = inlined_call_operand.hbm [shape: f32[16,32], index: 16, kind: output, shape index: {}]
  %s17 = sld [smem:[#allocation0]]
  $region113: #{tpu_custom_call.1} parent=0
    _
  %s19 = ssub.s32 1, %s17
  %s20 = scalar_select 0, %s19, %s17
  $region1: #{tpu_custom_call.1} parent=0
    #allocation3 [shape = 'u8[8192]{0}', space=vmem, size = 0x2000, scoped, tag = 'input window, operand 0, single buffered']
    #allocation4 [shape = 's32[2]{0}', space=sflag, size = 0x8, scoped, tag = 'scoped memory for tpu_custom_call.1']
    #allocation5 [shape = 's32[2]{0}', space=sflag, size = 0x8, scoped, tag = 'scoped memory for tpu_custom_call.1']
    #allocation6 [shape = 'u8[4096]{0}', space=vmem, size = 0x1000, scoped, tag = 'input window, operand 1, single buffered']
    #allocation7 [shape = 's32[1]{0}', space=sflag, size = 0x4, scoped, tag = 'scoped memory for tpu_custom_call.1']
    #allocation8 [shape = 'u8[8192]{0}', space=vmem, size = 0x2000, scoped, tag = 'output window, operand 0, single buffered']
    %21 = vsyncpa [#allocation4], 0
    %22 = vsyncpa [#allocation7], 0
    %23 = vsyncpa [#allocation5], 0
    loop: start=0, step=1, limit=4
    $region2: #{tpu_custom_call.1} parent=1 // loop_pre_header
      _
    $region3: #{tpu_custom_call.1} parent=1 // loop_header
      %s25 = sphi 0, %s29
      %p26 = scmp.ge.s32.totalorder %s25, 4
      %s33 = sphi 0, %s33
      %s35 = sphi 0, %s33
      %s36 = sphi 0, %s35
      %s50 = sphi 0, %s36
      %s54 = sphi 0, %s54
      %s56 = sphi 0, %s54
      %s57 = sphi 0, %s56
      %s71 = sphi 0, %s57
      %s77 = sphi 0, %s79
      %s80 = sphi 0, %s77
      %s81 = sphi 0, %s80
      %s97 = sphi 0, %s81
      %s103 = sphi 0, %s105
      %s106 = sphi 0, %s103
      %s107 = sphi 0, %s106
      %s123 = sphi 0, %s107
      %s129 = sphi 0, %s131
      %s132 = sphi 0, %s129
      %s133 = sphi 0, %s132
      %s149 = sphi 0, %s133
      %s155 = sphi 0, %s157
      %s158 = sphi 0, %s155
      %s159 = sphi 0, %s158
      %s175 = sphi 0, %s159
      %s181 = sphi 0, %s183
      %s184 = sphi 0, %s181
      %s185 = sphi 0, %s184
      %s201 = sphi 0, %s185
      %s207 = sphi 0, %s209
      %s210 = sphi 0, %s207
      %s211 = sphi 0, %s210
      %s227 = sphi 0, %s211
      %s233 = sphi 0, %s235
      %s236 = sphi 0, %s233
      %s237 = sphi 0, %s236
      %s253 = sphi 0, %s237
      %s259 = sphi 0, %s261
      %s262 = sphi 0, %s259
      %s263 = sphi 0, %s262
      %s279 = sphi 0, %s263
      %s285 = sphi 0, %s287
      %s288 = sphi 0, %s285
      %s289 = sphi 0, %s288
      %s305 = sphi 0, %s289
      %s311 = sphi 0, %s313
      %s314 = sphi 0, %s311
      %s315 = sphi 0, %s314
      %s331 = sphi 0, %s315
      %s337 = sphi 0, %s339
      %s340 = sphi 0, %s337
      %s341 = sphi 0, %s340
      %s357 = sphi 0, %s341
      %s363 = sphi 0, %s365
      %s366 = sphi 0, %s363
      %s367 = sphi 0, %s366
      %s383 = sphi 0, %s367
      %s387 = sphi 0, %s387
      %s389 = sphi 0, %s387
      %s390 = sphi 0, %s389
      %s404 = sphi 0, %s390
      %s408 = sphi 0, %s408
      %s410 = sphi 0, %s408
      %s411 = sphi 0, %s410
      %s425 = sphi 0, %s411
      %s429 = sphi 0, %s429
      %s431 = sphi 0, %s429
      %s432 = sphi 0, %s431
      %s446 = sphi 0, %s432
    $region4: #{tpu_custom_call.1} parent=1 // loop_header_branch
      %28 = sbr.rel (%p26) target = $region8
    $region5: #{tpu_custom_call.1} parent=1 // loop_body
      %s30 = ssub.s32 %s25, 1
      %s31 = ssub.s32 %s25, 2
      %s32 = sadd.s32 %s25, 1
      %s34 = sadd.s32 %s33, 1
      %p37 = scmp.eq.s32.totalorder %s25, 1
      %p38 = scmp.ne.s32.totalorder %s33, %s35
      %p39 = scmp.eq.s32.totalorder %s25, 0
      %p40 = por %p38, %p39
      %p41 = scmp.ne.s32.totalorder %s33, %s35
      %p42 = scmp.eq.s32.totalorder %s30, 1
      %p43 = por %p41, %p42
      %p44 = scmp.ne.s32.totalorder %s35, %s36
      %p45 = scmp.eq.s32.totalorder %s30, 0
      %p46 = por %p44, %p45
      %p47 = scmp.ne.s32.totalorder %s35, %s36
      %p48 = scmp.eq.s32.totalorder %s31, 1
      %p49 = por %p47, %p48
      %p51 = scmp.ne.s32.totalorder %s36, %s50
      %p52 = scmp.eq.s32.totalorder %s31, 0
      %p53 = por %p51, %p52
      %s55 = sadd.s32 %s54, 1
      %p58 = scmp.eq.s32.totalorder %s25, 1
      %p59 = scmp.ne.s32.totalorder %s54, %s56
      %p60 = scmp.eq.s32.totalorder %s25, 0
      %p61 = por %p59, %p60
      %p62 = scmp.ne.s32.totalorder %s54, %s56
      %p63 = scmp.eq.s32.totalorder %s30, 1
      %p64 = por %p62, %p63
      %p65 = scmp.ne.s32.totalorder %s56, %s57
      %p66 = scmp.eq.s32.totalorder %s30, 0
      %p67 = por %p65, %p66
      %p68 = scmp.ne.s32.totalorder %s56, %s57
      %p69 = scmp.eq.s32.totalorder %s31, 1
      %p70 = por %p68, %p69
      %p72 = scmp.ne.s32.totalorder %s57, %s71
      %p73 = scmp.eq.s32.totalorder %s31, 0
      %p74 = por %p72, %p73
      %s75 = ssub.s32 %s25, %s32
      %p76 = scmp.eq.s32.totalorder %s75, 0
      %s78 = sadd.s32 %s77, 1
      %s79 = scalar_select %p76, %s77, %s78
      %p82 = pneg %p76
      %p83 = scmp.eq.s32.totalorder %s25, 1
      %p84 = por %p82, %p83
      %p85 = scmp.ne.s32.totalorder %s77, %s80
      %p86 = scmp.eq.s32.totalorder %s25, 0
      %p87 = por %p85, %p86
      %p88 = scmp.ne.s32.totalorder %s77, %s80
      %p89 = scmp.eq.s32.totalorder %s30, 1
      %p90 = por %p88, %p89
      %p91 = scmp.ne.s32.totalorder %s80, %s81
      %p92 = scmp.eq.s32.totalorder %s30, 0
      %p93 = por %p91, %p92
      %p94 = scmp.ne.s32.totalorder %s80, %s81
      %p95 = scmp.eq.s32.totalorder %s31, 1
      %p96 = por %p94, %p95
      %p98 = scmp.ne.s32.totalorder %s81, %s97
      %p99 = scmp.eq.s32.totalorder %s31, 0
      %p100 = por %p98, %p99
      %s101 = ssub.s32 %s25, %s32
      %p102 = scmp.eq.s32.totalorder %s101, 0
      %s104 = sadd.s32 %s103, 1
      %s105 = scalar_select %p102, %s103, %s104
      %p108 = pneg %p102
      %p109 = scmp.eq.s32.totalorder %s25, 1
      %p110 = por %p108, %p109
      %p111 = scmp.ne.s32.totalorder %s103, %s106
      %p112 = scmp.eq.s32.totalorder %s25, 0
      %p113 = por %p111, %p112
      %p114 = scmp.ne.s32.totalorder %s103, %s106
      %p115 = scmp.eq.s32.totalorder %s30, 1
      %p116 = por %p114, %p115
      %p117 = scmp.ne.s32.totalorder %s106, %s107
      %p118 = scmp.eq.s32.totalorder %s30, 0
      %p119 = por %p117, %p118
      %p120 = scmp.ne.s32.totalorder %s106, %s107
      %p121 = scmp.eq.s32.totalorder %s31, 1
      %p122 = por %p120, %p121
      %p124 = scmp.ne.s32.totalorder %s107, %s123
      %p125 = scmp.eq.s32.totalorder %s31, 0
      %p126 = por %p124, %p125
      %s127 = ssub.s32 %s25, %s32
      %p128 = scmp.eq.s32.totalorder %s127, 0
      %s130 = sadd.s32 %s129, 1
      %s131 = scalar_select %p128, %s129, %s130
      %p134 = pneg %p128
      %p135 = scmp.eq.s32.totalorder %s25, 1
      %p136 = por %p134, %p135
      %p137 = scmp.ne.s32.totalorder %s129, %s132
      %p138 = scmp.eq.s32.totalorder %s25, 0
      %p139 = por %p137, %p138
      %p140 = scmp.ne.s32.totalorder %s129, %s132
      %p141 = scmp.eq.s32.totalorder %s30, 1
      %p142 = por %p140, %p141
      %p143 = scmp.ne.s32.totalorder %s132, %s133
      %p144 = scmp.eq.s32.totalorder %s30, 0
      %p145 = por %p143, %p144
      %p146 = scmp.ne.s32.totalorder %s132, %s133
      %p147 = scmp.eq.s32.totalorder %s31, 1
      %p148 = por %p146, %p147
      %p150 = scmp.ne.s32.totalorder %s133, %s149
      %p151 = scmp.eq.s32.totalorder %s31, 0
      %p152 = por %p150, %p151
      %s153 = ssub.s32 %s25, %s32
      %p154 = scmp.eq.s32.totalorder %s153, 0
      %s156 = sadd.s32 %s155, 1
      %s157 = scalar_select %p154, %s155, %s156
      %p160 = pneg %p154
      %p161 = scmp.eq.s32.totalorder %s25, 1
      %p162 = por %p160, %p161
      %p163 = scmp.ne.s32.totalorder %s155, %s158
      %p164 = scmp.eq.s32.totalorder %s25, 0
      %p165 = por %p163, %p164
      %p166 = scmp.ne.s32.totalorder %s155, %s158
      %p167 = scmp.eq.s32.totalorder %s30, 1
      %p168 = por %p166, %p167
      %p169 = scmp.ne.s32.totalorder %s158, %s159
      %p170 = scmp.eq.s32.totalorder %s30, 0
      %p171 = por %p169, %p170
      %p172 = scmp.ne.s32.totalorder %s158, %s159
      %p173 = scmp.eq.s32.totalorder %s31, 1
      %p174 = por %p172, %p173
      %p176 = scmp.ne.s32.totalorder %s159, %s175
      %p177 = scmp.eq.s32.totalorder %s31, 0
      %p178 = por %p176, %p177
      %s179 = ssub.s32 %s25, %s32
      %p180 = scmp.eq.s32.totalorder %s179, 0
      %s182 = sadd.s32 %s181, 1
      %s183 = scalar_select %p180, %s181, %s182
      %p186 = pneg %p180
      %p187 = scmp.eq.s32.totalorder %s25, 1
      %p188 = por %p186, %p187
      %p189 = scmp.ne.s32.totalorder %s181, %s184
      %p190 = scmp.eq.s32.totalorder %s25, 0
      %p191 = por %p189, %p190
      %p192 = scmp.ne.s32.totalorder %s181, %s184
      %p193 = scmp.eq.s32.totalorder %s30, 1
      %p194 = por %p192, %p193
      %p195 = scmp.ne.s32.totalorder %s184, %s185
      %p196 = scmp.eq.s32.totalorder %s30, 0
      %p197 = por %p195, %p196
      %p198 = scmp.ne.s32.totalorder %s184, %s185
      %p199 = scmp.eq.s32.totalorder %s31, 1
      %p200 = por %p198, %p199
      %p202 = scmp.ne.s32.totalorder %s185, %s201
      %p203 = scmp.eq.s32.totalorder %s31, 0
      %p204 = por %p202, %p203
      %s205 = ssub.s32 %s25, %s32
      %p206 = scmp.eq.s32.totalorder %s205, 0
      %s208 = sadd.s32 %s207, 1
      %s209 = scalar_select %p206, %s207, %s208
      %p212 = pneg %p206
      %p213 = scmp.eq.s32.totalorder %s25, 1
      %p214 = por %p212, %p213
      %p215 = scmp.ne.s32.totalorder %s207, %s210
      %p216 = scmp.eq.s32.totalorder %s25, 0
      %p217 = por %p215, %p216
      %p218 = scmp.ne.s32.totalorder %s207, %s210
      %p219 = scmp.eq.s32.totalorder %s30, 1
      %p220 = por %p218, %p219
      %p221 = scmp.ne.s32.totalorder %s210, %s211
      %p222 = scmp.eq.s32.totalorder %s30, 0
      %p223 = por %p221, %p222
      %p224 = scmp.ne.s32.totalorder %s210, %s211
      %p225 = scmp.eq.s32.totalorder %s31, 1
      %p226 = por %p224, %p225
      %p228 = scmp.ne.s32.totalorder %s211, %s227
      %p229 = scmp.eq.s32.totalorder %s31, 0
      %p230 = por %p228, %p229
      %s231 = ssub.s32 %s25, %s32
      %p232 = scmp.eq.s32.totalorder %s231, 0
      %s234 = sadd.s32 %s233, 1
      %s235 = scalar_select %p232, %s233, %s234
      %p238 = pneg %p232
      %p239 = scmp.eq.s32.totalorder %s25, 1
      %p240 = por %p238, %p239
      %p241 = scmp.ne.s32.totalorder %s233, %s236
      %p242 = scmp.eq.s32.totalorder %s25, 0
      %p243 = por %p241, %p242
      %p244 = scmp.ne.s32.totalorder %s233, %s236
      %p245 = scmp.eq.s32.totalorder %s30, 1
      %p246 = por %p244, %p245
      %p247 = scmp.ne.s32.totalorder %s236, %s237
      %p248 = scmp.eq.s32.totalorder %s30, 0
      %p249 = por %p247, %p248
      %p250 = scmp.ne.s32.totalorder %s236, %s237
      %p251 = scmp.eq.s32.totalorder %s31, 1
      %p252 = por %p250, %p251
      %p254 = scmp.ne.s32.totalorder %s237, %s253
      %p255 = scmp.eq.s32.totalorder %s31, 0
      %p256 = por %p254, %p255
      %s257 = ssub.s32 %s25, %s32
      %p258 = scmp.eq.s32.totalorder %s257, 0
      %s260 = sadd.s32 %s259, 1
      %s261 = scalar_select %p258, %s259, %s260
      %p264 = pneg %p258
      %p265 = scmp.eq.s32.totalorder %s25, 1
      %p266 = por %p264, %p265
      %p267 = scmp.ne.s32.totalorder %s259, %s262
      %p268 = scmp.eq.s32.totalorder %s25, 0
      %p269 = por %p267, %p268
      %p270 = scmp.ne.s32.totalorder %s259, %s262
      %p271 = scmp.eq.s32.totalorder %s30, 1
      %p272 = por %p270, %p271
      %p273 = scmp.ne.s32.totalorder %s262, %s263
      %p274 = scmp.eq.s32.totalorder %s30, 0
      %p275 = por %p273, %p274
      %p276 = scmp.ne.s32.totalorder %s262, %s263
      %p277 = scmp.eq.s32.totalorder %s31, 1
      %p278 = por %p276, %p277
      %p280 = scmp.ne.s32.totalorder %s263, %s279
      %p281 = scmp.eq.s32.totalorder %s31, 0
      %p282 = por %p280, %p281
      %s283 = ssub.s32 %s25, %s32
      %p284 = scmp.eq.s32.totalorder %s283, 0
      %s286 = sadd.s32 %s285, 1
      %s287 = scalar_select %p284, %s285, %s286
      %p290 = pneg %p284
      %p291 = scmp.eq.s32.totalorder %s25, 1
      %p292 = por %p290, %p291
      %p293 = scmp.ne.s32.totalorder %s285, %s288
      %p294 = scmp.eq.s32.totalorder %s25, 0
      %p295 = por %p293, %p294
      %p296 = scmp.ne.s32.totalorder %s285, %s288
      %p297 = scmp.eq.s32.totalorder %s30, 1
      %p298 = por %p296, %p297
      %p299 = scmp.ne.s32.totalorder %s288, %s289
      %p300 = scmp.eq.s32.totalorder %s30, 0
      %p301 = por %p299, %p300
      %p302 = scmp.ne.s32.totalorder %s288, %s289
      %p303 = scmp.eq.s32.totalorder %s31, 1
      %p304 = por %p302, %p303
      %p306 = scmp.ne.s32.totalorder %s289, %s305
      %p307 = scmp.eq.s32.totalorder %s31, 0
      %p308 = por %p306, %p307
      %s309 = ssub.s32 %s25, %s32
      %p310 = scmp.eq.s32.totalorder %s309, 0
      %s312 = sadd.s32 %s311, 1
      %s313 = scalar_select %p310, %s311, %s312
      %p316 = pneg %p310
      %p317 = scmp.eq.s32.totalorder %s25, 1
      %p318 = por %p316, %p317
      %p319 = scmp.ne.s32.totalorder %s311, %s314
      %p320 = scmp.eq.s32.totalorder %s25, 0
      %p321 = por %p319, %p320
      %p322 = scmp.ne.s32.totalorder %s311, %s314
      %p323 = scmp.eq.s32.totalorder %s30, 1
      %p324 = por %p322, %p323
      %p325 = scmp.ne.s32.totalorder %s314, %s315
      %p326 = scmp.eq.s32.totalorder %s30, 0
      %p327 = por %p325, %p326
      %p328 = scmp.ne.s32.totalorder %s314, %s315
      %p329 = scmp.eq.s32.totalorder %s31, 1
      %p330 = por %p328, %p329
      %p332 = scmp.ne.s32.totalorder %s315, %s331
      %p333 = scmp.eq.s32.totalorder %s31, 0
      %p334 = por %p332, %p333
      %s335 = ssub.s32 %s25, %s32
      %p336 = scmp.eq.s32.totalorder %s335, 0
      %s338 = sadd.s32 %s337, 1
      %s339 = scalar_select %p336, %s337, %s338
      %p342 = pneg %p336
      %p343 = scmp.eq.s32.totalorder %s25, 1
      %p344 = por %p342, %p343
      %p345 = scmp.ne.s32.totalorder %s337, %s340
      %p346 = scmp.eq.s32.totalorder %s25, 0
      %p347 = por %p345, %p346
      %p348 = scmp.ne.s32.totalorder %s337, %s340
      %p349 = scmp.eq.s32.totalorder %s30, 1
      %p350 = por %p348, %p349
      %p351 = scmp.ne.s32.totalorder %s340, %s341
      %p352 = scmp.eq.s32.totalorder %s30, 0
      %p353 = por %p351, %p352
      %p354 = scmp.ne.s32.totalorder %s340, %s341
      %p355 = scmp.eq.s32.totalorder %s31, 1
      %p356 = por %p354, %p355
      %p358 = scmp.ne.s32.totalorder %s341, %s357
      %p359 = scmp.eq.s32.totalorder %s31, 0
      %p360 = por %p358, %p359
      %s361 = ssub.s32 %s25, %s32
      %p362 = scmp.eq.s32.totalorder %s361, 0
      %s364 = sadd.s32 %s363, 1
      %s365 = scalar_select %p362, %s363, %s364
      %p368 = pneg %p362
      %p369 = scmp.eq.s32.totalorder %s25, 1
      %p370 = por %p368, %p369
      %p371 = scmp.ne.s32.totalorder %s363, %s366
      %p372 = scmp.eq.s32.totalorder %s25, 0
      %p373 = por %p371, %p372
      %p374 = scmp.ne.s32.totalorder %s363, %s366
      %p375 = scmp.eq.s32.totalorder %s30, 1
      %p376 = por %p374, %p375
      %p377 = scmp.ne.s32.totalorder %s366, %s367
      %p378 = scmp.eq.s32.totalorder %s30, 0
      %p379 = por %p377, %p378
      %p380 = scmp.ne.s32.totalorder %s366, %s367
      %p381 = scmp.eq.s32.totalorder %s31, 1
      %p382 = por %p380, %p381
      %p384 = scmp.ne.s32.totalorder %s367, %s383
      %p385 = scmp.eq.s32.totalorder %s31, 0
      %p386 = por %p384, %p385
      %s388 = sadd.s32 %s387, 1
      %p391 = scmp.eq.s32.totalorder %s25, 1
      %p392 = scmp.ne.s32.totalorder %s387, %s389
      %p393 = scmp.eq.s32.totalorder %s25, 0
      %p394 = por %p392, %p393
      %p395 = scmp.ne.s32.totalorder %s387, %s389
      %p396 = scmp.eq.s32.totalorder %s30, 1
      %p397 = por %p395, %p396
      %p398 = scmp.ne.s32.totalorder %s389, %s390
      %p399 = scmp.eq.s32.totalorder %s30, 0
      %p400 = por %p398, %p399
      %p401 = scmp.ne.s32.totalorder %s389, %s390
      %p402 = scmp.eq.s32.totalorder %s31, 1
      %p403 = por %p401, %p402
      %p405 = scmp.ne.s32.totalorder %s390, %s404
      %p406 = scmp.eq.s32.totalorder %s31, 0
      %p407 = por %p405, %p406
      %s409 = sadd.s32 %s408, 1
      %p412 = scmp.eq.s32.totalorder %s25, 1
      %p413 = scmp.ne.s32.totalorder %s408, %s410
      %p414 = scmp.eq.s32.totalorder %s25, 0
      %p415 = por %p413, %p414
      %p416 = scmp.ne.s32.totalorder %s408, %s410
      %p417 = scmp.eq.s32.totalorder %s30, 1
      %p418 = por %p416, %p417
      %p419 = scmp.ne.s32.totalorder %s410, %s411
      %p420 = scmp.eq.s32.totalorder %s30, 0
      %p421 = por %p419, %p420
      %p422 = scmp.ne.s32.totalorder %s410, %s411
      %p423 = scmp.eq.s32.totalorder %s31, 1
      %p424 = por %p422, %p423
      %p426 = scmp.ne.s32.totalorder %s411, %s425
      %p427 = scmp.eq.s32.totalorder %s31, 0
      %p428 = por %p426, %p427
      %s430 = sadd.s32 %s429, 1
      %p433 = scmp.eq.s32.totalorder %s25, 1
      %p434 = scmp.ne.s32.totalorder %s429, %s431
      %p435 = scmp.eq.s32.totalorder %s25, 0
      %p436 = por %p434, %p435
      %p437 = scmp.ne.s32.totalorder %s429, %s431
      %p438 = scmp.eq.s32.totalorder %s30, 1
      %p439 = por %p437, %p438
      %p440 = scmp.ne.s32.totalorder %s431, %s432
      %p441 = scmp.eq.s32.totalorder %s30, 0
      %p442 = por %p440, %p441
      %p443 = scmp.ne.s32.totalorder %s431, %s432
      %p444 = scmp.eq.s32.totalorder %s31, 1
      %p445 = por %p443, %p444
      %p447 = scmp.ne.s32.totalorder %s432, %s446
      %p448 = scmp.eq.s32.totalorder %s31, 0
      %p449 = por %p447, %p448
      %p450 = scmp.le.s32.totalorder 1, %s25
      %p451 = scmp.lt.s32.totalorder %s25, 3
      %p452 = pnand %p450, %p451
      %p453 = pneg %p452
      // Predicated region
      $region9: #{tpu_custom_call.1} parent=5 // pred_check
        _
      $region10: #{tpu_custom_call.1} parent=5 // pred_check_branch
        %455 = sbr.rel (%p452) target = $region12
      $region11: #{tpu_custom_call.1} parent=5 // pred_region
        %s456 = ssub.s32 %s25, 1
        // Predicated region
        $region13: #{tpu_custom_call.1} parent=11 // pred_check
          %p457 = pneg %p46
        $region14: #{tpu_custom_call.1} parent=11 // pred_check_branch
          %459 = sbr.rel (%p457) target = $region16
        $region15: #{tpu_custom_call.1} parent=11 // pred_region
          %s461 = ssub.s32 256, 256
          %462 = vsyncadd [#allocation4], %s461
          %s463 = sshll.u32 [#allocation3], 4
          %s464 = int_to_ptr.vmem [resolvable:$true] %s463
          %469 = dma.hbm_to_vmem [thread:$0]  %s0, 256, %s464, [#allocation4], 128, 128, 8
        $region16: #{tpu_custom_call.1} parent=11 // pred_fallthru
          _
        // Predicated region
        $region17: #{tpu_custom_call.1} parent=11 // pred_check
          %p470 = pneg %p67
        $region18: #{tpu_custom_call.1} parent=11 // pred_check_branch
          %472 = sbr.rel (%p470) target = $region20
        $region19: #{tpu_custom_call.1} parent=11 // pred_region
          %s474 = ssub.s32 128, 128
          %475 = vsyncadd [#allocation7], %s474
          %s477 = sshll.u32 [#allocation6], 4
          %s478 = int_to_ptr.vmem [resolvable:$true] %s477
          %480 = dma.hbm_to_vmem [thread:$0]  %s1, 128, %s478, [#allocation7]
        $region20: #{tpu_custom_call.1} parent=11 // pred_fallthru
          _
        // Predicated region
        $region21: #{tpu_custom_call.1} parent=11 // pred_check
          %p481 = pneg %p400
        $region22: #{tpu_custom_call.1} parent=11 // pred_check_branch
          %483 = sbr.rel (%p481) target = $region24
        $region23: #{tpu_custom_call.1} parent=11 // pred_region
          _
        $region24: #{tpu_custom_call.1} parent=11 // pred_fallthru
          _
        // Predicated region
        $region25: #{tpu_custom_call.1} parent=11 // pred_check
          %p484 = pneg %p421
        $region26: #{tpu_custom_call.1} parent=11 // pred_check_branch
          %486 = sbr.rel (%p484) target = $region28
        $region27: #{tpu_custom_call.1} parent=11 // pred_region
          _
        $region28: #{tpu_custom_call.1} parent=11 // pred_fallthru
          _
      $region12: #{tpu_custom_call.1} parent=5 // pred_fallthru
        _
      %p487 = scmp.lt.s32.totalorder %s25, 2
      // Predicated region
      $region29: #{tpu_custom_call.1} parent=5 // pred_check
        %p488 = pneg %p487
      $region30: #{tpu_custom_call.1} parent=5 // pred_check_branch
        %490 = sbr.rel (%p488) target = $region32
      $region31: #{tpu_custom_call.1} parent=5 // pred_region
        // Predicated region
        $region33: #{tpu_custom_call.1} parent=31 // pred_check
          %p491 = pneg %p87
        $region34: #{tpu_custom_call.1} parent=31 // pred_check_branch
          %493 = sbr.rel (%p491) target = $region36
        $region35: #{tpu_custom_call.1} parent=31 // pred_region
          %p494 = scmp.lt.s32.totalorder %s25, 1
          %s495 = scalar_select %p494, %s25, 1
          %s496 = smul.addr %s495, 4
          %s497 = smul.addr %s496, 8
          %s498 = scalar_lea.vmem %s2, %s497
        $region36: #{tpu_custom_call.1} parent=31 // pred_fallthru
          _
        // Predicated region
        $region37: #{tpu_custom_call.1} parent=31 // pred_check
          %p499 = pneg %p113
        $region38: #{tpu_custom_call.1} parent=31 // pred_check_branch
          %501 = sbr.rel (%p499) target = $region40
        $region39: #{tpu_custom_call.1} parent=31 // pred_region
          %p502 = scmp.lt.s32.totalorder %s25, 1
          %s503 = scalar_select %p502, %s25, 1
          %s504 = scalar_lea.vmem %s3, %s503
        $region40: #{tpu_custom_call.1} parent=31 // pred_fallthru
          _
        // Predicated region
        $region41: #{tpu_custom_call.1} parent=31 // pred_check
          %p505 = pneg %p139
        $region42: #{tpu_custom_call.1} parent=31 // pred_check_branch
          %507 = sbr.rel (%p505) target = $region44
        $region43: #{tpu_custom_call.1} parent=31 // pred_region
          %p508 = scmp.lt.s32.totalorder %s25, 1
          %s509 = scalar_select %p508, %s25, 1
          %s510 = smul.addr %s509, 4
          %s511 = smul.addr %s510, 8
          %s512 = scalar_lea.vmem %s4, %s511
        $region44: #{tpu_custom_call.1} parent=31 // pred_fallthru
          _
        // Predicated region
        $region45: #{tpu_custom_call.1} parent=31 // pred_check
          %p513 = pneg %p165
        $region46: #{tpu_custom_call.1} parent=31 // pred_check_branch
          %515 = sbr.rel (%p513) target = $region48
        $region47: #{tpu_custom_call.1} parent=31 // pred_region
          %p516 = scmp.lt.s32.totalorder %s25, 1
          %s517 = scalar_select %p516, %s25, 1
          %s518 = scalar_lea.vmem %s5, %s517
        $region48: #{tpu_custom_call.1} parent=31 // pred_fallthru
          _
        // Predicated region
        $region49: #{tpu_custom_call.1} parent=31 // pred_check
          %p519 = pneg %p191
        $region50: #{tpu_custom_call.1} parent=31 // pred_check_branch
          %521 = sbr.rel (%p519) target = $region52
        $region51: #{tpu_custom_call.1} parent=31 // pred_region
          %p522 = scmp.lt.s32.totalorder %s25, 1
          %s523 = scalar_select %p522, %s25, 1
          %s524 = scalar_lea.vmem %s6, %s523
        $region52: #{tpu_custom_call.1} parent=31 // pred_fallthru
          _
        // Predicated region
        $region53: #{tpu_custom_call.1} parent=31 // pred_check
          %p525 = pneg %p217
        $region54: #{tpu_custom_call.1} parent=31 // pred_check_branch
          %527 = sbr.rel (%p525) target = $region56
        $region55: #{tpu_custom_call.1} parent=31 // pred_region
          %p528 = scmp.lt.s32.totalorder %s25, 1
          %s529 = scalar_select %p528, %s25, 1
          %s530 = scalar_lea.vmem %s7, %s529
        $region56: #{tpu_custom_call.1} parent=31 // pred_fallthru
          _
        // Predicated region
        $region57: #{tpu_custom_call.1} parent=31 // pred_check
          %p531 = pneg %p243
        $region58: #{tpu_custom_call.1} parent=31 // pred_check_branch
          %533 = sbr.rel (%p531) target = $region60
        $region59: #{tpu_custom_call.1} parent=31 // pred_region
          %p534 = scmp.lt.s32.totalorder %s25, 1
          %s535 = scalar_select %p534, %s25, 1
          %s536 = smul.addr %s535, 4
          %s537 = smul.addr %s536, 8
          %s538 = scalar_lea.vmem %s8, %s537
        $region60: #{tpu_custom_call.1} parent=31 // pred_fallthru
          _
        // Predicated region
        $region61: #{tpu_custom_call.1} parent=31 // pred_check
          %p539 = pneg %p269
        $region62: #{tpu_custom_call.1} parent=31 // pred_check_branch
          %541 = sbr.rel (%p539) target = $region64
        $region63: #{tpu_custom_call.1} parent=31 // pred_region
          %p542 = scmp.lt.s32.totalorder %s25, 1
          %s543 = scalar_select %p542, %s25, 1
          %s544 = scalar_lea.vmem %s9, %s543
        $region64: #{tpu_custom_call.1} parent=31 // pred_fallthru
          _
        // Predicated region
        $region65: #{tpu_custom_call.1} parent=31 // pred_check
          %p545 = pneg %p295
        $region66: #{tpu_custom_call.1} parent=31 // pred_check_branch
          %547 = sbr.rel (%p545) target = $region68
        $region67: #{tpu_custom_call.1} parent=31 // pred_region
          %p548 = scmp.lt.s32.totalorder %s25, 1
          %s549 = scalar_select %p548, %s25, 1
          %s550 = smul.addr %s549, 8
          %s551 = smul.addr %s550, 8
          %s552 = scalar_lea.vmem %s10, %s551
        $region68: #{tpu_custom_call.1} parent=31 // pred_fallthru
          _
        // Predicated region
        $region69: #{tpu_custom_call.1} parent=31 // pred_check
          %p553 = pneg %p321
        $region70: #{tpu_custom_call.1} parent=31 // pred_check_branch
          %555 = sbr.rel (%p553) target = $region72
        $region71: #{tpu_custom_call.1} parent=31 // pred_region
          %p556 = scmp.lt.s32.totalorder %s25, 1
          %s557 = scalar_select %p556, %s25, 1
          %s558 = scalar_lea.vmem %s11, %s557
        $region72: #{tpu_custom_call.1} parent=31 // pred_fallthru
          _
        // Predicated region
        $region73: #{tpu_custom_call.1} parent=31 // pred_check
          %p559 = pneg %p347
        $region74: #{tpu_custom_call.1} parent=31 // pred_check_branch
          %561 = sbr.rel (%p559) target = $region76
        $region75: #{tpu_custom_call.1} parent=31 // pred_region
          %p562 = scmp.lt.s32.totalorder %s25, 1
          %s563 = scalar_select %p562, %s25, 1
          %s564 = scalar_lea.vmem %s12, %s563
        $region76: #{tpu_custom_call.1} parent=31 // pred_fallthru
          _
        // Predicated region
        $region77: #{tpu_custom_call.1} parent=31 // pred_check
          %p565 = pneg %p373
        $region78: #{tpu_custom_call.1} parent=31 // pred_check_branch
          %567 = sbr.rel (%p565) target = $region80
        $region79: #{tpu_custom_call.1} parent=31 // pred_region
          %p568 = scmp.lt.s32.totalorder %s25, 1
          %s569 = scalar_select %p568, %s25, 1
          %s570 = scalar_lea.vmem %s13, %s569
        $region80: #{tpu_custom_call.1} parent=31 // pred_fallthru
          _
      $region32: #{tpu_custom_call.1} parent=5 // pred_fallthru
        _
      %p571 = scmp.le.s32.totalorder 1, %s25
      %p572 = scmp.lt.s32.totalorder %s25, 3
      %p573 = pnand %p571, %p572
      %p574 = pneg %p573
      // Predicated region
      $region81: #{tpu_custom_call.1} parent=5 // pred_check
        _
      $region82: #{tpu_custom_call.1} parent=5 // pred_check_branch
        %576 = sbr.rel (%p573) target = $region84
      $region83: #{tpu_custom_call.1} parent=5 // pred_region
        %s577 = ssub.s32 %s25, 1
        // Predicated region
        $region85: #{tpu_custom_call.1} parent=83 // pred_check
          %p578 = pneg %p46
        $region86: #{tpu_custom_call.1} parent=83 // pred_check_branch
          %580 = sbr.rel (%p578) target = $region88
        $region87: #{tpu_custom_call.1} parent=83 // pred_region
          %581 = dma.done [#allocation4], 256
        $region88: #{tpu_custom_call.1} parent=83 // pred_fallthru
          _
        // Predicated region
        $region89: #{tpu_custom_call.1} parent=83 // pred_check
          %p582 = pneg %p67
        $region90: #{tpu_custom_call.1} parent=83 // pred_check_branch
          %584 = sbr.rel (%p582) target = $region92
        $region91: #{tpu_custom_call.1} parent=83 // pred_region
          %585 = dma.done [#allocation7], 128
        $region92: #{tpu_custom_call.1} parent=83 // pred_fallthru
          _
        %p586 = pneg %p46
        %p587 = pneg %p43
        %p588 = pneg %p67
        %p589 = pneg %p64
        %p590 = scmp.lt.s32.totalorder %s30, 1
        %s591 = scalar_select %p590, %s30, 1
        %s592 = smul.addr %s591, 4
        %s593 = smul.addr %s592, 8
        %s594 = scalar_lea.vmem %s2, %s593
        %p595 = pneg %p93
        %p596 = pneg %p90
        %p597 = scmp.lt.s32.totalorder %s30, 1
        %s598 = scalar_select %p597, %s30, 1
        %s599 = scalar_lea.vmem %s3, %s598
        %p600 = pneg %p119
        %p601 = pneg %p116
        %p602 = scmp.lt.s32.totalorder %s30, 1
        %s603 = scalar_select %p602, %s30, 1
        %s604 = smul.addr %s603, 4
        %s605 = smul.addr %s604, 8
        %s606 = scalar_lea.vmem %s4, %s605
        %p607 = pneg %p145
        %p608 = pneg %p142
        %p609 = scmp.lt.s32.totalorder %s30, 1
        %s610 = scalar_select %p609, %s30, 1
        %s611 = scalar_lea.vmem %s5, %s610
        %p612 = pneg %p171
        %p613 = pneg %p168
        %p614 = scmp.lt.s32.totalorder %s30, 1
        %s615 = scalar_select %p614, %s30, 1
        %s616 = scalar_lea.vmem %s6, %s615
        %p617 = pneg %p197
        %p618 = pneg %p194
        %p619 = scmp.lt.s32.totalorder %s30, 1
        %s620 = scalar_select %p619, %s30, 1
        %s621 = scalar_lea.vmem %s7, %s620
        %p622 = pneg %p223
        %p623 = pneg %p220
        %p624 = scmp.lt.s32.totalorder %s30, 1
        %s625 = scalar_select %p624, %s30, 1
        %s626 = smul.addr %s625, 4
        %s627 = smul.addr %s626, 8
        %s628 = scalar_lea.vmem %s8, %s627
        %p629 = pneg %p249
        %p630 = pneg %p246
        %p631 = scmp.lt.s32.totalorder %s30, 1
        %s632 = scalar_select %p631, %s30, 1
        %s633 = scalar_lea.vmem %s9, %s632
        %p634 = pneg %p275
        %p635 = pneg %p272
        %p636 = scmp.lt.s32.totalorder %s30, 1
        %s637 = scalar_select %p636, %s30, 1
        %s638 = smul.addr %s637, 8
        %s639 = smul.addr %s638, 8
        %s640 = scalar_lea.vmem %s10, %s639
        %p641 = pneg %p301
        %p642 = pneg %p298
        %p643 = scmp.lt.s32.totalorder %s30, 1
        %s644 = scalar_select %p643, %s30, 1
        %s645 = scalar_lea.vmem %s11, %s644
        %p646 = pneg %p327
        %p647 = pneg %p324
        %p648 = scmp.lt.s32.totalorder %s30, 1
        %s649 = scalar_select %p648, %s30, 1
        %s650 = scalar_lea.vmem %s12, %s649
        %p651 = pneg %p353
        %p652 = pneg %p350
        %p653 = scmp.lt.s32.totalorder %s30, 1
        %s654 = scalar_select %p653, %s30, 1
        %s655 = scalar_lea.vmem %s13, %s654
        %p656 = pneg %p379
        %p657 = pneg %p376
        %p658 = pneg %p400
        %p659 = pneg %p397
        %p660 = pneg %p421
        %p661 = pneg %p418
        %p662 = pneg %p442
        %p663 = pneg %p439
        %p664 = scmp.lt.s32.totalorder %s30, 1
        %s665 = scalar_select %p664, %s30, 1
        %s666 = smul.addr %s665, 4
        %s667 = smul.addr %s666, 8
        %s668 = scalar_lea.vmem %s2, %s667
        %p669 = scmp.lt.s32.totalorder %s30, 1
        %s670 = scalar_select %p669, %s30, 1
        %s671 = scalar_lea.vmem %s3, %s670
        %p672 = scmp.lt.s32.totalorder %s30, 1
        %s673 = scalar_select %p672, %s30, 1
        %s674 = smul.addr %s673, 4
        %s675 = smul.addr %s674, 8
        %s676 = scalar_lea.vmem %s4, %s675
        %p677 = scmp.lt.s32.totalorder %s30, 1
        %s678 = scalar_select %p677, %s30, 1
        %s679 = scalar_lea.vmem %s5, %s678
        %p680 = scmp.lt.s32.totalorder %s30, 1
        %s681 = scalar_select %p680, %s30, 1
        %s682 = scalar_lea.vmem %s6, %s681
        %p683 = scmp.lt.s32.totalorder %s30, 1
        %s684 = scalar_select %p683, %s30, 1
        %s685 = scalar_lea.vmem %s7, %s684
        %p686 = scmp.lt.s32.totalorder %s30, 1
        %s687 = scalar_select %p686, %s30, 1
        %s688 = smul.addr %s687, 4
        %s689 = smul.addr %s688, 8
        %s690 = scalar_lea.vmem %s8, %s689
        %p691 = scmp.lt.s32.totalorder %s30, 1
        %s692 = scalar_select %p691, %s30, 1
        %s693 = scalar_lea.vmem %s9, %s692
        %p694 = scmp.lt.s32.totalorder %s30, 1
        %s695 = scalar_select %p694, %s30, 1
        %s696 = smul.addr %s695, 8
        %s697 = smul.addr %s696, 8
        %s698 = scalar_lea.vmem %s10, %s697
        %p699 = scmp.lt.s32.totalorder %s30, 1
        %s700 = scalar_select %p699, %s30, 1
        %s701 = scalar_lea.vmem %s11, %s700
        %p702 = scmp.lt.s32.totalorder %s30, 1
        %s703 = scalar_select %p702, %s30, 1
        %s704 = scalar_lea.vmem %s12, %s703
        %p705 = scmp.lt.s32.totalorder %s30, 1
        %s706 = scalar_select %p705, %s30, 1
        %s707 = scalar_lea.vmem %s13, %s706
        %p708 = scmp.eq.s32.totalorder %s30, 0
        // Predicated region
        $region93: #{tpu_custom_call.1} parent=83 // pred_check
          %p709 = pneg %p708
        $region94: #{tpu_custom_call.1} parent=83 // pred_check_branch
          %711 = sbr.rel (%p709) target = $region96
        $region95: #{tpu_custom_call.1} parent=83 // pred_region
          %v712 = vld [vmem:[#allocation3] sm:$0xff]
          %v713 = vld [vmem:[#allocation3 + $0x8] sm:$0xff]
          %vm714 = vcmask 261120
          %715 = vst.msk [vmem:[#allocation2] sm:$0xff] %vm714, %v712
          %716 = vst.msk [vmem:[#allocation2 + $0x8] sm:$0xff] %vm714, %v713
        $region96: #{tpu_custom_call.1} parent=83 // pred_fallthru
          _
        %v717 = vld [vmem:[#allocation2] sm:$0xff]
        %v718 = vld [vmem:[#allocation2 + $0x8] sm:$0xff]
        %v719 = vld [vmem:[#allocation6] sm:$0xff]
        %v720 = vld [vmem:[%s668] sm:$0xff]
        %v721 = vld [vmem:[%s668 + $0x8] sm:$0xff]
        %v722 = vld [vmem:[%s668 + $0x10] sm:$0xff]
        %v723 = vld [vmem:[%s668 + $0x18] sm:$0xff]
        %v724 = vld [vmem:[%s671] sm:$0x1]
        %v726 = vlaneseq
        %v727 = vshrl.u32 %v726, 7
        %v728 = vsub.s32 0, %v727
        %v729 = vrot.slane %v724, %v728
        %vm731 = vcmask 261120
        %v733 = vsel %vm731, %v717, 0
        %v736 = vsel %vm731, %v718, 0
        %738 = vmatprep.subr.mxu0 0.0
        %739 = vmatpush1.msra.mxu0 %v720
        %740 = vmatprep.subr.mxu0 0.0
        %741 = vmatpush1.msra.mxu0 %v721
        %742 = vmatprep.subr.mxu0 0.0
        %743 = vmatpush1.msra.mxu0 %v722
        %744 = vmatprep.subr.mxu0 0.0
        %745 = vmatpush1.msra.mxu0 %v723
        %746 = vmatprep.subr.mxu0 0.0
        %747 = vmatpush1.msra.mxu0 0.0
        %748 = vmatprep.subr.mxu0 0.0
        %749 = vmatpush1.msra.mxu0 0.0
        %750 = vmatprep.subr.mxu0 0.0
        %751 = vmatpush1.msra.mxu0 0.0
        %752 = vmatprep.subr.mxu0 0.0
        %753 = vmatpush1.msra.mxu0 0.0
        %754 = vmatprep.subr.mxu0 0.0
        %755 = vmatpush1.msra.mxu0 0.0
        %756 = vmatprep.subr.mxu0 0.0
        %757 = vmatpush1.msra.mxu0 0.0
        %758 = vmatprep.subr.mxu0 0.0
        %759 = vmatpush1.msra.mxu0 0.0
        %760 = vmatprep.subr.mxu0 0.0
        %761 = vmatpush1.msra.mxu0 0.0
        %762 = vmatprep.subr.mxu0 0.0
        %763 = vmatpush1.msra.mxu0 0.0
        %764 = vmatprep.subr.mxu0 0.0
        %765 = vmatpush1.msra.mxu0 0.0
        %766 = vmatprep.subr.mxu0 0.0
        %767 = vmatpush1.msra.mxu0 0.0
        %768 = vmatprep.subr.mxu0 0.0
        %769 = vmatpush1.msra.mxu0 0.0
        %770 = vmatprep.subr.mxu0 0.0
        %771 = vmatpush1.msra.mxu0 0.0
        %772 = vmatprep.subr.mxu0 0.0
        %773 = vmatpush1.msra.mxu0 0.0
        %774 = vmatprep.subr.mxu0 0.0
        %775 = vmatpush1.msra.mxu0 0.0
        %776 = vmatprep.subr.mxu0 0.0
        %777 = vmatpush1.msra.mxu0 0.0
        %778 = vmatprep.subr.mxu0 0.0
        %779 = vmatpush1.msra.mxu0 0.0
        %780 = vmatprep.subr.mxu0 0.0
        %781 = vmatpush1.msra.mxu0 0.0
        %782 = vmatprep.subr.mxu0 0.0
        %783 = vmatpush1.msra.mxu0 0.0
        %784 = vmatprep.subr.mxu0 0.0
        %785 = vmatpush1.msra.mxu0 0.0
        %786 = vmatprep.subr.mxu0 0.0
        %787 = vmatpush1.msra.mxu0 0.0
        %788 = vmatprep.subr.mxu0 0.0
        %789 = vmatpush1.msra.mxu0 0.0
        %790 = vmatprep.subr.mxu0 0.0
        %791 = vmatpush1.msra.mxu0 0.0
        %792 = vmatprep.subr.mxu0 0.0
        %793 = vmatpush1.msra.mxu0 0.0
        %794 = vmatprep.subr.mxu0 0.0
        %795 = vmatpush1.msra.mxu0 0.0
        %796 = vmatprep.subr.mxu0 0.0
        %797 = vmatpush1.msra.mxu0 0.0
        %798 = vmatprep.subr.mxu0 0.0
        %799 = vmatpush1.msra.mxu0 0.0
        %800 = vmatprep.subr.mxu0 0.0
        %801 = vmatpush1.msra.mxu0 0.0
        %802 = vmatprep.mubr.f32.mxu0 0.0
        %803 = vmatmul.mubr.f32.gmra.mrb[0].mxu0 %v733
        %v804 = vpop.f32.mrb[0].mxu0
        %v805 = vadd.f32 %v729, %v804
        %v806 = vpop.f32.mrb[0].mxu0
        %807 = vmatprep.mubr.f32.mxu0 0.0
        %808 = vmatmul.mubr.f32.gmra.mrb[0].mxu0 %v736
        %v809 = vpop.f32.mrb[0].mxu0
        %v810 = vadd.f32 %v729, %v809
        %v811 = vpop.f32.mrb[0].mxu0
        %812 = vdwg.mxu0
        %v813 = vmul.f32 %v805, 0.35355338
        %v814 = vmul.f32 %v810, 0.35355338
        %816 = vrot.lane.b32.xlu0 %v805, 96
        %v817 = vpop.permute.xlu0 %816
        %vm818 = vcmask 64512
        %v820 = vsel %vm818, %v813, 0
        %v822 = vsel %vm818, %v817, 0
        %824 = vmatprep.subr.mxu0 0.0
        %825 = vmatpush1.xpose.msra.mxu0 %v822
        %826 = vmatprep.subr.mxu0 0.0
        %827 = vmatpush1.xpose.msra.mxu0 0.0
        %828 = vmatprep.subr.mxu0 0.0
        %829 = vmatpush1.xpose.msra.mxu0 0.0
        %830 = vmatprep.subr.mxu0 0.0
        %831 = vmatpush1.xpose.msra.mxu0 0.0
        %832 = vmatprep.subr.mxu0 0.0
        %833 = vmatpush1.xpose.msra.mxu0 0.0
        %834 = vmatprep.subr.mxu0 0.0
        %835 = vmatpush1.xpose.msra.mxu0 0.0
        %836 = vmatprep.subr.mxu0 0.0
        %837 = vmatpush1.xpose.msra.mxu0 0.0
        %838 = vmatprep.subr.mxu0 0.0
        %839 = vmatpush1.xpose.msra.mxu0 0.0
        %840 = vmatprep.subr.mxu0 0.0
        %841 = vmatpush1.xpose.msra.mxu0 0.0
        %842 = vmatprep.subr.mxu0 0.0
        %843 = vmatpush1.xpose.msra.mxu0 0.0
        %844 = vmatprep.subr.mxu0 0.0
        %845 = vmatpush1.xpose.msra.mxu0 0.0
        %846 = vmatprep.subr.mxu0 0.0
        %847 = vmatpush1.xpose.msra.mxu0 0.0
        %848 = vmatprep.subr.mxu0 0.0
        %849 = vmatpush1.xpose.msra.mxu0 0.0
        %850 = vmatprep.subr.mxu0 0.0
        %851 = vmatpush1.xpose.msra.mxu0 0.0
        %852 = vmatprep.subr.mxu0 0.0
        %853 = vmatpush1.xpose.msra.mxu0 0.0
        %854 = vmatprep.subr.mxu0 0.0
        %855 = vmatpush1.xpose.msra.mxu0 0.0
        %856 = vmatprep.subr.mxu0 0.0
        %857 = vmatpush1.xpose.msra.mxu0 0.0
        %858 = vmatprep.subr.mxu0 0.0
        %859 = vmatpush1.xpose.msra.mxu0 0.0
        %860 = vmatprep.subr.mxu0 0.0
        %861 = vmatpush1.xpose.msra.mxu0 0.0
        %862 = vmatprep.subr.mxu0 0.0
        %863 = vmatpush1.xpose.msra.mxu0 0.0
        %864 = vmatprep.subr.mxu0 0.0
        %865 = vmatpush1.xpose.msra.mxu0 0.0
        %866 = vmatprep.subr.mxu0 0.0
        %867 = vmatpush1.xpose.msra.mxu0 0.0
        %868 = vmatprep.subr.mxu0 0.0
        %869 = vmatpush1.xpose.msra.mxu0 0.0
        %870 = vmatprep.subr.mxu0 0.0
        %871 = vmatpush1.xpose.msra.mxu0 0.0
        %872 = vmatprep.subr.mxu0 0.0
        %873 = vmatpush1.xpose.msra.mxu0 0.0
        %874 = vmatprep.subr.mxu0 0.0
        %875 = vmatpush1.xpose.msra.mxu0 0.0
        %876 = vmatprep.subr.mxu0 0.0
        %877 = vmatpush1.xpose.msra.mxu0 0.0
        %878 = vmatprep.subr.mxu0 0.0
        %879 = vmatpush1.xpose.msra.mxu0 0.0
        %880 = vmatprep.subr.mxu0 0.0
        %881 = vmatpush1.xpose.msra.mxu0 0.0
        %882 = vmatprep.subr.mxu0 0.0
        %883 = vmatpush1.xpose.msra.mxu0 0.0
        %884 = vmatprep.subr.mxu0 0.0
        %885 = vmatpush1.xpose.msra.mxu0 0.0
        %886 = vmatprep.subr.mxu0 0.0
        %887 = vmatpush1.xpose.msra.mxu0 0.0
        %888 = vmatprep.mubr.f32.mxu0 0.0
        %889 = vmatmul.mubr.f32.gmra.mrb[0].mxu0 %v820
        %v890 = vpop.f32.mrb[0].mxu0
        %v891 = vadd.f32 %v719, %v890
        %v892 = vpop.f32.mrb[0].mxu0
        %893 = vdwg.mxu0
        %895 = vrot.lane.b32.xlu0 %v810, 96
        %v896 = vpop.permute.xlu0 %895
        %v898 = vsel %vm818, %v814, 0
        %v900 = vsel %vm818, %v896, 0
        %902 = vmatprep.subr.mxu0 0.0
        %903 = vmatpush1.xpose.msra.mxu0 %v900
        %904 = vmatprep.subr.mxu0 0.0
        %905 = vmatpush1.xpose.msra.mxu0 0.0
        %906 = vmatprep.subr.mxu0 0.0
        %907 = vmatpush1.xpose.msra.mxu0 0.0
        %908 = vmatprep.subr.mxu0 0.0
        %909 = vmatpush1.xpose.msra.mxu0 0.0
        %910 = vmatprep.subr.mxu0 0.0
        %911 = vmatpush1.xpose.msra.mxu0 0.0
        %912 = vmatprep.subr.mxu0 0.0
        %913 = vmatpush1.xpose.msra.mxu0 0.0
        %914 = vmatprep.subr.mxu0 0.0
        %915 = vmatpush1.xpose.msra.mxu0 0.0
        %916 = vmatprep.subr.mxu0 0.0
        %917 = vmatpush1.xpose.msra.mxu0 0.0
        %918 = vmatprep.subr.mxu0 0.0
        %919 = vmatpush1.xpose.msra.mxu0 0.0
        %920 = vmatprep.subr.mxu0 0.0
        %921 = vmatpush1.xpose.msra.mxu0 0.0
        %922 = vmatprep.subr.mxu0 0.0
        %923 = vmatpush1.xpose.msra.mxu0 0.0
        %924 = vmatprep.subr.mxu0 0.0
        %925 = vmatpush1.xpose.msra.mxu0 0.0
        %926 = vmatprep.subr.mxu0 0.0
        %927 = vmatpush1.xpose.msra.mxu0 0.0
        %928 = vmatprep.subr.mxu0 0.0
        %929 = vmatpush1.xpose.msra.mxu0 0.0
        %930 = vmatprep.subr.mxu0 0.0
        %931 = vmatpush1.xpose.msra.mxu0 0.0
        %932 = vmatprep.subr.mxu0 0.0
        %933 = vmatpush1.xpose.msra.mxu0 0.0
        %934 = vmatprep.subr.mxu0 0.0
        %935 = vmatpush1.xpose.msra.mxu0 0.0
        %936 = vmatprep.subr.mxu0 0.0
        %937 = vmatpush1.xpose.msra.mxu0 0.0
        %938 = vmatprep.subr.mxu0 0.0
        %939 = vmatpush1.xpose.msra.mxu0 0.0
        %940 = vmatprep.subr.mxu0 0.0
        %941 = vmatpush1.xpose.msra.mxu0 0.0
        %942 = vmatprep.subr.mxu0 0.0
        %943 = vmatpush1.xpose.msra.mxu0 0.0
        %944 = vmatprep.subr.mxu0 0.0
        %945 = vmatpush1.xpose.msra.mxu0 0.0
        %946 = vmatprep.subr.mxu0 0.0
        %947 = vmatpush1.xpose.msra.mxu0 0.0
        %948 = vmatprep.subr.mxu0 0.0
        %949 = vmatpush1.xpose.msra.mxu0 0.0
        %950 = vmatprep.subr.mxu0 0.0
        %951 = vmatpush1.xpose.msra.mxu0 0.0
        %952 = vmatprep.subr.mxu0 0.0
        %953 = vmatpush1.xpose.msra.mxu0 0.0
        %954 = vmatprep.subr.mxu0 0.0
        %955 = vmatpush1.xpose.msra.mxu0 0.0
        %956 = vmatprep.subr.mxu0 0.0
        %957 = vmatpush1.xpose.msra.mxu0 0.0
        %958 = vmatprep.subr.mxu0 0.0
        %959 = vmatpush1.xpose.msra.mxu0 0.0
        %960 = vmatprep.subr.mxu0 0.0
        %961 = vmatpush1.xpose.msra.mxu0 0.0
        %962 = vmatprep.subr.mxu0 0.0
        %963 = vmatpush1.xpose.msra.mxu0 0.0
        %964 = vmatprep.subr.mxu0 0.0
        %965 = vmatpush1.xpose.msra.mxu0 0.0
        %966 = vmatprep.mubr.f32.mxu0 0.0
        %967 = vmatmul.mubr.f32.gmra.mrb[0].mxu0 %v898
        %v968 = vpop.f32.mrb[0].mxu0
        %v969 = vadd.f32 %v719, %v968
        %v970 = vpop.f32.mrb[0].mxu0
        %971 = vdwg.mxu0
        %v972 = vsel %vm818, %v891, -inf
        %973 = vmax.xlane.f32.xlu0 %v972
        %v974 = vpop.xlane.xlu0 %973
        %v975 = vsel %vm818, %v969, -inf
        %976 = vmax.xlane.f32.xlu0 %v975
        %v977 = vpop.xlane.xlu0 %976
        %v978 = vsub.f32 %v891, %v974
        %v979 = vsub.f32 %v969, %v977
        %v980 = vmul.f32 %v978, 1.442695
        %v981 = vpow.pop %v980
        %v982 = vmul.f32 %v979, 1.442695
        %v983 = vpow.pop %v982
        %v984 = vsel %vm818, %v981, 0.0
        %985 = vadd.xlane.f32.xlu0 %v984
        %v986 = vpop.xlane.xlu0 %985
        %v987 = vsel %vm818, %v983, 0.0
        %988 = vadd.xlane.f32.xlu0 %v987
        %v989 = vpop.xlane.xlu0 %988
        %v990 = vrcp.pop %v986
        %v991 = vrcp.pop %v989
        %v992 = vmul.f32 %v981, %v990
        %v993 = vmul.f32 %v983, %v991
        %994 = vrot.lane.b32.xlu0 %v805, 64
        %v995 = vpop.permute.xlu0 %994
        %v998 = vsel %vm818, %v992, 0
        %1000 = vmatprep.subr.mxu0 0.0
        %1001 = vmatpush1.msra.mxu0 %v995
        %1002 = vmatprep.subr.mxu0 0.0
        %1003 = vmatpush1.msra.mxu0 0.0
        %1004 = vmatprep.subr.mxu0 0.0
        %1005 = vmatpush1.msra.mxu0 0.0
        %1006 = vmatprep.subr.mxu0 0.0
        %1007 = vmatpush1.msra.mxu0 0.0
        %1008 = vmatprep.subr.mxu0 0.0
        %1009 = vmatpush1.msra.mxu0 0.0
        %1010 = vmatprep.subr.mxu0 0.0
        %1011 = vmatpush1.msra.mxu0 0.0
        %1012 = vmatprep.subr.mxu0 0.0
        %1013 = vmatpush1.msra.mxu0 0.0
        %1014 = vmatprep.subr.mxu0 0.0
        %1015 = vmatpush1.msra.mxu0 0.0
        %1016 = vmatprep.subr.mxu0 0.0
        %1017 = vmatpush1.msra.mxu0 0.0
        %1018 = vmatprep.subr.mxu0 0.0
        %1019 = vmatpush1.msra.mxu0 0.0
        %1020 = vmatprep.subr.mxu0 0.0
        %1021 = vmatpush1.msra.mxu0 0.0
        %1022 = vmatprep.subr.mxu0 0.0
        %1023 = vmatpush1.msra.mxu0 0.0
        %1024 = vmatprep.subr.mxu0 0.0
        %1025 = vmatpush1.msra.mxu0 0.0
        %1026 = vmatprep.subr.mxu0 0.0
        %1027 = vmatpush1.msra.mxu0 0.0
        %1028 = vmatprep.subr.mxu0 0.0
        %1029 = vmatpush1.msra.mxu0 0.0
        %1030 = vmatprep.subr.mxu0 0.0
        %1031 = vmatpush1.msra.mxu0 0.0
        %1032 = vmatprep.subr.mxu0 0.0
        %1033 = vmatpush1.msra.mxu0 0.0
        %1034 = vmatprep.subr.mxu0 0.0
        %1035 = vmatpush1.msra.mxu0 0.0
        %1036 = vmatprep.subr.mxu0 0.0
        %1037 = vmatpush1.msra.mxu0 0.0
        %1038 = vmatprep.subr.mxu0 0.0
        %1039 = vmatpush1.msra.mxu0 0.0
        %1040 = vmatprep.subr.mxu0 0.0
        %1041 = vmatpush1.msra.mxu0 0.0
        %1042 = vmatprep.subr.mxu0 0.0
        %1043 = vmatpush1.msra.mxu0 0.0
        %1044 = vmatprep.subr.mxu0 0.0
        %1045 = vmatpush1.msra.mxu0 0.0
        %1046 = vmatprep.subr.mxu0 0.0
        %1047 = vmatpush1.msra.mxu0 0.0
        %1048 = vmatprep.subr.mxu0 0.0
        %1049 = vmatpush1.msra.mxu0 0.0
        %1050 = vmatprep.subr.mxu0 0.0
        %1051 = vmatpush1.msra.mxu0 0.0
        %1052 = vmatprep.subr.mxu0 0.0
        %1053 = vmatpush1.msra.mxu0 0.0
        %1054 = vmatprep.subr.mxu0 0.0
        %1055 = vmatpush1.msra.mxu0 0.0
        %1056 = vmatprep.subr.mxu0 0.0
        %1057 = vmatpush1.msra.mxu0 0.0
        %1058 = vmatprep.subr.mxu0 0.0
        %1059 = vmatpush1.msra.mxu0 0.0
        %1060 = vmatprep.subr.mxu0 0.0
        %1061 = vmatpush1.msra.mxu0 0.0
        %1062 = vmatprep.subr.mxu0 0.0
        %1063 = vmatpush1.msra.mxu0 0.0
        %1064 = vmatprep.mubr.f32.mxu0 0.0
        %1065 = vmatmul.mubr.f32.gmra.mrb[0].mxu0 %v998
        %v1066 = vpop.f32.mrb[0].mxu0
        %v1067 = vadd.f32 0.0, %v1066
        %v1068 = vpop.f32.mrb[0].mxu0
        %1069 = vdwg.mxu0
        %1070 = vrot.lane.b32.xlu0 %v810, 64
        %v1071 = vpop.permute.xlu0 %1070
        %v1074 = vsel %vm818, %v993, 0
        %1076 = vmatprep.subr.mxu0 0.0
        %1077 = vmatpush1.msra.mxu0 %v1071
        %1078 = vmatprep.subr.mxu0 0.0
        %1079 = vmatpush1.msra.mxu0 0.0
        %1080 = vmatprep.subr.mxu0 0.0
        %1081 = vmatpush1.msra.mxu0 0.0
        %1082 = vmatprep.subr.mxu0 0.0
        %1083 = vmatpush1.msra.mxu0 0.0
        %1084 = vmatprep.subr.mxu0 0.0
        %1085 = vmatpush1.msra.mxu0 0.0
        %1086 = vmatprep.subr.mxu0 0.0
        %1087 = vmatpush1.msra.mxu0 0.0
        %1088 = vmatprep.subr.mxu0 0.0
        %1089 = vmatpush1.msra.mxu0 0.0
        %1090 = vmatprep.subr.mxu0 0.0
        %1091 = vmatpush1.msra.mxu0 0.0
        %1092 = vmatprep.subr.mxu0 0.0
        %1093 = vmatpush1.msra.mxu0 0.0
        %1094 = vmatprep.subr.mxu0 0.0
        %1095 = vmatpush1.msra.mxu0 0.0
        %1096 = vmatprep.subr.mxu0 0.0
        %1097 = vmatpush1.msra.mxu0 0.0
        %1098 = vmatprep.subr.mxu0 0.0
        %1099 = vmatpush1.msra.mxu0 0.0
        %1100 = vmatprep.subr.mxu0 0.0
        %1101 = vmatpush1.msra.mxu0 0.0
        %1102 = vmatprep.subr.mxu0 0.0
        %1103 = vmatpush1.msra.mxu0 0.0
        %1104 = vmatprep.subr.mxu0 0.0
        %1105 = vmatpush1.msra.mxu0 0.0
        %1106 = vmatprep.subr.mxu0 0.0
        %1107 = vmatpush1.msra.mxu0 0.0
        %1108 = vmatprep.subr.mxu0 0.0
        %1109 = vmatpush1.msra.mxu0 0.0
        %1110 = vmatprep.subr.mxu0 0.0
        %1111 = vmatpush1.msra.mxu0 0.0
        %1112 = vmatprep.subr.mxu0 0.0
        %1113 = vmatpush1.msra.mxu0 0.0
        %1114 = vmatprep.subr.mxu0 0.0
        %1115 = vmatpush1.msra.mxu0 0.0
        %1116 = vmatprep.subr.mxu0 0.0
        %1117 = vmatpush1.msra.mxu0 0.0
        %1118 = vmatprep.subr.mxu0 0.0
        %1119 = vmatpush1.msra.mxu0 0.0
        %1120 = vmatprep.subr.mxu0 0.0
        %1121 = vmatpush1.msra.mxu0 0.0
        %1122 = vmatprep.subr.mxu0 0.0
        %1123 = vmatpush1.msra.mxu0 0.0
        %1124 = vmatprep.subr.mxu0 0.0
        %1125 = vmatpush1.msra.mxu0 0.0
        %1126 = vmatprep.subr.mxu0 0.0
        %1127 = vmatpush1.msra.mxu0 0.0
        %1128 = vmatprep.subr.mxu0 0.0
        %1129 = vmatpush1.msra.mxu0 0.0
        %1130 = vmatprep.subr.mxu0 0.0
        %1131 = vmatpush1.msra.mxu0 0.0
        %1132 = vmatprep.subr.mxu0 0.0
        %1133 = vmatpush1.msra.mxu0 0.0
        %1134 = vmatprep.subr.mxu0 0.0
        %1135 = vmatpush1.msra.mxu0 0.0
        %1136 = vmatprep.subr.mxu0 0.0
        %1137 = vmatpush1.msra.mxu0 0.0
        %1138 = vmatprep.subr.mxu0 0.0
        %1139 = vmatpush1.msra.mxu0 0.0
        %1140 = vmatprep.mubr.f32.mxu0 0.0
        %1141 = vmatmul.mubr.f32.gmra.mrb[0].mxu0 %v1074
        %v1142 = vpop.f32.mrb[0].mxu0
        %v1143 = vadd.f32 0.0, %v1142
        %v1144 = vpop.f32.mrb[0].mxu0
        %1145 = vdwg.mxu0
        %v1146 = vld [vmem:[%s676] sm:$0xff]
        %1147 = vrot.lane.b32.xlu0 %v813, 120
        %v1148 = vpop.permute.xlu0 %1147
        %1149 = vrot.lane.b32.xlu0 %v805, 88
        %v1150 = vpop.permute.xlu0 %1149
        %v1151 = vsel %vm818, %v1148, 0
        %v1153 = vsel %vm818, %v1150, 0
        %1155 = vmatprep.subr.mxu0 0.0
        %1156 = vmatpush1.xpose.msra.mxu0 %v1153
        %1157 = vmatprep.subr.mxu0 0.0
        %1158 = vmatpush1.xpose.msra.mxu0 0.0
        %1159 = vmatprep.subr.mxu0 0.0
        %1160 = vmatpush1.xpose.msra.mxu0 0.0
        %1161 = vmatprep.subr.mxu0 0.0
        %1162 = vmatpush1.xpose.msra.mxu0 0.0
        %1163 = vmatprep.subr.mxu0 0.0
        %1164 = vmatpush1.xpose.msra.mxu0 0.0
        %1165 = vmatprep.subr.mxu0 0.0
        %1166 = vmatpush1.xpose.msra.mxu0 0.0
        %1167 = vmatprep.subr.mxu0 0.0
        %1168 = vmatpush1.xpose.msra.mxu0 0.0
        %1169 = vmatprep.subr.mxu0 0.0
        %1170 = vmatpush1.xpose.msra.mxu0 0.0
        %1171 = vmatprep.subr.mxu0 0.0
        %1172 = vmatpush1.xpose.msra.mxu0 0.0
        %1173 = vmatprep.subr.mxu0 0.0
        %1174 = vmatpush1.xpose.msra.mxu0 0.0
        %1175 = vmatprep.subr.mxu0 0.0
        %1176 = vmatpush1.xpose.msra.mxu0 0.0
        %1177 = vmatprep.subr.mxu0 0.0
        %1178 = vmatpush1.xpose.msra.mxu0 0.0
        %1179 = vmatprep.subr.mxu0 0.0
        %1180 = vmatpush1.xpose.msra.mxu0 0.0
        %1181 = vmatprep.subr.mxu0 0.0
        %1182 = vmatpush1.xpose.msra.mxu0 0.0
        %1183 = vmatprep.subr.mxu0 0.0
        %1184 = vmatpush1.xpose.msra.mxu0 0.0
        %1185 = vmatprep.subr.mxu0 0.0
        %1186 = vmatpush1.xpose.msra.mxu0 0.0
        %1187 = vmatprep.subr.mxu0 0.0
        %1188 = vmatpush1.xpose.msra.mxu0 0.0
        %1189 = vmatprep.subr.mxu0 0.0
        %1190 = vmatpush1.xpose.msra.mxu0 0.0
        %1191 = vmatprep.subr.mxu0 0.0
        %1192 = vmatpush1.xpose.msra.mxu0 0.0
        %1193 = vmatprep.subr.mxu0 0.0
        %1194 = vmatpush1.xpose.msra.mxu0 0.0
        %1195 = vmatprep.subr.mxu0 0.0
        %1196 = vmatpush1.xpose.msra.mxu0 0.0
        %1197 = vmatprep.subr.mxu0 0.0
        %1198 = vmatpush1.xpose.msra.mxu0 0.0
        %1199 = vmatprep.subr.mxu0 0.0
        %1200 = vmatpush1.xpose.msra.mxu0 0.0
        %1201 = vmatprep.subr.mxu0 0.0
        %1202 = vmatpush1.xpose.msra.mxu0 0.0
        %1203 = vmatprep.subr.mxu0 0.0
        %1204 = vmatpush1.xpose.msra.mxu0 0.0
        %1205 = vmatprep.subr.mxu0 0.0
        %1206 = vmatpush1.xpose.msra.mxu0 0.0
        %1207 = vmatprep.subr.mxu0 0.0
        %1208 = vmatpush1.xpose.msra.mxu0 0.0
        %1209 = vmatprep.subr.mxu0 0.0
        %1210 = vmatpush1.xpose.msra.mxu0 0.0
        %1211 = vmatprep.subr.mxu0 0.0
        %1212 = vmatpush1.xpose.msra.mxu0 0.0
        %1213 = vmatprep.subr.mxu0 0.0
        %1214 = vmatpush1.xpose.msra.mxu0 0.0
        %1215 = vmatprep.subr.mxu0 0.0
        %1216 = vmatpush1.xpose.msra.mxu0 0.0
        %1217 = vmatprep.subr.mxu0 0.0
        %1218 = vmatpush1.xpose.msra.mxu0 0.0
        %1219 = vmatprep.mubr.f32.mxu0 0.0
        %1220 = vmatmul.mubr.f32.gmra.mrb[0].mxu0 %v1151
        %v1221 = vpop.f32.mrb[0].mxu0
        %v1222 = vadd.f32 %v719, %v1221
        %v1223 = vpop.f32.mrb[0].mxu0
        %1224 = vdwg.mxu0
        %1225 = vrot.lane.b32.xlu0 %v814, 120
        %v1226 = vpop.permute.xlu0 %1225
        %1227 = vrot.lane.b32.xlu0 %v810, 88
        %v1228 = vpop.permute.xlu0 %1227
        %v1229 = vsel %vm818, %v1226, 0
        %v1231 = vsel %vm818, %v1228, 0
        %1233 = vmatprep.subr.mxu0 0.0
        %1234 = vmatpush1.xpose.msra.mxu0 %v1231
        %1235 = vmatprep.subr.mxu0 0.0
        %1236 = vmatpush1.xpose.msra.mxu0 0.0
        %1237 = vmatprep.subr.mxu0 0.0
        %1238 = vmatpush1.xpose.msra.mxu0 0.0
        %1239 = vmatprep.subr.mxu0 0.0
        %1240 = vmatpush1.xpose.msra.mxu0 0.0
        %1241 = vmatprep.subr.mxu0 0.0
        %1242 = vmatpush1.xpose.msra.mxu0 0.0
        %1243 = vmatprep.subr.mxu0 0.0
        %1244 = vmatpush1.xpose.msra.mxu0 0.0
        %1245 = vmatprep.subr.mxu0 0.0
        %1246 = vmatpush1.xpose.msra.mxu0 0.0
        %1247 = vmatprep.subr.mxu0 0.0
        %1248 = vmatpush1.xpose.msra.mxu0 0.0
        %1249 = vmatprep.subr.mxu0 0.0
        %1250 = vmatpush1.xpose.msra.mxu0 0.0
        %1251 = vmatprep.subr.mxu0 0.0
        %1252 = vmatpush1.xpose.msra.mxu0 0.0
        %1253 = vmatprep.subr.mxu0 0.0
        %1254 = vmatpush1.xpose.msra.mxu0 0.0
        %1255 = vmatprep.subr.mxu0 0.0
        %1256 = vmatpush1.xpose.msra.mxu0 0.0
        %1257 = vmatprep.subr.mxu0 0.0
        %1258 = vmatpush1.xpose.msra.mxu0 0.0
        %1259 = vmatprep.subr.mxu0 0.0
        %1260 = vmatpush1.xpose.msra.mxu0 0.0
        %1261 = vmatprep.subr.mxu0 0.0
        %1262 = vmatpush1.xpose.msra.mxu0 0.0
        %1263 = vmatprep.subr.mxu0 0.0
        %1264 = vmatpush1.xpose.msra.mxu0 0.0
        %1265 = vmatprep.subr.mxu0 0.0
        %1266 = vmatpush1.xpose.msra.mxu0 0.0
        %1267 = vmatprep.subr.mxu0 0.0
        %1268 = vmatpush1.xpose.msra.mxu0 0.0
        %1269 = vmatprep.subr.mxu0 0.0
        %1270 = vmatpush1.xpose.msra.mxu0 0.0
        %1271 = vmatprep.subr.mxu0 0.0
        %1272 = vmatpush1.xpose.msra.mxu0 0.0
        %1273 = vmatprep.subr.mxu0 0.0
        %1274 = vmatpush1.xpose.msra.mxu0 0.0
        %1275 = vmatprep.subr.mxu0 0.0
        %1276 = vmatpush1.xpose.msra.mxu0 0.0
        %1277 = vmatprep.subr.mxu0 0.0
        %1278 = vmatpush1.xpose.msra.mxu0 0.0
        %1279 = vmatprep.subr.mxu0 0.0
        %1280 = vmatpush1.xpose.msra.mxu0 0.0
        %1281 = vmatprep.subr.mxu0 0.0
        %1282 = vmatpush1.xpose.msra.mxu0 0.0
        %1283 = vmatprep.subr.mxu0 0.0
        %1284 = vmatpush1.xpose.msra.mxu0 0.0
        %1285 = vmatprep.subr.mxu0 0.0
        %1286 = vmatpush1.xpose.msra.mxu0 0.0
        %1287 = vmatprep.subr.mxu0 0.0
        %1288 = vmatpush1.xpose.msra.mxu0 0.0
        %1289 = vmatprep.subr.mxu0 0.0
        %1290 = vmatpush1.xpose.msra.mxu0 0.0
        %1291 = vmatprep.subr.mxu0 0.0
        %1292 = vmatpush1.xpose.msra.mxu0 0.0
        %1293 = vmatprep.subr.mxu0 0.0
        %1294 = vmatpush1.xpose.msra.mxu0 0.0
        %1295 = vmatprep.subr.mxu0 0.0
        %1296 = vmatpush1.xpose.msra.mxu0 0.0
        %1297 = vmatprep.mubr.f32.mxu0 0.0
        %1298 = vmatmul.mubr.f32.gmra.mrb[0].mxu0 %v1229
        %v1299 = vpop.f32.mrb[0].mxu0
        %v1300 = vadd.f32 %v719, %v1299
        %v1301 = vpop.f32.mrb[0].mxu0
        %1302 = vdwg.mxu0
        %v1303 = vsel %vm818, %v1222, -inf
        %1304 = vmax.xlane.f32.xlu0 %v1303
        %v1305 = vpop.xlane.xlu0 %1304
        %v1306 = vsel %vm818, %v1300, -inf
        %1307 = vmax.xlane.f32.xlu0 %v1306
        %v1308 = vpop.xlane.xlu0 %1307
        %v1309 = vsub.f32 %v1222, %v1305
        %v1310 = vsub.f32 %v1300, %v1308
        %v1311 = vmul.f32 %v1309, 1.442695
        %v1312 = vpow.pop %v1311
        %v1313 = vmul.f32 %v1310, 1.442695
        %v1314 = vpow.pop %v1313
        %v1315 = vsel %vm818, %v1312, 0.0
        %1316 = vadd.xlane.f32.xlu0 %v1315
        %v1317 = vpop.xlane.xlu0 %1316
        %v1318 = vsel %vm818, %v1314, 0.0
        %1319 = vadd.xlane.f32.xlu0 %v1318
        %v1320 = vpop.xlane.xlu0 %1319
        %v1321 = vrcp.pop %v1317
        %v1322 = vrcp.pop %v1320
        %v1323 = vmul.f32 %v1312, %v1321
        %v1324 = vmul.f32 %v1314, %v1322
        %1325 = vrot.lane.b32.xlu0 %v805, 56
        %v1326 = vpop.permute.xlu0 %1325
        %v1329 = vsel %vm818, %v1323, 0
        %1331 = vmatprep.subr.mxu0 0.0
        %1332 = vmatpush1.msra.mxu0 %v1326
        %1333 = vmatprep.subr.mxu0 0.0
        %1334 = vmatpush1.msra.mxu0 0.0
        %1335 = vmatprep.subr.mxu0 0.0
        %1336 = vmatpush1.msra.mxu0 0.0
        %1337 = vmatprep.subr.mxu0 0.0
        %1338 = vmatpush1.msra.mxu0 0.0
        %1339 = vmatprep.subr.mxu0 0.0
        %1340 = vmatpush1.msra.mxu0 0.0
        %1341 = vmatprep.subr.mxu0 0.0
        %1342 = vmatpush1.msra.mxu0 0.0
        %1343 = vmatprep.subr.mxu0 0.0
        %1344 = vmatpush1.msra.mxu0 0.0
        %1345 = vmatprep.subr.mxu0 0.0
        %1346 = vmatpush1.msra.mxu0 0.0
        %1347 = vmatprep.subr.mxu0 0.0
        %1348 = vmatpush1.msra.mxu0 0.0
        %1349 = vmatprep.subr.mxu0 0.0
        %1350 = vmatpush1.msra.mxu0 0.0
        %1351 = vmatprep.subr.mxu0 0.0
        %1352 = vmatpush1.msra.mxu0 0.0
        %1353 = vmatprep.subr.mxu0 0.0
        %1354 = vmatpush1.msra.mxu0 0.0
        %1355 = vmatprep.subr.mxu0 0.0
        %1356 = vmatpush1.msra.mxu0 0.0
        %1357 = vmatprep.subr.mxu0 0.0
        %1358 = vmatpush1.msra.mxu0 0.0
        %1359 = vmatprep.subr.mxu0 0.0
        %1360 = vmatpush1.msra.mxu0 0.0
        %1361 = vmatprep.subr.mxu0 0.0
        %1362 = vmatpush1.msra.mxu0 0.0
        %1363 = vmatprep.subr.mxu0 0.0
        %1364 = vmatpush1.msra.mxu0 0.0
        %1365 = vmatprep.subr.mxu0 0.0
        %1366 = vmatpush1.msra.mxu0 0.0
        %1367 = vmatprep.subr.mxu0 0.0
        %1368 = vmatpush1.msra.mxu0 0.0
        %1369 = vmatprep.subr.mxu0 0.0
        %1370 = vmatpush1.msra.mxu0 0.0
        %1371 = vmatprep.subr.mxu0 0.0
        %1372 = vmatpush1.msra.mxu0 0.0
        %1373 = vmatprep.subr.mxu0 0.0
        %1374 = vmatpush1.msra.mxu0 0.0
        %1375 = vmatprep.subr.mxu0 0.0
        %1376 = vmatpush1.msra.mxu0 0.0
        %1377 = vmatprep.subr.mxu0 0.0
        %1378 = vmatpush1.msra.mxu0 0.0
        %1379 = vmatprep.subr.mxu0 0.0
        %1380 = vmatpush1.msra.mxu0 0.0
        %1381 = vmatprep.subr.mxu0 0.0
        %1382 = vmatpush1.msra.mxu0 0.0
        %1383 = vmatprep.subr.mxu0 0.0
        %1384 = vmatpush1.msra.mxu0 0.0
        %1385 = vmatprep.subr.mxu0 0.0
        %1386 = vmatpush1.msra.mxu0 0.0
        %1387 = vmatprep.subr.mxu0 0.0
        %1388 = vmatpush1.msra.mxu0 0.0
        %1389 = vmatprep.subr.mxu0 0.0
        %1390 = vmatpush1.msra.mxu0 0.0
        %1391 = vmatprep.subr.mxu0 0.0
        %1392 = vmatpush1.msra.mxu0 0.0
        %1393 = vmatprep.subr.mxu0 0.0
        %1394 = vmatpush1.msra.mxu0 0.0
        %1395 = vmatprep.mubr.f32.mxu0 0.0
        %1396 = vmatmul.mubr.f32.gmra.mrb[0].mxu0 %v1329
        %v1397 = vpop.f32.mrb[0].mxu0
        %v1398 = vadd.f32 0.0, %v1397
        %v1399 = vpop.f32.mrb[0].mxu0
        %1400 = vdwg.mxu0
        %1401 = vrot.lane.b32.xlu0 %v810, 56
        %v1402 = vpop.permute.xlu0 %1401
        %v1405 = vsel %vm818, %v1324, 0
        %1407 = vmatprep.subr.mxu0 0.0
        %1408 = vmatpush1.msra.mxu0 %v1402
        %1409 = vmatprep.subr.mxu0 0.0
        %1410 = vmatpush1.msra.mxu0 0.0
        %1411 = vmatprep.subr.mxu0 0.0
        %1412 = vmatpush1.msra.mxu0 0.0
        %1413 = vmatprep.subr.mxu0 0.0
        %1414 = vmatpush1.msra.mxu0 0.0
        %1415 = vmatprep.subr.mxu0 0.0
        %1416 = vmatpush1.msra.mxu0 0.0
        %1417 = vmatprep.subr.mxu0 0.0
        %1418 = vmatpush1.msra.mxu0 0.0
        %1419 = vmatprep.subr.mxu0 0.0
        %1420 = vmatpush1.msra.mxu0 0.0
        %1421 = vmatprep.subr.mxu0 0.0
        %1422 = vmatpush1.msra.mxu0 0.0
        %1423 = vmatprep.subr.mxu0 0.0
        %1424 = vmatpush1.msra.mxu0 0.0
        %1425 = vmatprep.subr.mxu0 0.0
        %1426 = vmatpush1.msra.mxu0 0.0
        %1427 = vmatprep.subr.mxu0 0.0
        %1428 = vmatpush1.msra.mxu0 0.0
        %1429 = vmatprep.subr.mxu0 0.0
        %1430 = vmatpush1.msra.mxu0 0.0
        %1431 = vmatprep.subr.mxu0 0.0
        %1432 = vmatpush1.msra.mxu0 0.0
        %1433 = vmatprep.subr.mxu0 0.0
        %1434 = vmatpush1.msra.mxu0 0.0
        %1435 = vmatprep.subr.mxu0 0.0
        %1436 = vmatpush1.msra.mxu0 0.0
        %1437 = vmatprep.subr.mxu0 0.0
        %1438 = vmatpush1.msra.mxu0 0.0
        %1439 = vmatprep.subr.mxu0 0.0
        %1440 = vmatpush1.msra.mxu0 0.0
        %1441 = vmatprep.subr.mxu0 0.0
        %1442 = vmatpush1.msra.mxu0 0.0
        %1443 = vmatprep.subr.mxu0 0.0
        %1444 = vmatpush1.msra.mxu0 0.0
        %1445 = vmatprep.subr.mxu0 0.0
        %1446 = vmatpush1.msra.mxu0 0.0
        %1447 = vmatprep.subr.mxu0 0.0
        %1448 = vmatpush1.msra.mxu0 0.0
        %1449 = vmatprep.subr.mxu0 0.0
        %1450 = vmatpush1.msra.mxu0 0.0
        %1451 = vmatprep.subr.mxu0 0.0
        %1452 = vmatpush1.msra.mxu0 0.0
        %1453 = vmatprep.subr.mxu0 0.0
        %1454 = vmatpush1.msra.mxu0 0.0
        %1455 = vmatprep.subr.mxu0 0.0
        %1456 = vmatpush1.msra.mxu0 0.0
        %1457 = vmatprep.subr.mxu0 0.0
        %1458 = vmatpush1.msra.mxu0 0.0
        %1459 = vmatprep.subr.mxu0 0.0
        %1460 = vmatpush1.msra.mxu0 0.0
        %1461 = vmatprep.subr.mxu0 0.0
        %1462 = vmatpush1.msra.mxu0 0.0
        %1463 = vmatprep.subr.mxu0 0.0
        %1464 = vmatpush1.msra.mxu0 0.0
        %1465 = vmatprep.subr.mxu0 0.0
        %1466 = vmatpush1.msra.mxu0 0.0
        %1467 = vmatprep.subr.mxu0 0.0
        %1468 = vmatpush1.msra.mxu0 0.0
        %1469 = vmatprep.subr.mxu0 0.0
        %1470 = vmatpush1.msra.mxu0 0.0
        %1471 = vmatprep.mubr.f32.mxu0 0.0
        %1472 = vmatmul.mubr.f32.gmra.mrb[0].mxu0 %v1405
        %v1473 = vpop.f32.mrb[0].mxu0
        %v1474 = vadd.f32 0.0, %v1473
        %v1475 = vpop.f32.mrb[0].mxu0
        %1476 = vdwg.mxu0
        %v1477 = vld [vmem:[%s676 + $0x8] sm:$0xff]
        %v1479 = vsel %vm818, %v1398, 0
        %v1482 = vsel %vm818, %v1474, 0
        %1484 = vmatprep.subr.mxu0 0.0
        %1485 = vmatpush1.msra.mxu0 %v1477
        %1486 = vmatprep.subr.mxu0 0.0
        %1487 = vmatpush1.msra.mxu0 0.0
        %1488 = vmatprep.subr.mxu0 0.0
        %1489 = vmatpush1.msra.mxu0 0.0
        %1490 = vmatprep.subr.mxu0 0.0
        %1491 = vmatpush1.msra.mxu0 0.0
        %1492 = vmatprep.subr.mxu0 0.0
        %1493 = vmatpush1.msra.mxu0 0.0
        %1494 = vmatprep.subr.mxu0 0.0
        %1495 = vmatpush1.msra.mxu0 0.0
        %1496 = vmatprep.subr.mxu0 0.0
        %1497 = vmatpush1.msra.mxu0 0.0
        %1498 = vmatprep.subr.mxu0 0.0
        %1499 = vmatpush1.msra.mxu0 0.0
        %1500 = vmatprep.subr.mxu0 0.0
        %1501 = vmatpush1.msra.mxu0 0.0
        %1502 = vmatprep.subr.mxu0 0.0
        %1503 = vmatpush1.msra.mxu0 0.0
        %1504 = vmatprep.subr.mxu0 0.0
        %1505 = vmatpush1.msra.mxu0 0.0
        %1506 = vmatprep.subr.mxu0 0.0
        %1507 = vmatpush1.msra.mxu0 0.0
        %1508 = vmatprep.subr.mxu0 0.0
        %1509 = vmatpush1.msra.mxu0 0.0
        %1510 = vmatprep.subr.mxu0 0.0
        %1511 = vmatpush1.msra.mxu0 0.0
        %1512 = vmatprep.subr.mxu0 0.0
        %1513 = vmatpush1.msra.mxu0 0.0
        %1514 = vmatprep.subr.mxu0 0.0
        %1515 = vmatpush1.msra.mxu0 0.0
        %1516 = vmatprep.subr.mxu0 0.0
        %1517 = vmatpush1.msra.mxu0 0.0
        %1518 = vmatprep.subr.mxu0 0.0
        %1519 = vmatpush1.msra.mxu0 0.0
        %1520 = vmatprep.subr.mxu0 0.0
        %1521 = vmatpush1.msra.mxu0 0.0
        %1522 = vmatprep.subr.mxu0 0.0
        %1523 = vmatpush1.msra.mxu0 0.0
        %1524 = vmatprep.subr.mxu0 0.0
        %1525 = vmatpush1.msra.mxu0 0.0
        %1526 = vmatprep.subr.mxu0 0.0
        %1527 = vmatpush1.msra.mxu0 0.0
        %1528 = vmatprep.subr.mxu0 0.0
        %1529 = vmatpush1.msra.mxu0 0.0
        %1530 = vmatprep.subr.mxu0 0.0
        %1531 = vmatpush1.msra.mxu0 0.0
        %1532 = vmatprep.subr.mxu0 0.0
        %1533 = vmatpush1.msra.mxu0 0.0
        %1534 = vmatprep.subr.mxu0 0.0
        %1535 = vmatpush1.msra.mxu0 0.0
        %1536 = vmatprep.subr.mxu0 0.0
        %1537 = vmatpush1.msra.mxu0 0.0
        %1538 = vmatprep.subr.mxu0 0.0
        %1539 = vmatpush1.msra.mxu0 0.0
        %1540 = vmatprep.subr.mxu0 0.0
        %1541 = vmatpush1.msra.mxu0 0.0
        %1542 = vmatprep.subr.mxu0 0.0
        %1543 = vmatpush1.msra.mxu0 0.0
        %1544 = vmatprep.subr.mxu0 0.0
        %1545 = vmatpush1.msra.mxu0 0.0
        %1546 = vmatprep.subr.mxu0 0.0
        %1547 = vmatpush1.msra.mxu0 0.0
        %1548 = vmatprep.mubr.f32.mxu0 0.0
        %1549 = vmatmul.mubr.f32.gmra.mrb[0].mxu0 %v1479
        %v1550 = vpop.f32.mrb[0].mxu0
        %v1551 = vadd.f32 0.0, %v1550
        %v1552 = vpop.f32.mrb[0].mxu0
        %1553 = vmatprep.mubr.f32.mxu0 0.0
        %1554 = vmatmul.mubr.f32.gmra.mrb[0].mxu0 %v1482
        %v1555 = vpop.f32.mrb[0].mxu0
        %v1556 = vadd.f32 0.0, %v1555
        %v1557 = vpop.f32.mrb[0].mxu0
        %1558 = vdwg.mxu0
        %v1560 = vsel %vm818, %v1067, 0
        %v1563 = vsel %vm818, %v1143, 0
        %1565 = vmatprep.subr.mxu0 0.0
        %1566 = vmatpush1.msra.mxu0 %v1146
        %1567 = vmatprep.subr.mxu0 0.0
        %1568 = vmatpush1.msra.mxu0 0.0
        %1569 = vmatprep.subr.mxu0 0.0
        %1570 = vmatpush1.msra.mxu0 0.0
        %1571 = vmatprep.subr.mxu0 0.0
        %1572 = vmatpush1.msra.mxu0 0.0
        %1573 = vmatprep.subr.mxu0 0.0
        %1574 = vmatpush1.msra.mxu0 0.0
        %1575 = vmatprep.subr.mxu0 0.0
        %1576 = vmatpush1.msra.mxu0 0.0
        %1577 = vmatprep.subr.mxu0 0.0
        %1578 = vmatpush1.msra.mxu0 0.0
        %1579 = vmatprep.subr.mxu0 0.0
        %1580 = vmatpush1.msra.mxu0 0.0
        %1581 = vmatprep.subr.mxu0 0.0
        %1582 = vmatpush1.msra.mxu0 0.0
        %1583 = vmatprep.subr.mxu0 0.0
        %1584 = vmatpush1.msra.mxu0 0.0
        %1585 = vmatprep.subr.mxu0 0.0
        %1586 = vmatpush1.msra.mxu0 0.0
        %1587 = vmatprep.subr.mxu0 0.0
        %1588 = vmatpush1.msra.mxu0 0.0
        %1589 = vmatprep.subr.mxu0 0.0
        %1590 = vmatpush1.msra.mxu0 0.0
        %1591 = vmatprep.subr.mxu0 0.0
        %1592 = vmatpush1.msra.mxu0 0.0
        %1593 = vmatprep.subr.mxu0 0.0
        %1594 = vmatpush1.msra.mxu0 0.0
        %1595 = vmatprep.subr.mxu0 0.0
        %1596 = vmatpush1.msra.mxu0 0.0
        %1597 = vmatprep.subr.mxu0 0.0
        %1598 = vmatpush1.msra.mxu0 0.0
        %1599 = vmatprep.subr.mxu0 0.0
        %1600 = vmatpush1.msra.mxu0 0.0
        %1601 = vmatprep.subr.mxu0 0.0
        %1602 = vmatpush1.msra.mxu0 0.0
        %1603 = vmatprep.subr.mxu0 0.0
        %1604 = vmatpush1.msra.mxu0 0.0
        %1605 = vmatprep.subr.mxu0 0.0
        %1606 = vmatpush1.msra.mxu0 0.0
        %1607 = vmatprep.subr.mxu0 0.0
        %1608 = vmatpush1.msra.mxu0 0.0
        %1609 = vmatprep.subr.mxu0 0.0
        %1610 = vmatpush1.msra.mxu0 0.0
        %1611 = vmatprep.subr.mxu0 0.0
        %1612 = vmatpush1.msra.mxu0 0.0
        %1613 = vmatprep.subr.mxu0 0.0
        %1614 = vmatpush1.msra.mxu0 0.0
        %1615 = vmatprep.subr.mxu0 0.0
        %1616 = vmatpush1.msra.mxu0 0.0
        %1617 = vmatprep.subr.mxu0 0.0
        %1618 = vmatpush1.msra.mxu0 0.0
        %1619 = vmatprep.subr.mxu0 0.0
        %1620 = vmatpush1.msra.mxu0 0.0
        %1621 = vmatprep.subr.mxu0 0.0
        %1622 = vmatpush1.msra.mxu0 0.0
        %1623 = vmatprep.subr.mxu0 0.0
        %1624 = vmatpush1.msra.mxu0 0.0
        %1625 = vmatprep.subr.mxu0 0.0
        %1626 = vmatpush1.msra.mxu0 0.0
        %1627 = vmatprep.subr.mxu0 0.0
        %1628 = vmatpush1.msra.mxu0 0.0
        %1629 = vmatprep.mubr.f32.mxu0 0.0
        %1630 = vmatmul.mubr.f32.gmra.mrb[0].mxu0 %v1560
        %v1631 = vpop.f32.mrb[0].mxu0
        %v1632 = vadd.f32 %v1551, %v1631
        %v1633 = vpop.f32.mrb[0].mxu0
        %1634 = vmatprep.mubr.f32.mxu0 0.0
        %1635 = vmatmul.mubr.f32.gmra.mrb[0].mxu0 %v1563
        %v1636 = vpop.f32.mrb[0].mxu0
        %v1637 = vadd.f32 %v1556, %v1636
        %v1638 = vpop.f32.mrb[0].mxu0
        %1639 = vdwg.mxu0
        %1640 = vrot.lane.b32.xlu0 %v813, 112
        %v1641 = vpop.permute.xlu0 %1640
        %1642 = vrot.lane.b32.xlu0 %v805, 80
        %v1643 = vpop.permute.xlu0 %1642
        %v1644 = vsel %vm818, %v1641, 0
        %v1646 = vsel %vm818, %v1643, 0
        %1648 = vmatprep.subr.mxu0 0.0
        %1649 = vmatpush1.xpose.msra.mxu0 %v1646
        %1650 = vmatprep.subr.mxu0 0.0
        %1651 = vmatpush1.xpose.msra.mxu0 0.0
        %1652 = vmatprep.subr.mxu0 0.0
        %1653 = vmatpush1.xpose.msra.mxu0 0.0
        %1654 = vmatprep.subr.mxu0 0.0
        %1655 = vmatpush1.xpose.msra.mxu0 0.0
        %1656 = vmatprep.subr.mxu0 0.0
        %1657 = vmatpush1.xpose.msra.mxu0 0.0
        %1658 = vmatprep.subr.mxu0 0.0
        %1659 = vmatpush1.xpose.msra.mxu0 0.0
        %1660 = vmatprep.subr.mxu0 0.0
        %1661 = vmatpush1.xpose.msra.mxu0 0.0
        %1662 = vmatprep.subr.mxu0 0.0
        %1663 = vmatpush1.xpose.msra.mxu0 0.0
        %1664 = vmatprep.subr.mxu0 0.0
        %1665 = vmatpush1.xpose.msra.mxu0 0.0
        %1666 = vmatprep.subr.mxu0 0.0
        %1667 = vmatpush1.xpose.msra.mxu0 0.0
        %1668 = vmatprep.subr.mxu0 0.0
        %1669 = vmatpush1.xpose.msra.mxu0 0.0
        %1670 = vmatprep.subr.mxu0 0.0
        %1671 = vmatpush1.xpose.msra.mxu0 0.0
        %1672 = vmatprep.subr.mxu0 0.0
        %1673 = vmatpush1.xpose.msra.mxu0 0.0
        %1674 = vmatprep.subr.mxu0 0.0
        %1675 = vmatpush1.xpose.msra.mxu0 0.0
        %1676 = vmatprep.subr.mxu0 0.0
        %1677 = vmatpush1.xpose.msra.mxu0 0.0
        %1678 = vmatprep.subr.mxu0 0.0
        %1679 = vmatpush1.xpose.msra.mxu0 0.0
        %1680 = vmatprep.subr.mxu0 0.0
        %1681 = vmatpush1.xpose.msra.mxu0 0.0
        %1682 = vmatprep.subr.mxu0 0.0
        %1683 = vmatpush1.xpose.msra.mxu0 0.0
        %1684 = vmatprep.subr.mxu0 0.0
        %1685 = vmatpush1.xpose.msra.mxu0 0.0
        %1686 = vmatprep.subr.mxu0 0.0
        %1687 = vmatpush1.xpose.msra.mxu0 0.0
        %1688 = vmatprep.subr.mxu0 0.0
        %1689 = vmatpush1.xpose.msra.mxu0 0.0
        %1690 = vmatprep.subr.mxu0 0.0
        %1691 = vmatpush1.xpose.msra.mxu0 0.0
        %1692 = vmatprep.subr.mxu0 0.0
        %1693 = vmatpush1.xpose.msra.mxu0 0.0
        %1694 = vmatprep.subr.mxu0 0.0
        %1695 = vmatpush1.xpose.msra.mxu0 0.0
        %1696 = vmatprep.subr.mxu0 0.0
        %1697 = vmatpush1.xpose.msra.mxu0 0.0
        %1698 = vmatprep.subr.mxu0 0.0
        %1699 = vmatpush1.xpose.msra.mxu0 0.0
        %1700 = vmatprep.subr.mxu0 0.0
        %1701 = vmatpush1.xpose.msra.mxu0 0.0
        %1702 = vmatprep.subr.mxu0 0.0
        %1703 = vmatpush1.xpose.msra.mxu0 0.0
        %1704 = vmatprep.subr.mxu0 0.0
        %1705 = vmatpush1.xpose.msra.mxu0 0.0
        %1706 = vmatprep.subr.mxu0 0.0
        %1707 = vmatpush1.xpose.msra.mxu0 0.0
        %1708 = vmatprep.subr.mxu0 0.0
        %1709 = vmatpush1.xpose.msra.mxu0 0.0
        %1710 = vmatprep.subr.mxu0 0.0
        %1711 = vmatpush1.xpose.msra.mxu0 0.0
        %1712 = vmatprep.mubr.f32.mxu0 0.0
        %1713 = vmatmul.mubr.f32.gmra.mrb[0].mxu0 %v1644
        %v1714 = vpop.f32.mrb[0].mxu0
        %v1715 = vadd.f32 %v719, %v1714
        %v1716 = vpop.f32.mrb[0].mxu0
        %1717 = vdwg.mxu0
        %1718 = vrot.lane.b32.xlu0 %v814, 112
        %v1719 = vpop.permute.xlu0 %1718
        %1720 = vrot.lane.b32.xlu0 %v810, 80
        %v1721 = vpop.permute.xlu0 %1720
        %v1722 = vsel %vm818, %v1719, 0
        %v1724 = vsel %vm818, %v1721, 0
        %1726 = vmatprep.subr.mxu0 0.0
        %1727 = vmatpush1.xpose.msra.mxu0 %v1724
        %1728 = vmatprep.subr.mxu0 0.0
        %1729 = vmatpush1.xpose.msra.mxu0 0.0
        %1730 = vmatprep.subr.mxu0 0.0
        %1731 = vmatpush1.xpose.msra.mxu0 0.0
        %1732 = vmatprep.subr.mxu0 0.0
        %1733 = vmatpush1.xpose.msra.mxu0 0.0
        %1734 = vmatprep.subr.mxu0 0.0
        %1735 = vmatpush1.xpose.msra.mxu0 0.0
        %1736 = vmatprep.subr.mxu0 0.0
        %1737 = vmatpush1.xpose.msra.mxu0 0.0
        %1738 = vmatprep.subr.mxu0 0.0
        %1739 = vmatpush1.xpose.msra.mxu0 0.0
        %1740 = vmatprep.subr.mxu0 0.0
        %1741 = vmatpush1.xpose.msra.mxu0 0.0
        %1742 = vmatprep.subr.mxu0 0.0
        %1743 = vmatpush1.xpose.msra.mxu0 0.0
        %1744 = vmatprep.subr.mxu0 0.0
        %1745 = vmatpush1.xpose.msra.mxu0 0.0
        %1746 = vmatprep.subr.mxu0 0.0
        %1747 = vmatpush1.xpose.msra.mxu0 0.0
        %1748 = vmatprep.subr.mxu0 0.0
        %1749 = vmatpush1.xpose.msra.mxu0 0.0
        %1750 = vmatprep.subr.mxu0 0.0
        %1751 = vmatpush1.xpose.msra.mxu0 0.0
        %1752 = vmatprep.subr.mxu0 0.0
        %1753 = vmatpush1.xpose.msra.mxu0 0.0
        %1754 = vmatprep.subr.mxu0 0.0
        %1755 = vmatpush1.xpose.msra.mxu0 0.0
        %1756 = vmatprep.subr.mxu0 0.0
        %1757 = vmatpush1.xpose.msra.mxu0 0.0
        %1758 = vmatprep.subr.mxu0 0.0
        %1759 = vmatpush1.xpose.msra.mxu0 0.0
        %1760 = vmatprep.subr.mxu0 0.0
        %1761 = vmatpush1.xpose.msra.mxu0 0.0
        %1762 = vmatprep.subr.mxu0 0.0
        %1763 = vmatpush1.xpose.msra.mxu0 0.0
        %1764 = vmatprep.subr.mxu0 0.0
        %1765 = vmatpush1.xpose.msra.mxu0 0.0
        %1766 = vmatprep.subr.mxu0 0.0
        %1767 = vmatpush1.xpose.msra.mxu0 0.0
        %1768 = vmatprep.subr.mxu0 0.0
        %1769 = vmatpush1.xpose.msra.mxu0 0.0
        %1770 = vmatprep.subr.mxu0 0.0
        %1771 = vmatpush1.xpose.msra.mxu0 0.0
        %1772 = vmatprep.subr.mxu0 0.0
        %1773 = vmatpush1.xpose.msra.mxu0 0.0
        %1774 = vmatprep.subr.mxu0 0.0
        %1775 = vmatpush1.xpose.msra.mxu0 0.0
        %1776 = vmatprep.subr.mxu0 0.0
        %1777 = vmatpush1.xpose.msra.mxu0 0.0
        %1778 = vmatprep.subr.mxu0 0.0
        %1779 = vmatpush1.xpose.msra.mxu0 0.0
        %1780 = vmatprep.subr.mxu0 0.0
        %1781 = vmatpush1.xpose.msra.mxu0 0.0
        %1782 = vmatprep.subr.mxu0 0.0
        %1783 = vmatpush1.xpose.msra.mxu0 0.0
        %1784 = vmatprep.subr.mxu0 0.0
        %1785 = vmatpush1.xpose.msra.mxu0 0.0
        %1786 = vmatprep.subr.mxu0 0.0
        %1787 = vmatpush1.xpose.msra.mxu0 0.0
        %1788 = vmatprep.subr.mxu0 0.0
        %1789 = vmatpush1.xpose.msra.mxu0 0.0
        %1790 = vmatprep.mubr.f32.mxu0 0.0
        %1791 = vmatmul.mubr.f32.gmra.mrb[0].mxu0 %v1722
        %v1792 = vpop.f32.mrb[0].mxu0
        %v1793 = vadd.f32 %v719, %v1792
        %v1794 = vpop.f32.mrb[0].mxu0
        %1795 = vdwg.mxu0
        %v1796 = vsel %vm818, %v1715, -inf
        %1797 = vmax.xlane.f32.xlu0 %v1796
        %v1798 = vpop.xlane.xlu0 %1797
        %v1799 = vsel %vm818, %v1793, -inf
        %1800 = vmax.xlane.f32.xlu0 %v1799
        %v1801 = vpop.xlane.xlu0 %1800
        %v1802 = vsub.f32 %v1715, %v1798
        %v1803 = vsub.f32 %v1793, %v1801
        %v1804 = vmul.f32 %v1802, 1.442695
        %v1805 = vpow.pop %v1804
        %v1806 = vmul.f32 %v1803, 1.442695
        %v1807 = vpow.pop %v1806
        %v1808 = vsel %vm818, %v1805, 0.0
        %1809 = vadd.xlane.f32.xlu0 %v1808
        %v1810 = vpop.xlane.xlu0 %1809
        %v1811 = vsel %vm818, %v1807, 0.0
        %1812 = vadd.xlane.f32.xlu0 %v1811
        %v1813 = vpop.xlane.xlu0 %1812
        %v1814 = vrcp.pop %v1810
        %v1815 = vrcp.pop %v1813
        %v1816 = vmul.f32 %v1805, %v1814
        %v1817 = vmul.f32 %v1807, %v1815
        %1818 = vrot.lane.b32.xlu0 %v805, 48
        %v1819 = vpop.permute.xlu0 %1818
        %v1822 = vsel %vm818, %v1816, 0
        %1824 = vmatprep.subr.mxu0 0.0
        %1825 = vmatpush1.msra.mxu0 %v1819
        %1826 = vmatprep.subr.mxu0 0.0
        %1827 = vmatpush1.msra.mxu0 0.0
        %1828 = vmatprep.subr.mxu0 0.0
        %1829 = vmatpush1.msra.mxu0 0.0
        %1830 = vmatprep.subr.mxu0 0.0
        %1831 = vmatpush1.msra.mxu0 0.0
        %1832 = vmatprep.subr.mxu0 0.0
        %1833 = vmatpush1.msra.mxu0 0.0
        %1834 = vmatprep.subr.mxu0 0.0
        %1835 = vmatpush1.msra.mxu0 0.0
        %1836 = vmatprep.subr.mxu0 0.0
        %1837 = vmatpush1.msra.mxu0 0.0
        %1838 = vmatprep.subr.mxu0 0.0
        %1839 = vmatpush1.msra.mxu0 0.0
        %1840 = vmatprep.subr.mxu0 0.0
        %1841 = vmatpush1.msra.mxu0 0.0
        %1842 = vmatprep.subr.mxu0 0.0
        %1843 = vmatpush1.msra.mxu0 0.0
        %1844 = vmatprep.subr.mxu0 0.0
        %1845 = vmatpush1.msra.mxu0 0.0
        %1846 = vmatprep.subr.mxu0 0.0
        %1847 = vmatpush1.msra.mxu0 0.0
        %1848 = vmatprep.subr.mxu0 0.0
        %1849 = vmatpush1.msra.mxu0 0.0
        %1850 = vmatprep.subr.mxu0 0.0
        %1851 = vmatpush1.msra.mxu0 0.0
        %1852 = vmatprep.subr.mxu0 0.0
        %1853 = vmatpush1.msra.mxu0 0.0
        %1854 = vmatprep.subr.mxu0 0.0
        %1855 = vmatpush1.msra.mxu0 0.0
        %1856 = vmatprep.subr.mxu0 0.0
        %1857 = vmatpush1.msra.mxu0 0.0
        %1858 = vmatprep.subr.mxu0 0.0
        %1859 = vmatpush1.msra.mxu0 0.0
        %1860 = vmatprep.subr.mxu0 0.0
        %1861 = vmatpush1.msra.mxu0 0.0
        %1862 = vmatprep.subr.mxu0 0.0
        %1863 = vmatpush1.msra.mxu0 0.0
        %1864 = vmatprep.subr.mxu0 0.0
        %1865 = vmatpush1.msra.mxu0 0.0
        %1866 = vmatprep.subr.mxu0 0.0
        %1867 = vmatpush1.msra.mxu0 0.0
        %1868 = vmatprep.subr.mxu0 0.0
        %1869 = vmatpush1.msra.mxu0 0.0
        %1870 = vmatprep.subr.mxu0 0.0
        %1871 = vmatpush1.msra.mxu0 0.0
        %1872 = vmatprep.subr.mxu0 0.0
        %1873 = vmatpush1.msra.mxu0 0.0
        %1874 = vmatprep.subr.mxu0 0.0
        %1875 = vmatpush1.msra.mxu0 0.0
        %1876 = vmatprep.subr.mxu0 0.0
        %1877 = vmatpush1.msra.mxu0 0.0
        %1878 = vmatprep.subr.mxu0 0.0
        %1879 = vmatpush1.msra.mxu0 0.0
        %1880 = vmatprep.subr.mxu0 0.0
        %1881 = vmatpush1.msra.mxu0 0.0
        %1882 = vmatprep.subr.mxu0 0.0
        %1883 = vmatpush1.msra.mxu0 0.0
        %1884 = vmatprep.subr.mxu0 0.0
        %1885 = vmatpush1.msra.mxu0 0.0
        %1886 = vmatprep.subr.mxu0 0.0
        %1887 = vmatpush1.msra.mxu0 0.0
        %1888 = vmatprep.mubr.f32.mxu0 0.0
        %1889 = vmatmul.mubr.f32.gmra.mrb[0].mxu0 %v1822
        %v1890 = vpop.f32.mrb[0].mxu0
        %v1891 = vadd.f32 0.0, %v1890
        %v1892 = vpop.f32.mrb[0].mxu0
        %1893 = vdwg.mxu0
        %1894 = vrot.lane.b32.xlu0 %v810, 48
        %v1895 = vpop.permute.xlu0 %1894
        %v1898 = vsel %vm818, %v1817, 0
        %1900 = vmatprep.subr.mxu0 0.0
        %1901 = vmatpush1.msra.mxu0 %v1895
        %1902 = vmatprep.subr.mxu0 0.0
        %1903 = vmatpush1.msra.mxu0 0.0
        %1904 = vmatprep.subr.mxu0 0.0
        %1905 = vmatpush1.msra.mxu0 0.0
        %1906 = vmatprep.subr.mxu0 0.0
        %1907 = vmatpush1.msra.mxu0 0.0
        %1908 = vmatprep.subr.mxu0 0.0
        %1909 = vmatpush1.msra.mxu0 0.0
        %1910 = vmatprep.subr.mxu0 0.0
        %1911 = vmatpush1.msra.mxu0 0.0
        %1912 = vmatprep.subr.mxu0 0.0
        %1913 = vmatpush1.msra.mxu0 0.0
        %1914 = vmatprep.subr.mxu0 0.0
        %1915 = vmatpush1.msra.mxu0 0.0
        %1916 = vmatprep.subr.mxu0 0.0
        %1917 = vmatpush1.msra.mxu0 0.0
        %1918 = vmatprep.subr.mxu0 0.0
        %1919 = vmatpush1.msra.mxu0 0.0
        %1920 = vmatprep.subr.mxu0 0.0
        %1921 = vmatpush1.msra.mxu0 0.0
        %1922 = vmatprep.subr.mxu0 0.0
        %1923 = vmatpush1.msra.mxu0 0.0
        %1924 = vmatprep.subr.mxu0 0.0
        %1925 = vmatpush1.msra.mxu0 0.0
        %1926 = vmatprep.subr.mxu0 0.0
        %1927 = vmatpush1.msra.mxu0 0.0
        %1928 = vmatprep.subr.mxu0 0.0
        %1929 = vmatpush1.msra.mxu0 0.0
        %1930 = vmatprep.subr.mxu0 0.0
        %1931 = vmatpush1.msra.mxu0 0.0
        %1932 = vmatprep.subr.mxu0 0.0
        %1933 = vmatpush1.msra.mxu0 0.0
        %1934 = vmatprep.subr.mxu0 0.0
        %1935 = vmatpush1.msra.mxu0 0.0
        %1936 = vmatprep.subr.mxu0 0.0
        %1937 = vmatpush1.msra.mxu0 0.0
        %1938 = vmatprep.subr.mxu0 0.0
        %1939 = vmatpush1.msra.mxu0 0.0
        %1940 = vmatprep.subr.mxu0 0.0
        %1941 = vmatpush1.msra.mxu0 0.0
        %1942 = vmatprep.subr.mxu0 0.0
        %1943 = vmatpush1.msra.mxu0 0.0
        %1944 = vmatprep.subr.mxu0 0.0
        %1945 = vmatpush1.msra.mxu0 0.0
        %1946 = vmatprep.subr.mxu0 0.0
        %1947 = vmatpush1.msra.mxu0 0.0
        %1948 = vmatprep.subr.mxu0 0.0
        %1949 = vmatpush1.msra.mxu0 0.0
        %1950 = vmatprep.subr.mxu0 0.0
        %1951 = vmatpush1.msra.mxu0 0.0
        %1952 = vmatprep.subr.mxu0 0.0
        %1953 = vmatpush1.msra.mxu0 0.0
        %1954 = vmatprep.subr.mxu0 0.0
        %1955 = vmatpush1.msra.mxu0 0.0
        %1956 = vmatprep.subr.mxu0 0.0
        %1957 = vmatpush1.msra.mxu0 0.0
        %1958 = vmatprep.subr.mxu0 0.0
        %1959 = vmatpush1.msra.mxu0 0.0
        %1960 = vmatprep.subr.mxu0 0.0
        %1961 = vmatpush1.msra.mxu0 0.0
        %1962 = vmatprep.subr.mxu0 0.0
        %1963 = vmatpush1.msra.mxu0 0.0
        %1964 = vmatprep.mubr.f32.mxu0 0.0
        %1965 = vmatmul.mubr.f32.gmra.mrb[0].mxu0 %v1898
        %v1966 = vpop.f32.mrb[0].mxu0
        %v1967 = vadd.f32 0.0, %v1966
        %v1968 = vpop.f32.mrb[0].mxu0
        %1969 = vdwg.mxu0
        %v1970 = vld [vmem:[%s676 + $0x10] sm:$0xff]
        %v1972 = vsel %vm818, %v1891, 0
        %v1975 = vsel %vm818, %v1967, 0
        %1977 = vmatprep.subr.mxu0 0.0
        %1978 = vmatpush1.msra.mxu0 %v1970
        %1979 = vmatprep.subr.mxu0 0.0
        %1980 = vmatpush1.msra.mxu0 0.0
        %1981 = vmatprep.subr.mxu0 0.0
        %1982 = vmatpush1.msra.mxu0 0.0
        %1983 = vmatprep.subr.mxu0 0.0
        %1984 = vmatpush1.msra.mxu0 0.0
        %1985 = vmatprep.subr.mxu0 0.0
        %1986 = vmatpush1.msra.mxu0 0.0
        %1987 = vmatprep.subr.mxu0 0.0
        %1988 = vmatpush1.msra.mxu0 0.0
        %1989 = vmatprep.subr.mxu0 0.0
        %1990 = vmatpush1.msra.mxu0 0.0
        %1991 = vmatprep.subr.mxu0 0.0
        %1992 = vmatpush1.msra.mxu0 0.0
        %1993 = vmatprep.subr.mxu0 0.0
        %1994 = vmatpush1.msra.mxu0 0.0
        %1995 = vmatprep.subr.mxu0 0.0
        %1996 = vmatpush1.msra.mxu0 0.0
        %1997 = vmatprep.subr.mxu0 0.0
        %1998 = vmatpush1.msra.mxu0 0.0
        %1999 = vmatprep.subr.mxu0 0.0
        %2000 = vmatpush1.msra.mxu0 0.0
        %2001 = vmatprep.subr.mxu0 0.0
        %2002 = vmatpush1.msra.mxu0 0.0
        %2003 = vmatprep.subr.mxu0 0.0
        %2004 = vmatpush1.msra.mxu0 0.0
        %2005 = vmatprep.subr.mxu0 0.0
        %2006 = vmatpush1.msra.mxu0 0.0
        %2007 = vmatprep.subr.mxu0 0.0
        %2008 = vmatpush1.msra.mxu0 0.0
        %2009 = vmatprep.subr.mxu0 0.0
        %2010 = vmatpush1.msra.mxu0 0.0
        %2011 = vmatprep.subr.mxu0 0.0
        %2012 = vmatpush1.msra.mxu0 0.0
        %2013 = vmatprep.subr.mxu0 0.0
        %2014 = vmatpush1.msra.mxu0 0.0
        %2015 = vmatprep.subr.mxu0 0.0
        %2016 = vmatpush1.msra.mxu0 0.0
        %2017 = vmatprep.subr.mxu0 0.0
        %2018 = vmatpush1.msra.mxu0 0.0
        %2019 = vmatprep.subr.mxu0 0.0
        %2020 = vmatpush1.msra.mxu0 0.0
        %2021 = vmatprep.subr.mxu0 0.0
        %2022 = vmatpush1.msra.mxu0 0.0
        %2023 = vmatprep.subr.mxu0 0.0
        %2024 = vmatpush1.msra.mxu0 0.0
        %2025 = vmatprep.subr.mxu0 0.0
        %2026 = vmatpush1.msra.mxu0 0.0
        %2027 = vmatprep.subr.mxu0 0.0
        %2028 = vmatpush1.msra.mxu0 0.0
        %2029 = vmatprep.subr.mxu0 0.0
        %2030 = vmatpush1.msra.mxu0 0.0
        %2031 = vmatprep.subr.mxu0 0.0
        %2032 = vmatpush1.msra.mxu0 0.0
        %2033 = vmatprep.subr.mxu0 0.0
        %2034 = vmatpush1.msra.mxu0 0.0
        %2035 = vmatprep.subr.mxu0 0.0
        %2036 = vmatpush1.msra.mxu0 0.0
        %2037 = vmatprep.subr.mxu0 0.0
        %2038 = vmatpush1.msra.mxu0 0.0
        %2039 = vmatprep.subr.mxu0 0.0
        %2040 = vmatpush1.msra.mxu0 0.0
        %2041 = vmatprep.mubr.f32.mxu0 0.0
        %2042 = vmatmul.mubr.f32.gmra.mrb[0].mxu0 %v1972
        %v2043 = vpop.f32.mrb[0].mxu0
        %v2044 = vadd.f32 0.0, %v2043
        %v2045 = vpop.f32.mrb[0].mxu0
        %2046 = vmatprep.mubr.f32.mxu0 0.0
        %2047 = vmatmul.mubr.f32.gmra.mrb[0].mxu0 %v1975
        %v2048 = vpop.f32.mrb[0].mxu0
        %v2049 = vadd.f32 0.0, %v2048
        %v2050 = vpop.f32.mrb[0].mxu0
        %2051 = vdwg.mxu0
        %v2052 = vadd.f32 %v1632, %v2044
        %v2053 = vadd.f32 %v1637, %v2049
        %2054 = vrot.lane.b32.xlu0 %v813, 104
        %v2055 = vpop.permute.xlu0 %2054
        %2056 = vrot.lane.b32.xlu0 %v805, 72
        %v2057 = vpop.permute.xlu0 %2056
        %v2058 = vsel %vm818, %v2055, 0
        %v2060 = vsel %vm818, %v2057, 0
        %2062 = vmatprep.subr.mxu0 0.0
        %2063 = vmatpush1.xpose.msra.mxu0 %v2060
        %2064 = vmatprep.subr.mxu0 0.0
        %2065 = vmatpush1.xpose.msra.mxu0 0.0
        %2066 = vmatprep.subr.mxu0 0.0
        %2067 = vmatpush1.xpose.msra.mxu0 0.0
        %2068 = vmatprep.subr.mxu0 0.0
        %2069 = vmatpush1.xpose.msra.mxu0 0.0
        %2070 = vmatprep.subr.mxu0 0.0
        %2071 = vmatpush1.xpose.msra.mxu0 0.0
        %2072 = vmatprep.subr.mxu0 0.0
        %2073 = vmatpush1.xpose.msra.mxu0 0.0
        %2074 = vmatprep.subr.mxu0 0.0
        %2075 = vmatpush1.xpose.msra.mxu0 0.0
        %2076 = vmatprep.subr.mxu0 0.0
        %2077 = vmatpush1.xpose.msra.mxu0 0.0
        %2078 = vmatprep.subr.mxu0 0.0
        %2079 = vmatpush1.xpose.msra.mxu0 0.0
        %2080 = vmatprep.subr.mxu0 0.0
        %2081 = vmatpush1.xpose.msra.mxu0 0.0
        %2082 = vmatprep.subr.mxu0 0.0
        %2083 = vmatpush1.xpose.msra.mxu0 0.0
        %2084 = vmatprep.subr.mxu0 0.0
        %2085 = vmatpush1.xpose.msra.mxu0 0.0
        %2086 = vmatprep.subr.mxu0 0.0
        %2087 = vmatpush1.xpose.msra.mxu0 0.0
        %2088 = vmatprep.subr.mxu0 0.0
        %2089 = vmatpush1.xpose.msra.mxu0 0.0
        %2090 = vmatprep.subr.mxu0 0.0
        %2091 = vmatpush1.xpose.msra.mxu0 0.0
        %2092 = vmatprep.subr.mxu0 0.0
        %2093 = vmatpush1.xpose.msra.mxu0 0.0
        %2094 = vmatprep.subr.mxu0 0.0
        %2095 = vmatpush1.xpose.msra.mxu0 0.0
        %2096 = vmatprep.subr.mxu0 0.0
        %2097 = vmatpush1.xpose.msra.mxu0 0.0
        %2098 = vmatprep.subr.mxu0 0.0
        %2099 = vmatpush1.xpose.msra.mxu0 0.0
        %2100 = vmatprep.subr.mxu0 0.0
        %2101 = vmatpush1.xpose.msra.mxu0 0.0
        %2102 = vmatprep.subr.mxu0 0.0
        %2103 = vmatpush1.xpose.msra.mxu0 0.0
        %2104 = vmatprep.subr.mxu0 0.0
        %2105 = vmatpush1.xpose.msra.mxu0 0.0
        %2106 = vmatprep.subr.mxu0 0.0
        %2107 = vmatpush1.xpose.msra.mxu0 0.0
        %2108 = vmatprep.subr.mxu0 0.0
        %2109 = vmatpush1.xpose.msra.mxu0 0.0
        %2110 = vmatprep.subr.mxu0 0.0
        %2111 = vmatpush1.xpose.msra.mxu0 0.0
        %2112 = vmatprep.subr.mxu0 0.0
        %2113 = vmatpush1.xpose.msra.mxu0 0.0
        %2114 = vmatprep.subr.mxu0 0.0
        %2115 = vmatpush1.xpose.msra.mxu0 0.0
        %2116 = vmatprep.subr.mxu0 0.0
        %2117 = vmatpush1.xpose.msra.mxu0 0.0
        %2118 = vmatprep.subr.mxu0 0.0
        %2119 = vmatpush1.xpose.msra.mxu0 0.0
        %2120 = vmatprep.subr.mxu0 0.0
        %2121 = vmatpush1.xpose.msra.mxu0 0.0
        %2122 = vmatprep.subr.mxu0 0.0
        %2123 = vmatpush1.xpose.msra.mxu0 0.0
        %2124 = vmatprep.subr.mxu0 0.0
        %2125 = vmatpush1.xpose.msra.mxu0 0.0
        %2126 = vmatprep.mubr.f32.mxu0 0.0
        %2127 = vmatmul.mubr.f32.gmra.mrb[0].mxu0 %v2058
        %v2128 = vpop.f32.mrb[0].mxu0
        %v2129 = vadd.f32 %v719, %v2128
        %v2130 = vpop.f32.mrb[0].mxu0
        %2131 = vdwg.mxu0
        %2132 = vrot.lane.b32.xlu0 %v814, 104
        %v2133 = vpop.permute.xlu0 %2132
        %2134 = vrot.lane.b32.xlu0 %v810, 72
        %v2135 = vpop.permute.xlu0 %2134
        %v2136 = vsel %vm818, %v2133, 0
        %v2138 = vsel %vm818, %v2135, 0
        %2140 = vmatprep.subr.mxu0 0.0
        %2141 = vmatpush1.xpose.msra.mxu0 %v2138
        %2142 = vmatprep.subr.mxu0 0.0
        %2143 = vmatpush1.xpose.msra.mxu0 0.0
        %2144 = vmatprep.subr.mxu0 0.0
        %2145 = vmatpush1.xpose.msra.mxu0 0.0
        %2146 = vmatprep.subr.mxu0 0.0
        %2147 = vmatpush1.xpose.msra.mxu0 0.0
        %2148 = vmatprep.subr.mxu0 0.0
        %2149 = vmatpush1.xpose.msra.mxu0 0.0
        %2150 = vmatprep.subr.mxu0 0.0
        %2151 = vmatpush1.xpose.msra.mxu0 0.0
        %2152 = vmatprep.subr.mxu0 0.0
        %2153 = vmatpush1.xpose.msra.mxu0 0.0
        %2154 = vmatprep.subr.mxu0 0.0
        %2155 = vmatpush1.xpose.msra.mxu0 0.0
        %2156 = vmatprep.subr.mxu0 0.0
        %2157 = vmatpush1.xpose.msra.mxu0 0.0
        %2158 = vmatprep.subr.mxu0 0.0
        %2159 = vmatpush1.xpose.msra.mxu0 0.0
        %2160 = vmatprep.subr.mxu0 0.0
        %2161 = vmatpush1.xpose.msra.mxu0 0.0
        %2162 = vmatprep.subr.mxu0 0.0
        %2163 = vmatpush1.xpose.msra.mxu0 0.0
        %2164 = vmatprep.subr.mxu0 0.0
        %2165 = vmatpush1.xpose.msra.mxu0 0.0
        %2166 = vmatprep.subr.mxu0 0.0
        %2167 = vmatpush1.xpose.msra.mxu0 0.0
        %2168 = vmatprep.subr.mxu0 0.0
        %2169 = vmatpush1.xpose.msra.mxu0 0.0
        %2170 = vmatprep.subr.mxu0 0.0
        %2171 = vmatpush1.xpose.msra.mxu0 0.0
        %2172 = vmatprep.subr.mxu0 0.0
        %2173 = vmatpush1.xpose.msra.mxu0 0.0
        %2174 = vmatprep.subr.mxu0 0.0
        %2175 = vmatpush1.xpose.msra.mxu0 0.0
        %2176 = vmatprep.subr.mxu0 0.0
        %2177 = vmatpush1.xpose.msra.mxu0 0.0
        %2178 = vmatprep.subr.mxu0 0.0
        %2179 = vmatpush1.xpose.msra.mxu0 0.0
        %2180 = vmatprep.subr.mxu0 0.0
        %2181 = vmatpush1.xpose.msra.mxu0 0.0
        %2182 = vmatprep.subr.mxu0 0.0
        %2183 = vmatpush1.xpose.msra.mxu0 0.0
        %2184 = vmatprep.subr.mxu0 0.0
        %2185 = vmatpush1.xpose.msra.mxu0 0.0
        %2186 = vmatprep.subr.mxu0 0.0
        %2187 = vmatpush1.xpose.msra.mxu0 0.0
        %2188 = vmatprep.subr.mxu0 0.0
        %2189 = vmatpush1.xpose.msra.mxu0 0.0
        %2190 = vmatprep.subr.mxu0 0.0
        %2191 = vmatpush1.xpose.msra.mxu0 0.0
        %2192 = vmatprep.subr.mxu0 0.0
        %2193 = vmatpush1.xpose.msra.mxu0 0.0
        %2194 = vmatprep.subr.mxu0 0.0
        %2195 = vmatpush1.xpose.msra.mxu0 0.0
        %2196 = vmatprep.subr.mxu0 0.0
        %2197 = vmatpush1.xpose.msra.mxu0 0.0
        %2198 = vmatprep.subr.mxu0 0.0
        %2199 = vmatpush1.xpose.msra.mxu0 0.0
        %2200 = vmatprep.subr.mxu0 0.0
        %2201 = vmatpush1.xpose.msra.mxu0 0.0
        %2202 = vmatprep.subr.mxu0 0.0
        %2203 = vmatpush1.xpose.msra.mxu0 0.0
        %2204 = vmatprep.mubr.f32.mxu0 0.0
        %2205 = vmatmul.mubr.f32.gmra.mrb[0].mxu0 %v2136
        %v2206 = vpop.f32.mrb[0].mxu0
        %v2207 = vadd.f32 %v719, %v2206
        %v2208 = vpop.f32.mrb[0].mxu0
        %2209 = vdwg.mxu0
        %v2210 = vsel %vm818, %v2129, -inf
        %2211 = vmax.xlane.f32.xlu0 %v2210
        %v2212 = vpop.xlane.xlu0 %2211
        %v2213 = vsel %vm818, %v2207, -inf
        %2214 = vmax.xlane.f32.xlu0 %v2213
        %v2215 = vpop.xlane.xlu0 %2214
        %v2216 = vsub.f32 %v2129, %v2212
        %v2217 = vsub.f32 %v2207, %v2215
        %v2218 = vmul.f32 %v2216, 1.442695
        %v2219 = vpow.pop %v2218
        %v2220 = vmul.f32 %v2217, 1.442695
        %v2221 = vpow.pop %v2220
        %v2222 = vsel %vm818, %v2219, 0.0
        %2223 = vadd.xlane.f32.xlu0 %v2222
        %v2224 = vpop.xlane.xlu0 %2223
        %v2225 = vsel %vm818, %v2221, 0.0
        %2226 = vadd.xlane.f32.xlu0 %v2225
        %v2227 = vpop.xlane.xlu0 %2226
        %v2228 = vrcp.pop %v2224
        %v2229 = vrcp.pop %v2227
        %v2230 = vmul.f32 %v2219, %v2228
        %v2231 = vmul.f32 %v2221, %v2229
        %2232 = vrot.lane.b32.xlu0 %v805, 40
        %v2233 = vpop.permute.xlu0 %2232
        %v2236 = vsel %vm818, %v2230, 0
        %2238 = vmatprep.subr.mxu0 0.0
        %2239 = vmatpush1.msra.mxu0 %v2233
        %2240 = vmatprep.subr.mxu0 0.0
        %2241 = vmatpush1.msra.mxu0 0.0
        %2242 = vmatprep.subr.mxu0 0.0
        %2243 = vmatpush1.msra.mxu0 0.0
        %2244 = vmatprep.subr.mxu0 0.0
        %2245 = vmatpush1.msra.mxu0 0.0
        %2246 = vmatprep.subr.mxu0 0.0
        %2247 = vmatpush1.msra.mxu0 0.0
        %2248 = vmatprep.subr.mxu0 0.0
        %2249 = vmatpush1.msra.mxu0 0.0
        %2250 = vmatprep.subr.mxu0 0.0
        %2251 = vmatpush1.msra.mxu0 0.0
        %2252 = vmatprep.subr.mxu0 0.0
        %2253 = vmatpush1.msra.mxu0 0.0
        %2254 = vmatprep.subr.mxu0 0.0
        %2255 = vmatpush1.msra.mxu0 0.0
        %2256 = vmatprep.subr.mxu0 0.0
        %2257 = vmatpush1.msra.mxu0 0.0
        %2258 = vmatprep.subr.mxu0 0.0
        %2259 = vmatpush1.msra.mxu0 0.0
        %2260 = vmatprep.subr.mxu0 0.0
        %2261 = vmatpush1.msra.mxu0 0.0
        %2262 = vmatprep.subr.mxu0 0.0
        %2263 = vmatpush1.msra.mxu0 0.0
        %2264 = vmatprep.subr.mxu0 0.0
        %2265 = vmatpush1.msra.mxu0 0.0
        %2266 = vmatprep.subr.mxu0 0.0
        %2267 = vmatpush1.msra.mxu0 0.0
        %2268 = vmatprep.subr.mxu0 0.0
        %2269 = vmatpush1.msra.mxu0 0.0
        %2270 = vmatprep.subr.mxu0 0.0
        %2271 = vmatpush1.msra.mxu0 0.0
        %2272 = vmatprep.subr.mxu0 0.0
        %2273 = vmatpush1.msra.mxu0 0.0
        %2274 = vmatprep.subr.mxu0 0.0
        %2275 = vmatpush1.msra.mxu0 0.0
        %2276 = vmatprep.subr.mxu0 0.0
        %2277 = vmatpush1.msra.mxu0 0.0
        %2278 = vmatprep.subr.mxu0 0.0
        %2279 = vmatpush1.msra.mxu0 0.0
        %2280 = vmatprep.subr.mxu0 0.0
        %2281 = vmatpush1.msra.mxu0 0.0
        %2282 = vmatprep.subr.mxu0 0.0
        %2283 = vmatpush1.msra.mxu0 0.0
        %2284 = vmatprep.subr.mxu0 0.0
        %2285 = vmatpush1.msra.mxu0 0.0
        %2286 = vmatprep.subr.mxu0 0.0
        %2287 = vmatpush1.msra.mxu0 0.0
        %2288 = vmatprep.subr.mxu0 0.0
        %2289 = vmatpush1.msra.mxu0 0.0
        %2290 = vmatprep.subr.mxu0 0.0
        %2291 = vmatpush1.msra.mxu0 0.0
        %2292 = vmatprep.subr.mxu0 0.0
        %2293 = vmatpush1.msra.mxu0 0.0
        %2294 = vmatprep.subr.mxu0 0.0
        %2295 = vmatpush1.msra.mxu0 0.0
        %2296 = vmatprep.subr.mxu0 0.0
        %2297 = vmatpush1.msra.mxu0 0.0
        %2298 = vmatprep.subr.mxu0 0.0
        %2299 = vmatpush1.msra.mxu0 0.0
        %2300 = vmatprep.subr.mxu0 0.0
        %2301 = vmatpush1.msra.mxu0 0.0
        %2302 = vmatprep.mubr.f32.mxu0 0.0
        %2303 = vmatmul.mubr.f32.gmra.mrb[0].mxu0 %v2236
        %v2304 = vpop.f32.mrb[0].mxu0
        %v2305 = vadd.f32 0.0, %v2304
        %v2306 = vpop.f32.mrb[0].mxu0
        %2307 = vdwg.mxu0
        %2308 = vrot.lane.b32.xlu0 %v810, 40
        %v2309 = vpop.permute.xlu0 %2308
        %v2312 = vsel %vm818, %v2231, 0
        %2314 = vmatprep.subr.mxu0 0.0
        %2315 = vmatpush1.msra.mxu0 %v2309
        %2316 = vmatprep.subr.mxu0 0.0
        %2317 = vmatpush1.msra.mxu0 0.0
        %2318 = vmatprep.subr.mxu0 0.0
        %2319 = vmatpush1.msra.mxu0 0.0
        %2320 = vmatprep.subr.mxu0 0.0
        %2321 = vmatpush1.msra.mxu0 0.0
        %2322 = vmatprep.subr.mxu0 0.0
        %2323 = vmatpush1.msra.mxu0 0.0
        %2324 = vmatprep.subr.mxu0 0.0
        %2325 = vmatpush1.msra.mxu0 0.0
        %2326 = vmatprep.subr.mxu0 0.0
        %2327 = vmatpush1.msra.mxu0 0.0
        %2328 = vmatprep.subr.mxu0 0.0
        %2329 = vmatpush1.msra.mxu0 0.0
        %2330 = vmatprep.subr.mxu0 0.0
        %2331 = vmatpush1.msra.mxu0 0.0
        %2332 = vmatprep.subr.mxu0 0.0
        %2333 = vmatpush1.msra.mxu0 0.0
        %2334 = vmatprep.subr.mxu0 0.0
        %2335 = vmatpush1.msra.mxu0 0.0
        %2336 = vmatprep.subr.mxu0 0.0
        %2337 = vmatpush1.msra.mxu0 0.0
        %2338 = vmatprep.subr.mxu0 0.0
        %2339 = vmatpush1.msra.mxu0 0.0
        %2340 = vmatprep.subr.mxu0 0.0
        %2341 = vmatpush1.msra.mxu0 0.0
        %2342 = vmatprep.subr.mxu0 0.0
        %2343 = vmatpush1.msra.mxu0 0.0
        %2344 = vmatprep.subr.mxu0 0.0
        %2345 = vmatpush1.msra.mxu0 0.0
        %2346 = vmatprep.subr.mxu0 0.0
        %2347 = vmatpush1.msra.mxu0 0.0
        %2348 = vmatprep.subr.mxu0 0.0
        %2349 = vmatpush1.msra.mxu0 0.0
        %2350 = vmatprep.subr.mxu0 0.0
        %2351 = vmatpush1.msra.mxu0 0.0
        %2352 = vmatprep.subr.mxu0 0.0
        %2353 = vmatpush1.msra.mxu0 0.0
        %2354 = vmatprep.subr.mxu0 0.0
        %2355 = vmatpush1.msra.mxu0 0.0
        %2356 = vmatprep.subr.mxu0 0.0
        %2357 = vmatpush1.msra.mxu0 0.0
        %2358 = vmatprep.subr.mxu0 0.0
        %2359 = vmatpush1.msra.mxu0 0.0
        %2360 = vmatprep.subr.mxu0 0.0
        %2361 = vmatpush1.msra.mxu0 0.0
        %2362 = vmatprep.subr.mxu0 0.0
        %2363 = vmatpush1.msra.mxu0 0.0
        %2364 = vmatprep.subr.mxu0 0.0
        %2365 = vmatpush1.msra.mxu0 0.0
        %2366 = vmatprep.subr.mxu0 0.0
        %2367 = vmatpush1.msra.mxu0 0.0
        %2368 = vmatprep.subr.mxu0 0.0
        %2369 = vmatpush1.msra.mxu0 0.0
        %2370 = vmatprep.subr.mxu0 0.0
        %2371 = vmatpush1.msra.mxu0 0.0
        %2372 = vmatprep.subr.mxu0 0.0
        %2373 = vmatpush1.msra.mxu0 0.0
        %2374 = vmatprep.subr.mxu0 0.0
        %2375 = vmatpush1.msra.mxu0 0.0
        %2376 = vmatprep.subr.mxu0 0.0
        %2377 = vmatpush1.msra.mxu0 0.0
        %2378 = vmatprep.mubr.f32.mxu0 0.0
        %2379 = vmatmul.mubr.f32.gmra.mrb[0].mxu0 %v2312
        %v2380 = vpop.f32.mrb[0].mxu0
        %v2381 = vadd.f32 0.0, %v2380
        %v2382 = vpop.f32.mrb[0].mxu0
        %2383 = vdwg.mxu0
        %v2384 = vld [vmem:[%s676 + $0x18] sm:$0xff]
        %v2386 = vsel %vm818, %v2305, 0
        %v2389 = vsel %vm818, %v2381, 0
        %2391 = vmatprep.subr.mxu0 0.0
        %2392 = vmatpush1.msra.mxu0 %v2384
        %2393 = vmatprep.subr.mxu0 0.0
        %2394 = vmatpush1.msra.mxu0 0.0
        %2395 = vmatprep.subr.mxu0 0.0
        %2396 = vmatpush1.msra.mxu0 0.0
        %2397 = vmatprep.subr.mxu0 0.0
        %2398 = vmatpush1.msra.mxu0 0.0
        %2399 = vmatprep.subr.mxu0 0.0
        %2400 = vmatpush1.msra.mxu0 0.0
        %2401 = vmatprep.subr.mxu0 0.0
        %2402 = vmatpush1.msra.mxu0 0.0
        %2403 = vmatprep.subr.mxu0 0.0
        %2404 = vmatpush1.msra.mxu0 0.0
        %2405 = vmatprep.subr.mxu0 0.0
        %2406 = vmatpush1.msra.mxu0 0.0
        %2407 = vmatprep.subr.mxu0 0.0
        %2408 = vmatpush1.msra.mxu0 0.0
        %2409 = vmatprep.subr.mxu0 0.0
        %2410 = vmatpush1.msra.mxu0 0.0
        %2411 = vmatprep.subr.mxu0 0.0
        %2412 = vmatpush1.msra.mxu0 0.0
        %2413 = vmatprep.subr.mxu0 0.0
        %2414 = vmatpush1.msra.mxu0 0.0
        %2415 = vmatprep.subr.mxu0 0.0
        %2416 = vmatpush1.msra.mxu0 0.0
        %2417 = vmatprep.subr.mxu0 0.0
        %2418 = vmatpush1.msra.mxu0 0.0
        %2419 = vmatprep.subr.mxu0 0.0
        %2420 = vmatpush1.msra.mxu0 0.0
        %2421 = vmatprep.subr.mxu0 0.0
        %2422 = vmatpush1.msra.mxu0 0.0
        %2423 = vmatprep.subr.mxu0 0.0
        %2424 = vmatpush1.msra.mxu0 0.0
        %2425 = vmatprep.subr.mxu0 0.0
        %2426 = vmatpush1.msra.mxu0 0.0
        %2427 = vmatprep.subr.mxu0 0.0
        %2428 = vmatpush1.msra.mxu0 0.0
        %2429 = vmatprep.subr.mxu0 0.0
        %2430 = vmatpush1.msra.mxu0 0.0
        %2431 = vmatprep.subr.mxu0 0.0
        %2432 = vmatpush1.msra.mxu0 0.0
        %2433 = vmatprep.subr.mxu0 0.0
        %2434 = vmatpush1.msra.mxu0 0.0
        %2435 = vmatprep.subr.mxu0 0.0
        %2436 = vmatpush1.msra.mxu0 0.0
        %2437 = vmatprep.subr.mxu0 0.0
        %2438 = vmatpush1.msra.mxu0 0.0
        %2439 = vmatprep.subr.mxu0 0.0
        %2440 = vmatpush1.msra.mxu0 0.0
        %2441 = vmatprep.subr.mxu0 0.0
        %2442 = vmatpush1.msra.mxu0 0.0
        %2443 = vmatprep.subr.mxu0 0.0
        %2444 = vmatpush1.msra.mxu0 0.0
        %2445 = vmatprep.subr.mxu0 0.0
        %2446 = vmatpush1.msra.mxu0 0.0
        %2447 = vmatprep.subr.mxu0 0.0
        %2448 = vmatpush1.msra.mxu0 0.0
        %2449 = vmatprep.subr.mxu0 0.0
        %2450 = vmatpush1.msra.mxu0 0.0
        %2451 = vmatprep.subr.mxu0 0.0
        %2452 = vmatpush1.msra.mxu0 0.0
        %2453 = vmatprep.subr.mxu0 0.0
        %2454 = vmatpush1.msra.mxu0 0.0
        %2455 = vmatprep.mubr.f32.mxu0 0.0
        %2456 = vmatmul.mubr.f32.gmra.mrb[0].mxu0 %v2386
        %v2457 = vpop.f32.mrb[0].mxu0
        %v2458 = vadd.f32 0.0, %v2457
        %v2459 = vpop.f32.mrb[0].mxu0
        %2460 = vmatprep.mubr.f32.mxu0 0.0
        %2461 = vmatmul.mubr.f32.gmra.mrb[0].mxu0 %v2389
        %v2462 = vpop.f32.mrb[0].mxu0
        %v2463 = vadd.f32 0.0, %v2462
        %v2464 = vpop.f32.mrb[0].mxu0
        %2465 = vdwg.mxu0
        %v2466 = vadd.f32 %v2052, %v2458
        %v2467 = vadd.f32 %v2053, %v2463
        %v2468 = vld [vmem:[%s679] sm:$0x1]
        %v2470 = vlaneseq
        %v2471 = vshrl.u32 %v2470, 7
        %v2472 = vsub.s32 0, %v2471
        %v2473 = vrot.slane %v2468, %v2472
        %v2475 = vadd.f32 %v2466, %v2473
        %v2476 = vadd.f32 %v2467, %v2473
        %v2477 = vadd.f32 %v717, %v2475
        %v2478 = vadd.f32 %v718, %v2476
        %v2479 = vld [vmem:[%s682] sm:$0x1]
        %v2480 = vld [vmem:[%s685] sm:$0x1]
        %v2481 = vsel %vm731, %v2477, 0.0
        %2482 = vadd.xlane.f32.xlu0 %v2481
        %v2483 = vpop.xlane.xlu0 %2482
        %v2484 = vsel %vm731, %v2478, 0.0
        %2485 = vadd.xlane.f32.xlu0 %v2484
        %v2486 = vpop.xlane.xlu0 %2485
        %v2487 = vrcp.pop 32.0
        %v2488 = vmul.f32 %v2483, %v2487
        %v2489 = vmul.f32 %v2486, %v2487
        %v2490 = vsub.f32 %v2477, %v2488
        %v2491 = vsub.f32 %v2478, %v2489
        %v2492 = vmul.f32 %v2490, %v2490
        %v2493 = vmul.f32 %v2491, %v2491
        %v2494 = vsel %vm731, %v2492, 0.0
        %2495 = vadd.xlane.f32.xlu0 %v2494
        %v2496 = vpop.xlane.xlu0 %2495
        %v2497 = vsel %vm731, %v2493, 0.0
        %2498 = vadd.xlane.f32.xlu0 %v2497
        %v2499 = vpop.xlane.xlu0 %2498
        %v2500 = vrcp.pop 31.0
        %v2501 = vmul.f32 %v2496, %v2500
        %v2502 = vmul.f32 %v2499, %v2500
        %v2503 = vrsqrt.pop %v2501
        %v2504 = vmul.f32 %v2501, %v2503
        %vm2505 = vcmp.eq.f32.partialorder %v2501, inf
        %v2506 = vsel %vm2505, %v2501, %v2504
        %vm2507 = vcmp.eq.f32.partialorder %v2501, 0.0
        %v2508 = vand.u32 %v2501, 2147483648
        %v2509 = vsel %vm2507, %v2508, %v2506
        %v2510 = vrsqrt.pop %v2502
        %v2511 = vmul.f32 %v2502, %v2510
        %vm2512 = vcmp.eq.f32.partialorder %v2502, inf
        %v2513 = vsel %vm2512, %v2502, %v2511
        %vm2514 = vcmp.eq.f32.partialorder %v2502, 0.0
        %v2515 = vand.u32 %v2502, 2147483648
        %v2516 = vsel %vm2514, %v2515, %v2513
        %v2517 = vadd.f32 %v2509, 1e-05
        %v2518 = vadd.f32 %v2516, 1e-05
        %v2519 = vrcp.pop %v2517
        %v2520 = vmul.f32 %v2490, %v2519
        %v2521 = vrcp.pop %v2518
        %v2522 = vmul.f32 %v2491, %v2521
        %v2524 = vlaneseq
        %v2525 = vshrl.u32 %v2524, 7
        %v2526 = vsub.s32 0, %v2525
        %v2527 = vrot.slane %v2479, %v2526
        %v2529 = vmul.f32 %v2527, %v2520
        %v2530 = vmul.f32 %v2527, %v2522
        %v2532 = vlaneseq
        %v2533 = vshrl.u32 %v2532, 7
        %v2534 = vsub.s32 0, %v2533
        %v2535 = vrot.slane %v2480, %v2534
        %v2537 = vadd.f32 %v2529, %v2535
        %v2538 = vadd.f32 %v2530, %v2535
        %v2539 = vld [vmem:[%s690] sm:$0xff]
        %v2540 = vld [vmem:[%s690 + $0x8] sm:$0xff]
        %v2541 = vld [vmem:[%s690 + $0x10] sm:$0xff]
        %v2542 = vld [vmem:[%s690 + $0x18] sm:$0xff]
        %v2543 = vld [vmem:[%s693] sm:$0x1]
        %v2545 = vlaneseq
        %v2546 = vshrl.u32 %v2545, 7
        %v2547 = vsub.s32 0, %v2546
        %v2548 = vrot.slane %v2543, %v2547
        %v2551 = vsel %vm731, %v2537, 0
        %v2554 = vsel %vm731, %v2538, 0
        %2556 = vmatprep.subr.mxu0 0.0
        %2557 = vmatpush1.msra.mxu0 %v2539
        %2558 = vmatprep.subr.mxu0 0.0
        %2559 = vmatpush1.msra.mxu0 %v2540
        %2560 = vmatprep.subr.mxu0 0.0
        %2561 = vmatpush1.msra.mxu0 %v2541
        %2562 = vmatprep.subr.mxu0 0.0
        %2563 = vmatpush1.msra.mxu0 %v2542
        %2564 = vmatprep.subr.mxu0 0.0
        %2565 = vmatpush1.msra.mxu0 0.0
        %2566 = vmatprep.subr.mxu0 0.0
        %2567 = vmatpush1.msra.mxu0 0.0
        %2568 = vmatprep.subr.mxu0 0.0
        %2569 = vmatpush1.msra.mxu0 0.0
        %2570 = vmatprep.subr.mxu0 0.0
        %2571 = vmatpush1.msra.mxu0 0.0
        %2572 = vmatprep.subr.mxu0 0.0
        %2573 = vmatpush1.msra.mxu0 0.0
        %2574 = vmatprep.subr.mxu0 0.0
        %2575 = vmatpush1.msra.mxu0 0.0
        %2576 = vmatprep.subr.mxu0 0.0
        %2577 = vmatpush1.msra.mxu0 0.0
        %2578 = vmatprep.subr.mxu0 0.0
        %2579 = vmatpush1.msra.mxu0 0.0
        %2580 = vmatprep.subr.mxu0 0.0
        %2581 = vmatpush1.msra.mxu0 0.0
        %2582 = vmatprep.subr.mxu0 0.0
        %2583 = vmatpush1.msra.mxu0 0.0
        %2584 = vmatprep.subr.mxu0 0.0
        %2585 = vmatpush1.msra.mxu0 0.0
        %2586 = vmatprep.subr.mxu0 0.0
        %2587 = vmatpush1.msra.mxu0 0.0
        %2588 = vmatprep.subr.mxu0 0.0
        %2589 = vmatpush1.msra.mxu0 0.0
        %2590 = vmatprep.subr.mxu0 0.0
        %2591 = vmatpush1.msra.mxu0 0.0
        %2592 = vmatprep.subr.mxu0 0.0
        %2593 = vmatpush1.msra.mxu0 0.0
        %2594 = vmatprep.subr.mxu0 0.0
        %2595 = vmatpush1.msra.mxu0 0.0
        %2596 = vmatprep.subr.mxu0 0.0
        %2597 = vmatpush1.msra.mxu0 0.0
        %2598 = vmatprep.subr.mxu0 0.0
        %2599 = vmatpush1.msra.mxu0 0.0
        %2600 = vmatprep.subr.mxu0 0.0
        %2601 = vmatpush1.msra.mxu0 0.0
        %2602 = vmatprep.subr.mxu0 0.0
        %2603 = vmatpush1.msra.mxu0 0.0
        %2604 = vmatprep.subr.mxu0 0.0
        %2605 = vmatpush1.msra.mxu0 0.0
        %2606 = vmatprep.subr.mxu0 0.0
        %2607 = vmatpush1.msra.mxu0 0.0
        %2608 = vmatprep.subr.mxu0 0.0
        %2609 = vmatpush1.msra.mxu0 0.0
        %2610 = vmatprep.subr.mxu0 0.0
        %2611 = vmatpush1.msra.mxu0 0.0
        %2612 = vmatprep.subr.mxu0 0.0
        %2613 = vmatpush1.msra.mxu0 0.0
        %2614 = vmatprep.subr.mxu0 0.0
        %2615 = vmatpush1.msra.mxu0 0.0
        %2616 = vmatprep.subr.mxu0 0.0
        %2617 = vmatpush1.msra.mxu0 0.0
        %2618 = vmatprep.subr.mxu0 0.0
        %2619 = vmatpush1.msra.mxu0 0.0
        %2620 = vmatprep.mubr.f32.mxu0 0.0
        %2621 = vmatmul.mubr.f32.gmra.mrb[0].mxu0 %v2551
        %v2622 = vpop.f32.mrb[0].mxu0
        %v2623 = vadd.f32 %v2548, %v2622
        %v2624 = vpop.f32.mrb[0].mxu0
        %2625 = vmatprep.mubr.f32.mxu0 0.0
        %2626 = vmatmul.mubr.f32.gmra.mrb[0].mxu0 %v2554
        %v2627 = vpop.f32.mrb[0].mxu0
        %v2628 = vadd.f32 %v2548, %v2627
        %v2629 = vpop.f32.mrb[0].mxu0
        %2630 = vdwg.mxu0
        %v2631 = vmax.f32 %v2623, 0.0
        %v2632 = vmax.f32 %v2628, 0.0
        %v2633 = vld [vmem:[%s698] sm:$0xff]
        %v2634 = vld [vmem:[%s698 + $0x8] sm:$0xff]
        %v2635 = vld [vmem:[%s698 + $0x10] sm:$0xff]
        %v2636 = vld [vmem:[%s698 + $0x18] sm:$0xff]
        %v2637 = vld [vmem:[%s698 + $0x20] sm:$0xff]
        %v2638 = vld [vmem:[%s698 + $0x28] sm:$0xff]
        %v2639 = vld [vmem:[%s698 + $0x30] sm:$0xff]
        %v2640 = vld [vmem:[%s698 + $0x38] sm:$0xff]
        %v2641 = vld [vmem:[%s701] sm:$0x1]
        %v2643 = vlaneseq
        %v2644 = vshrl.u32 %v2643, 7
        %v2645 = vsub.s32 0, %v2644
        %v2646 = vrot.slane %v2641, %v2645
        %vm2648 = vcmask 523264
        %v2650 = vsel %vm2648, %v2631, 0
        %v2653 = vsel %vm2648, %v2632, 0
        %2655 = vmatprep.subr.mxu0 0.0
        %2656 = vmatpush1.msra.mxu0 %v2633
        %2657 = vmatprep.subr.mxu0 0.0
        %2658 = vmatpush1.msra.mxu0 %v2634
        %2659 = vmatprep.subr.mxu0 0.0
        %2660 = vmatpush1.msra.mxu0 %v2635
        %2661 = vmatprep.subr.mxu0 0.0
        %2662 = vmatpush1.msra.mxu0 %v2636
        %2663 = vmatprep.subr.mxu0 0.0
        %2664 = vmatpush1.msra.mxu0 %v2637
        %2665 = vmatprep.subr.mxu0 0.0
        %2666 = vmatpush1.msra.mxu0 %v2638
        %2667 = vmatprep.subr.mxu0 0.0
        %2668 = vmatpush1.msra.mxu0 %v2639
        %2669 = vmatprep.subr.mxu0 0.0
        %2670 = vmatpush1.msra.mxu0 %v2640
        %2671 = vmatprep.subr.mxu0 0.0
        %2672 = vmatpush1.msra.mxu0 0.0
        %2673 = vmatprep.subr.mxu0 0.0
        %2674 = vmatpush1.msra.mxu0 0.0
        %2675 = vmatprep.subr.mxu0 0.0
        %2676 = vmatpush1.msra.mxu0 0.0
        %2677 = vmatprep.subr.mxu0 0.0
        %2678 = vmatpush1.msra.mxu0 0.0
        %2679 = vmatprep.subr.mxu0 0.0
        %2680 = vmatpush1.msra.mxu0 0.0
        %2681 = vmatprep.subr.mxu0 0.0
        %2682 = vmatpush1.msra.mxu0 0.0
        %2683 = vmatprep.subr.mxu0 0.0
        %2684 = vmatpush1.msra.mxu0 0.0
        %2685 = vmatprep.subr.mxu0 0.0
        %2686 = vmatpush1.msra.mxu0 0.0
        %2687 = vmatprep.subr.mxu0 0.0
        %2688 = vmatpush1.msra.mxu0 0.0
        %2689 = vmatprep.subr.mxu0 0.0
        %2690 = vmatpush1.msra.mxu0 0.0
        %2691 = vmatprep.subr.mxu0 0.0
        %2692 = vmatpush1.msra.mxu0 0.0
        %2693 = vmatprep.subr.mxu0 0.0
        %2694 = vmatpush1.msra.mxu0 0.0
        %2695 = vmatprep.subr.mxu0 0.0
        %2696 = vmatpush1.msra.mxu0 0.0
        %2697 = vmatprep.subr.mxu0 0.0
        %2698 = vmatpush1.msra.mxu0 0.0
        %2699 = vmatprep.subr.mxu0 0.0
        %2700 = vmatpush1.msra.mxu0 0.0
        %2701 = vmatprep.subr.mxu0 0.0
        %2702 = vmatpush1.msra.mxu0 0.0
        %2703 = vmatprep.subr.mxu0 0.0
        %2704 = vmatpush1.msra.mxu0 0.0
        %2705 = vmatprep.subr.mxu0 0.0
        %2706 = vmatpush1.msra.mxu0 0.0
        %2707 = vmatprep.subr.mxu0 0.0
        %2708 = vmatpush1.msra.mxu0 0.0
        %2709 = vmatprep.subr.mxu0 0.0
        %2710 = vmatpush1.msra.mxu0 0.0
        %2711 = vmatprep.subr.mxu0 0.0
        %2712 = vmatpush1.msra.mxu0 0.0
        %2713 = vmatprep.subr.mxu0 0.0
        %2714 = vmatpush1.msra.mxu0 0.0
        %2715 = vmatprep.subr.mxu0 0.0
        %2716 = vmatpush1.msra.mxu0 0.0
        %2717 = vmatprep.subr.mxu0 0.0
        %2718 = vmatpush1.msra.mxu0 0.0
        %2719 = vmatprep.mubr.f32.mxu0 0.0
        %2720 = vmatmul.mubr.f32.gmra.mrb[0].mxu0 %v2650
        %v2721 = vpop.f32.mrb[0].mxu0
        %v2722 = vadd.f32 %v2646, %v2721
        %v2723 = vpop.f32.mrb[0].mxu0
        %2724 = vmatprep.mubr.f32.mxu0 0.0
        %2725 = vmatmul.mubr.f32.gmra.mrb[0].mxu0 %v2653
        %v2726 = vpop.f32.mrb[0].mxu0
        %v2727 = vadd.f32 %v2646, %v2726
        %v2728 = vpop.f32.mrb[0].mxu0
        %2729 = vdwg.mxu0
        %v2730 = vadd.f32 %v2537, %v2722
        %v2731 = vadd.f32 %v2538, %v2727
        %v2732 = vld [vmem:[%s704] sm:$0x1]
        %v2733 = vld [vmem:[%s707] sm:$0x1]
        %v2734 = vsel %vm731, %v2730, 0.0
        %2735 = vadd.xlane.f32.xlu0 %v2734
        %v2736 = vpop.xlane.xlu0 %2735
        %v2737 = vsel %vm731, %v2731, 0.0
        %2738 = vadd.xlane.f32.xlu0 %v2737
        %v2739 = vpop.xlane.xlu0 %2738
        %v2740 = vmul.f32 %v2736, %v2487
        %v2741 = vmul.f32 %v2739, %v2487
        %v2742 = vsub.f32 %v2730, %v2740
        %v2743 = vsub.f32 %v2731, %v2741
        %v2744 = vmul.f32 %v2742, %v2742
        %v2745 = vmul.f32 %v2743, %v2743
        %v2746 = vsel %vm731, %v2744, 0.0
        %2747 = vadd.xlane.f32.xlu0 %v2746
        %v2748 = vpop.xlane.xlu0 %2747
        %v2749 = vsel %vm731, %v2745, 0.0
        %2750 = vadd.xlane.f32.xlu0 %v2749
        %v2751 = vpop.xlane.xlu0 %2750
        %v2752 = vmul.f32 %v2748, %v2500
        %v2753 = vmul.f32 %v2751, %v2500
        %v2754 = vrsqrt.pop %v2752
        %v2755 = vmul.f32 %v2752, %v2754
        %vm2756 = vcmp.eq.f32.partialorder %v2752, inf
        %v2757 = vsel %vm2756, %v2752, %v2755
        %vm2758 = vcmp.eq.f32.partialorder %v2752, 0.0
        %v2759 = vand.u32 %v2752, 2147483648
        %v2760 = vsel %vm2758, %v2759, %v2757
        %v2761 = vrsqrt.pop %v2753
        %v2762 = vmul.f32 %v2753, %v2761
        %vm2763 = vcmp.eq.f32.partialorder %v2753, inf
        %v2764 = vsel %vm2763, %v2753, %v2762
        %vm2765 = vcmp.eq.f32.partialorder %v2753, 0.0
        %v2766 = vand.u32 %v2753, 2147483648
        %v2767 = vsel %vm2765, %v2766, %v2764
        %v2768 = vadd.f32 %v2760, 1e-05
        %v2769 = vadd.f32 %v2767, 1e-05
        %v2770 = vrcp.pop %v2768
        %v2771 = vmul.f32 %v2742, %v2770
        %v2772 = vrcp.pop %v2769
        %v2773 = vmul.f32 %v2743, %v2772
        %v2775 = vlaneseq
        %v2776 = vshrl.u32 %v2775, 7
        %v2777 = vsub.s32 0, %v2776
        %v2778 = vrot.slane %v2732, %v2777
        %v2780 = vmul.f32 %v2778, %v2771
        %v2781 = vmul.f32 %v2778, %v2773
        %v2783 = vlaneseq
        %v2784 = vshrl.u32 %v2783, 7
        %v2785 = vsub.s32 0, %v2784
        %v2786 = vrot.slane %v2733, %v2785
        %v2788 = vadd.f32 %v2780, %v2786
        %v2789 = vadd.f32 %v2781, %v2786
        %2790 = vst.msk [vmem:[#allocation2] sm:$0xff] %vm731, %v2788
        %2791 = vst.msk [vmem:[#allocation2 + $0x8] sm:$0xff] %vm731, %v2789
        %p2792 = scmp.eq.s32.totalorder %s30, 1
        // Predicated region
        $region97: #{tpu_custom_call.1} parent=83 // pred_check
          %p2793 = pneg %p2792
        $region98: #{tpu_custom_call.1} parent=83 // pred_check_branch
          %2795 = sbr.rel (%p2793) target = $region100
        $region99: #{tpu_custom_call.1} parent=83 // pred_region
          %v2796 = vld [vmem:[%s14] sm:$0x1]
          %v2797 = vld [vmem:[%s15] sm:$0x1]
          %v2798 = vsel %vm731, %v2788, 0.0
          %2799 = vadd.xlane.f32.xlu0 %v2798
          %v2800 = vpop.xlane.xlu0 %2799
          %v2801 = vsel %vm731, %v2789, 0.0
          %2802 = vadd.xlane.f32.xlu0 %v2801
          %v2803 = vpop.xlane.xlu0 %2802
          %v2804 = vmul.f32 %v2800, %v2487
          %v2805 = vmul.f32 %v2803, %v2487
          %v2806 = vsub.f32 %v2788, %v2804
          %v2807 = vsub.f32 %v2789, %v2805
          %v2808 = vmul.f32 %v2806, %v2806
          %v2809 = vmul.f32 %v2807, %v2807
          %v2810 = vsel %vm731, %v2808, 0.0
          %2811 = vadd.xlane.f32.xlu0 %v2810
          %v2812 = vpop.xlane.xlu0 %2811
          %v2813 = vsel %vm731, %v2809, 0.0
          %2814 = vadd.xlane.f32.xlu0 %v2813
          %v2815 = vpop.xlane.xlu0 %2814
          %v2816 = vmul.f32 %v2812, %v2500
          %v2817 = vmul.f32 %v2815, %v2500
          %v2818 = vrsqrt.pop %v2816
          %v2819 = vmul.f32 %v2816, %v2818
          %vm2820 = vcmp.eq.f32.partialorder %v2816, inf
          %v2821 = vsel %vm2820, %v2816, %v2819
          %vm2822 = vcmp.eq.f32.partialorder %v2816, 0.0
          %v2823 = vand.u32 %v2816, 2147483648
          %v2824 = vsel %vm2822, %v2823, %v2821
          %v2825 = vrsqrt.pop %v2817
          %v2826 = vmul.f32 %v2817, %v2825
          %vm2827 = vcmp.eq.f32.partialorder %v2817, inf
          %v2828 = vsel %vm2827, %v2817, %v2826
          %vm2829 = vcmp.eq.f32.partialorder %v2817, 0.0
          %v2830 = vand.u32 %v2817, 2147483648
          %v2831 = vsel %vm2829, %v2830, %v2828
          %v2832 = vadd.f32 %v2824, 1e-05
          %v2833 = vadd.f32 %v2831, 1e-05
          %v2834 = vrcp.pop %v2832
          %v2835 = vmul.f32 %v2806, %v2834
          %v2836 = vrcp.pop %v2833
          %v2837 = vmul.f32 %v2807, %v2836
          %v2839 = vlaneseq
          %v2840 = vshrl.u32 %v2839, 7
          %v2841 = vsub.s32 0, %v2840
          %v2842 = vrot.slane %v2796, %v2841
          %v2844 = vmul.f32 %v2842, %v2835
          %v2845 = vmul.f32 %v2842, %v2837
          %v2847 = vlaneseq
          %v2848 = vshrl.u32 %v2847, 7
          %v2849 = vsub.s32 0, %v2848
          %v2850 = vrot.slane %v2797, %v2849
          %v2852 = vadd.f32 %v2844, %v2850
          %v2853 = vadd.f32 %v2845, %v2850
          %2854 = vst.msk [vmem:[#allocation8] sm:$0xff] %vm731, %v2852
          %2855 = vst.msk [vmem:[#allocation8 + $0x8] sm:$0xff] %vm731, %v2853
        $region100: #{tpu_custom_call.1} parent=83 // pred_fallthru
          _
        // Predicated region
        $region101: #{tpu_custom_call.1} parent=83 // pred_check
          %p2856 = pneg %p439
        $region102: #{tpu_custom_call.1} parent=83 // pred_check_branch
          %2858 = sbr.rel (%p2856) target = $region104
        $region103: #{tpu_custom_call.1} parent=83 // pred_region
          %s2860 = ssub.s32 256, 256
          %2861 = vsyncadd [#allocation5], %s2860
          %s2862 = sshll.u32 [#allocation8], 4
          %s2863 = int_to_ptr.vmem [resolvable:$true] %s2862
          %2868 = dma.vmem_to_hbm [thread:$0]  %s2863, 256, %s16, [#allocation5], 128, 128, 8
        $region104: #{tpu_custom_call.1} parent=83 // pred_fallthru
          _
        // Predicated region
        $region105: #{tpu_custom_call.1} parent=83 // pred_check
          %p2869 = pneg %p439
        $region106: #{tpu_custom_call.1} parent=83 // pred_check_branch
          %2871 = sbr.rel (%p2869) target = $region108
        $region107: #{tpu_custom_call.1} parent=83 // pred_region
          %2872 = dma.done [#allocation5], 256
        $region108: #{tpu_custom_call.1} parent=83 // pred_fallthru
          _
      $region84: #{tpu_custom_call.1} parent=5 // pred_fallthru
        _
      %p2873 = scmp.le.s32.totalorder 2, %s25
      // Predicated region
      $region109: #{tpu_custom_call.1} parent=5 // pred_check
        %p2874 = pneg %p2873
      $region110: #{tpu_custom_call.1} parent=5 // pred_check_branch
        %2876 = sbr.rel (%p2874) target = $region112
      $region111: #{tpu_custom_call.1} parent=5 // pred_region
        %s2877 = ssub.s32 %s25, 2
      $region112: #{tpu_custom_call.1} parent=5 // pred_fallthru
        _
    $region6: #{tpu_custom_call.1} parent=1 // loop_footer
      %s29 = sadd.s32 1, %s25
    $region7: #{tpu_custom_call.1} parent=1 // loop_footer_branch
      %24 = sbr.rel target = $region3
    $region8: #{tpu_custom_call.1} parent=1 // loop_exit
      _
    %2878 = vsyncpa [#allocation4], 1
    %s2879 = scalar_lea.sflag [#allocation4], 1
    %2880 = vsyncpa %s2879, 1
    %2881 = vsyncpa [#allocation7], 1
    %2882 = vsyncpa [#allocation5], 1
    %s2883 = scalar_lea.sflag [#allocation5], 1
    %2884 = vsyncpa %s2883, 1

</llo_original>
